<compile_context>
chip_gen: v7x
topology: tpu7x:2x2x1
jax: 0.10.0
libtpu: 0.0.40
codegen_flags: <defaults>
</compile_context>

<pallas_src>
import jax
import jax.numpy as jnp
from jax.experimental import pallas as pl
from jax.experimental.pallas import tpu as pltpu

LN_EPS = 1e-5
ADD_NODE, ADD_EDGE, EXIT = 0, 1, 2  # GraphActionType

# ---- rows of the stacked (NUM_V, D) vector table -------------------------
IB_G1, IG_G, IBE_G, IB_G2 = 0, 1, 2, 3          # GIN inner MLP bias / LN
IB_S1, IB_S2 = 4, 5                             # Sequential(Linear,ReLU,Linear)
IG_N, IBE_N = 6, 7                              # final self.norm LayerNorm
IB_E1, IG_E, IBE_E = 8, 9, 10                   # exit_mlp hidden bias / LN
IB_C1, IG_C, IBE_C = 11, 12, 13                 # edge_class_mlp hidden bias / LN
NUM_V = 14
# ---- slots of the stacked (NUM_W, D, D) weight table ---------------------
IW_G1, IW_G2, IW_S1, IW_S2, IW_E1, IW_C1 = 0, 1, 2, 3, 4, 5
NUM_W = 6


def _layer_norm_ref(x, gamma, beta):
    mu = jnp.mean(x, axis=-1, keepdims=True)
    var = jnp.mean((x - mu) ** 2, axis=-1, keepdims=True)
    return (x - mu) * jax.lax.rsqrt(var + LN_EPS) * gamma + beta


# ---------------------------------------------------------------------------
# Fused kernel: GINConv + MLPs + LayerNorms + edge dots + per-graph mean + heads
# ---------------------------------------------------------------------------
def _gnn_kernel(x_ref, adj_ref, w_ref, v_ref, wh_ref, bh_ref, dot_ref, head_ref):
    Bt, n, D = x_ref.shape
    bf16 = jnp.bfloat16

    x = x_ref[...]                     # (Bt, n, D) f32 node embeddings
    a = adj_ref[...]                   # (Bt, n, n) f32 dense adjacency
    v = v_ref[...]                     # (NUM_V, D) f32 biases / LN params

    def ln(t, gi, bi):                 # f32 LayerNorm over the feature axis
        mu = jnp.mean(t, axis=-1, keepdims=True)
        var = jnp.mean((t - mu) ** 2, axis=-1, keepdims=True)
        return (t - mu) * jax.lax.rsqrt(var + LN_EPS) * v[gi] + v[bi]

    def mm(t, wi):                     # bf16-in / f32-accumulate MXU matmul
        return jnp.dot(t.astype(bf16), w_ref[wi],
                       preferred_element_type=jnp.float32)

    # --- GINConv (eps=0): h = x + A @ x  (batched over the Bt graphs) -------
    agg = jax.lax.dot_general(a.astype(bf16), x.astype(bf16),
                              (((2,), (1,)), ((0,), (0,))),
                              preferred_element_type=jnp.float32)   # (Bt,n,D)
    h = (x + agg).reshape(Bt * n, D)   # flat (Bt*n, D) slab: MXU-friendly rows

    # --- GIN nn = Linear -> LayerNorm -> ReLU -> Linear ---------------------
    z = jnp.maximum(ln(mm(h, IW_G1) + v[IB_G1], IG_G, IBE_G), 0.0)
    h = mm(z, IW_G2) + v[IB_G2]
    # --- conv_blks[1] = Linear -> ReLU -> Linear ----------------------------
    z = jnp.maximum(mm(h, IW_S1) + v[IB_S1], 0.0)
    h = mm(z, IW_S2) + v[IB_S2]
    # --- x = self.norm(x_new)  (i == 0: no residual) ------------------------
    x_out = ln(h, IG_N, IBE_N)         # (Bt*n, D) f32

    # --- edgewise dot products -> lane-dense flattened (Bt, n*n) ------------
    xo = x_out.reshape(Bt, n, D)
    xo_b = xo.astype(bf16)
    dot = jax.lax.dot_general(xo_b, xo_b, (((2,), (2,)), ((0,), (0,))),
                              preferred_element_type=jnp.float32)   # (Bt,n,n)
    dot_ref[...] = (dot * (1.0 / float(D) ** 0.5)).reshape(Bt, n * n)

    # --- fused heads on the per-graph node mean (_group_mean == plain mean) -
    mean = jnp.mean(xo, axis=1)        # (Bt, D)
    z_e = jnp.maximum(ln(mm(mean, IW_E1) + v[IB_E1], IG_E, IBE_E), 0.0)
    z_c = jnp.maximum(ln(mm(mean, IW_C1) + v[IB_C1], IG_C, IBE_C), 0.0)
    zz = jnp.concatenate([z_e, z_c], axis=-1).astype(bf16)          # (Bt, 2D)
    # block-diagonal packed output layer: col 0 = exit logit, cols 1..C = class
    head_ref[...] = (jnp.dot(zz, wh_ref[...], preferred_element_type=jnp.float32)
                     + bh_ref[...])


# ---------------------------------------------------------------------------
# Wrapper
# ---------------------------------------------------------------------------
def graph_edge_action_gnn_forward(node_ids, adj, p, n_nodes, num_edge_classes,
                                  graphs_per_tile=None):
    B = adj.shape[0]
    n = n_nodes
    D = p["emb"].shape[1]
    C = num_edge_classes

    # graphs per grid step: Bt*n >= 128 rows keeps the MXU fed
    if graphs_per_tile is None:
        graphs_per_tile = max(1, 128 // n)
    Bt = graphs_per_tile
    B_pad = pl.cdiv(B, Bt) * Bt
    num_tiles = B_pad // Bt

    # glue: embedding gather + batch padding to a multiple of Bt
    x_emb = p["emb"][node_ids].astype(jnp.float32)        # (B, n, D)
    adj_f = adj.astype(jnp.float32)                       # (B, n, n)
    if B_pad != B:
        pad = B_pad - B
        x_emb = jnp.concatenate([x_emb, jnp.zeros((pad, n, D), jnp.float32)], 0)
        adj_f = jnp.concatenate([adj_f, jnp.zeros((pad, n, n), jnp.float32)], 0)

    # stacked, grid-invariant parameter tables (few refs -> few DMA streams)
    W_stack = jnp.stack([p["W_g1"], p["W_g2"], p["W_s1"], p["W_s2"],
                         p["W_e1"], p["W_c1"]], axis=0).astype(jnp.bfloat16)
    V_stack = jnp.concatenate(
        [p["b_g1"], p["g_g"], p["be_g"], p["b_g2"], p["b_s1"], p["b_s2"],
         p["g_n"], p["be_n"], p["b_e1"], p["g_e"], p["be_e"],
         p["b_c1"], p["g_c"], p["be_c"]], axis=0).astype(jnp.float32)  # (14, D)

    # exit_mlp / edge_class_mlp output layers packed block-diagonally into one
    # lane-dense (2D, HPAD) matrix; extra columns are zero padding.
    HPAD = max(128, pl.cdiv(1 + C, 128) * 128)
    W_head = jnp.zeros((2 * D, HPAD), jnp.float32)
    W_head = W_head.at[:D, 0:1].set(p["W_e2"])
    W_head = W_head.at[D:, 1:1 + C].set(p["W_c2"])
    W_head = W_head.astype(jnp.bfloat16)
    b_head = jnp.zeros((1, HPAD), jnp.float32)
    b_head = b_head.at[0, 0:1].set(p["b_e2"][0])
    b_head = b_head.at[0, 1:1 + C].set(p["b_c2"][0])

    def const_spec(shape):
        return pl.BlockSpec(shape, lambda t: (0,) * len(shape))

    dot_flat, head = pl.pallas_call(
        _gnn_kernel,
        out_shape=(jax.ShapeDtypeStruct((B_pad, n * n), jnp.float32),
                   jax.ShapeDtypeStruct((B_pad, HPAD), jnp.float32)),
        grid=(num_tiles,),
        in_specs=[
            pl.BlockSpec((Bt, n, D), lambda t: (t, 0, 0)),   # node embeddings
            pl.BlockSpec((Bt, n, n), lambda t: (t, 0, 0)),   # dense adjacency
            const_spec((NUM_W, D, D)),                       # stacked weights (bf16)
            const_spec((NUM_V, D)),                          # stacked biases / LN
            const_spec((2 * D, HPAD)),                       # packed head weights
            const_spec((1, HPAD)),                           # packed head biases
        ],
        out_specs=(pl.BlockSpec((Bt, n * n), lambda t: (t, 0)),   # lane-dense dots
                   pl.BlockSpec((Bt, HPAD), lambda t: (t, 0))),   # lane-dense heads
        compiler_params=pltpu.CompilerParams(
            # Independent batch-tile axis. On v7x this axis is the natural
            # candidate for CORE_PARALLEL (2 TensorCores); "parallel" is safe
            # across v5e/v6e/v7x.
            dimension_semantics=("parallel",)),
    )(x_emb, adj_f, W_stack, V_stack, W_head, b_head)

    dot = dot_flat[:B].reshape(B, n, n)
    head = head[:B]
    exit_logit = head[:, 0]
    cls = head[:, 1:1 + C]

    # glue: upper-triangular edge extraction + output packing (TensorDict-like)
    i0, i1 = jnp.triu_indices(n, k=1)
    edge_actions = dot[:, i0, i1]                           # (B, edges_dim)

    action_type = jnp.full((B, 3), -jnp.inf, dtype=jnp.float32)
    action_type = action_type.at[:, ADD_EDGE].set(0.0)
    action_type = action_type.at[:, EXIT].set(exit_logit)

    return {
        "action_type": action_type,                         # (B, 3)
        "edge_class": cls,                                  # (B, num_edge_classes)
        "node_class": jnp.zeros((B, 1), jnp.float32),       # (B, 1)
        "edge_index": edge_actions,                         # (B, edges_dim)
    }


# ---------------------------------------------------------------------------
# Plain-JAX f32 reference (sanity check)
# ---------------------------------------------------------------------------
def reference_forward(node_ids, adj, p, n_nodes, num_edge_classes):
    n, D = n_nodes, p["emb"].shape[1]
    B = adj.shape[0]
    x = p["emb"][node_ids]
    h = x + jnp.einsum("bts,bsd->btd", adj, x)
    z = jnp.maximum(_layer_norm_ref(h @ p["W_g1"] + p["b_g1"], p["g_g"], p["be_g"]), 0.0)
    h = z @ p["W_g2"] + p["b_g2"]
    z = jnp.maximum(h @ p["W_s1"] + p["b_s1"], 0.0)
    h = z @ p["W_s2"] + p["b_s2"]
    x_out = _layer_norm_ref(h, p["g_n"], p["be_n"])
    dot = jnp.einsum("bnf,bmf->bnm", x_out, x_out) / jnp.sqrt(jnp.float32(D))
    i0, i1 = jnp.triu_indices(n, k=1)
    edge_actions = dot[:, i0, i1]
    mean = jnp.mean(x_out, axis=1)
    z = jnp.maximum(_layer_norm_ref(mean @ p["W_e1"] + p["b_e1"], p["g_e"], p["be_e"]), 0.0)
    exit_action = (z @ p["W_e2"] + p["b_e2"])[:, 0]
    z = jnp.maximum(_layer_norm_ref(mean @ p["W_c1"] + p["b_c1"], p["g_c"], p["be_c"]), 0.0)
    cls = z @ p["W_c2"] + p["b_c2"]
    action_type = jnp.full((B, 3), -jnp.inf, dtype=jnp.float32)
    action_type = action_type.at[:, ADD_EDGE].set(0.0)
    action_type = action_type.at[:, EXIT].set(exit_action)
    return {"action_type": action_type, "edge_class": cls,
            "node_class": jnp.zeros((B, 1), jnp.float32), "edge_index": edge_actions}


# ---------------------------------------------------------------------------
# Deterministic parameter init (matches module shapes; synthetic, no checkpoint)
# ---------------------------------------------------------------------------
def init_params(key, n_nodes, D, C):
    keys = jax.random.split(key, 10)

    def lin(k, fan_in, fan_out):
        k1, k2 = jax.random.split(k)
        bound = 1.0 / float(fan_in) ** 0.5
        W = jax.random.uniform(k1, (fan_in, fan_out), jnp.float32, -bound, bound)
        b = jax.random.uniform(k2, (1, fan_out), jnp.float32, -bound, bound)
        return W, b

    ones = jnp.ones((1, D), jnp.float32)
    zeros = jnp.zeros((1, D), jnp.float32)
    p = {"emb": jax.random.normal(keys[0], (n_nodes, D), jnp.float32)}
    p["W_g1"], p["b_g1"] = lin(keys[1], D, D); p["g_g"], p["be_g"] = ones, zeros
    p["W_g2"], p["b_g2"] = lin(keys[2], D, D)
    p["W_s1"], p["b_s1"] = lin(keys[3], D, D)
    p["W_s2"], p["b_s2"] = lin(keys[4], D, D)
    p["g_n"], p["be_n"] = ones, zeros
    p["W_e1"], p["b_e1"] = lin(keys[5], D, D); p["g_e"], p["be_e"] = ones, zeros
    p["W_e2"], p["b_e2"] = lin(keys[6], D, 1)
    p["W_c1"], p["b_c1"] = lin(keys[7], D, D); p["g_c"], p["be_c"] = ones, zeros
    p["W_c2"], p["b_c2"] = lin(keys[8], D, C)
    return p


if __name__ == "__main__":
    # SMALL deterministic example: 30 graphs, 8 nodes/graph, emb dim 32, 4 edge
    # classes. Bt defaults to 16 graphs/tile -> 128-row matmul slabs, and the
    # batch is padded 30 -> 32 to exercise the padding path.
    B, n_nodes, D, C = 30, 8, 32, 4
    key = jax.random.PRNGKey(0)
    params = init_params(key, n_nodes, D, C)

    # node features: each graph carries node ids 0..n-1 (as in GeometricBatch.x)
    node_ids = jnp.tile(jnp.arange(n_nodes, dtype=jnp.int32)[None, :], (B, 1))

    # deterministic adjacency: undirected ring, extra chord (0,4) on odd graphs
    adj = jnp.zeros((B, n_nodes, n_nodes), jnp.float32)
    for i in range(n_nodes):
        j = (i + 1) % n_nodes
        adj = adj.at[:, i, j].set(1.0).at[:, j, i].set(1.0)
    odd = (jnp.arange(B) % 2 == 1).astype(jnp.float32)
    adj = adj.at[:, 0, 4].add(odd).at[:, 4, 0].add(odd)

    out = graph_edge_action_gnn_forward(node_ids, adj, params, n_nodes, C)
    out = jax.tree_util.tree_map(jax.block_until_ready, out)

    ref = reference_forward(node_ids, adj, params, n_nodes, C)
    # Tolerance reflects bf16 MXU inputs with f32 accumulation inside the kernel
    # (pure-f32 reference); typical max error is ~1e-2.
    tol = dict(atol=5e-2, rtol=5e-2)
    assert out["edge_index"].shape == (B, n_nodes * (n_nodes - 1) // 2)
    assert jnp.allclose(out["edge_index"], ref["edge_index"], **tol)
    assert jnp.allclose(out["edge_class"], ref["edge_class"], **tol)
    assert jnp.allclose(out["action_type"][:, 1:], ref["action_type"][:, 1:], **tol)
    assert jnp.all(out["action_type"][:, 0] == -jnp.inf)
    assert jnp.allclose(out["node_class"], ref["node_class"])

    print("KERNEL_OK")
</pallas_src>

<mosaic_0001>
module attributes {stable_mosaic.version = 11 : i64} {
  func.func @_gnn_kernel(%arg0: i32, %arg1: memref<16x8x32xf32, #tpu.memory_space<vmem>>, %arg2: memref<16x8x8xf32, #tpu.memory_space<vmem>>, %arg3: memref<6x32x32xbf16, #tpu.memory_space<vmem>>, %arg4: memref<14x32xf32, #tpu.memory_space<vmem>>, %arg5: memref<64x128xbf16, #tpu.memory_space<vmem>>, %arg6: memref<1x128xf32, #tpu.memory_space<vmem>>, %arg7: memref<16x64xf32, #tpu.memory_space<vmem>>, %arg8: memref<16x128xf32, #tpu.memory_space<vmem>>) attributes {dimension_semantics = [#tpu.dimension_semantics<parallel>], iteration_bounds = array<i64: 2>, scalar_prefetch = 0 : i64, scratch_operands = 0 : i64, tpu.core_type = #tpu.core_type<tc>, window_params = [{transform_indices = @transform_0, window_bounds = array<i64: 16, 8, 32>}, {transform_indices = @transform_1, window_bounds = array<i64: 16, 8, 8>}, {pipeline_mode = #tpu.pipeline_mode<synchronous>, transform_indices = @transform_2, window_bounds = array<i64: 6, 32, 32>}, {pipeline_mode = #tpu.pipeline_mode<synchronous>, transform_indices = @transform_3, window_bounds = array<i64: 14, 32>}, {pipeline_mode = #tpu.pipeline_mode<synchronous>, transform_indices = @transform_4, window_bounds = array<i64: 64, 128>}, {pipeline_mode = #tpu.pipeline_mode<synchronous>, transform_indices = @transform_5, window_bounds = array<i64: 1, 128>}, {transform_indices = @transform_6, window_bounds = array<i64: 16, 64>}, {transform_indices = @transform_7, window_bounds = array<i64: 16, 128>}]} {
    %c0 = arith.constant 0 : index
    %c0_0 = arith.constant 0 : index
    %c0_1 = arith.constant 0 : index
    %0 = vector.load %arg1[%c0, %c0_0, %c0_1] : memref<16x8x32xf32, #tpu.memory_space<vmem>>, vector<16x8x32xf32>
    %c0_2 = arith.constant 0 : index
    %c0_3 = arith.constant 0 : index
    %c0_4 = arith.constant 0 : index
    %1 = vector.load %arg2[%c0_2, %c0_3, %c0_4] : memref<16x8x8xf32, #tpu.memory_space<vmem>>, vector<16x8x8xf32>
    %c0_5 = arith.constant 0 : index
    %c0_6 = arith.constant 0 : index
    %2 = vector.load %arg4[%c0_5, %c0_6] : memref<14x32xf32, #tpu.memory_space<vmem>>, vector<14x32xf32>
    %3 = arith.truncf %1 : vector<16x8x8xf32> to vector<16x8x8xbf16>
    %4 = arith.truncf %0 : vector<16x8x32xf32> to vector<16x8x32xbf16>
    %cst = arith.constant dense<0.000000e+00> : vector<16x8x32xf32>
    %5 = tpu.matmul %3, %4, %cst {dimension_numbers = #tpu.dot_dimension_numbers<[2], [1], [1], [2], [0, 0, 0, 1, 1, 2], [0], [0]>} : vector<16x8x8xbf16>, vector<16x8x32xbf16>, vector<16x8x32xf32> -> vector<16x8x32xf32>
    %6 = arith.addf %0, %5 : vector<16x8x32xf32>
    %7 = vector.shape_cast %6 : vector<16x8x32xf32> to vector<128x32xf32>
    %8 = arith.truncf %7 : vector<128x32xf32> to vector<128x32xbf16>
    %c0_7 = arith.constant 0 : index
    %c0_8 = arith.constant 0 : index
    %c0_9 = arith.constant 0 : index
    %9 = vector.load %arg3[%c0_7, %c0_8, %c0_9] : memref<6x32x32xbf16, #tpu.memory_space<vmem>>, vector<1x32x32xbf16>
    %10 = vector.shape_cast %9 : vector<1x32x32xbf16> to vector<32x32xbf16>
    %cst_10 = arith.constant dense<0.000000e+00> : vector<128x32xf32>
    %11 = tpu.matmul %8, %10, %cst_10 {dimension_numbers = #tpu.dot_dimension_numbers<[1], [0], [0], [1], [0, 0, 1, 1], [], []>} : vector<128x32xbf16>, vector<32x32xbf16>, vector<128x32xf32> -> vector<128x32xf32>
    %12 = vector.extract_strided_slice %2 {offsets = [0, 0], sizes = [1, 32], strides = [1, 1]} : vector<14x32xf32> to vector<1x32xf32>
    %13 = vector.shape_cast %12 : vector<1x32xf32> to vector<32xf32>
    %14 = vector.shape_cast %13 : vector<32xf32> to vector<1x32xf32>
    %15 = vector.broadcast %14 : vector<1x32xf32> to vector<128x32xf32>
    %16 = arith.addf %11, %15 : vector<128x32xf32>
    %cst_11 = arith.constant dense<0.000000e+00> : vector<128xf32>
    %17 = vector.multi_reduction <add>, %16, %cst_11 [1] : vector<128x32xf32> to vector<128xf32>
    %18 = vector.shape_cast %17 : vector<128xf32> to vector<128x1xf32>
    %cst_12 = arith.constant 3.200000e+01 : f32
    %19 = vector.broadcast %cst_12 : f32 to vector<128x1xf32>
    %20 = arith.divf %18, %19 : vector<128x1xf32>
    %21 = vector.broadcast %20 : vector<128x1xf32> to vector<128x32xf32>
    %22 = arith.subf %16, %21 : vector<128x32xf32>
    %23 = arith.mulf %22, %22 : vector<128x32xf32>
    %cst_13 = arith.constant dense<0.000000e+00> : vector<128xf32>
    %24 = vector.multi_reduction <add>, %23, %cst_13 [1] : vector<128x32xf32> to vector<128xf32>
    %25 = vector.shape_cast %24 : vector<128xf32> to vector<128x1xf32>
    %cst_14 = arith.constant 3.200000e+01 : f32
    %26 = vector.broadcast %cst_14 : f32 to vector<128x1xf32>
    %27 = arith.divf %25, %26 : vector<128x1xf32>
    %28 = vector.broadcast %20 : vector<128x1xf32> to vector<128x32xf32>
    %29 = arith.subf %16, %28 : vector<128x32xf32>
    %cst_15 = arith.constant 9.99999974E-6 : f32
    %30 = vector.broadcast %cst_15 : f32 to vector<128x1xf32>
    %31 = arith.addf %27, %30 : vector<128x1xf32>
    %32 = math.rsqrt %31 : vector<128x1xf32>
    %33 = vector.broadcast %32 : vector<128x1xf32> to vector<128x32xf32>
    %34 = arith.mulf %29, %33 : vector<128x32xf32>
    %35 = vector.extract_strided_slice %2 {offsets = [1, 0], sizes = [1, 32], strides = [1, 1]} : vector<14x32xf32> to vector<1x32xf32>
    %36 = vector.shape_cast %35 : vector<1x32xf32> to vector<32xf32>
    %37 = vector.shape_cast %36 : vector<32xf32> to vector<1x32xf32>
    %38 = vector.broadcast %37 : vector<1x32xf32> to vector<128x32xf32>
    %39 = arith.mulf %34, %38 : vector<128x32xf32>
    %40 = vector.extract_strided_slice %2 {offsets = [2, 0], sizes = [1, 32], strides = [1, 1]} : vector<14x32xf32> to vector<1x32xf32>
    %41 = vector.shape_cast %40 : vector<1x32xf32> to vector<32xf32>
    %42 = vector.shape_cast %41 : vector<32xf32> to vector<1x32xf32>
    %43 = vector.broadcast %42 : vector<1x32xf32> to vector<128x32xf32>
    %44 = arith.addf %39, %43 : vector<128x32xf32>
    %cst_16 = arith.constant 0.000000e+00 : f32
    %45 = vector.broadcast %cst_16 : f32 to vector<128x32xf32>
    %46 = arith.maximumf %44, %45 : vector<128x32xf32>
    %47 = arith.truncf %46 : vector<128x32xf32> to vector<128x32xbf16>
    %c1 = arith.constant 1 : index
    %c0_17 = arith.constant 0 : index
    %c0_18 = arith.constant 0 : index
    %48 = vector.load %arg3[%c1, %c0_17, %c0_18] : memref<6x32x32xbf16, #tpu.memory_space<vmem>>, vector<1x32x32xbf16>
    %49 = vector.shape_cast %48 : vector<1x32x32xbf16> to vector<32x32xbf16>
    %cst_19 = arith.constant dense<0.000000e+00> : vector<128x32xf32>
    %50 = tpu.matmul %47, %49, %cst_19 {dimension_numbers = #tpu.dot_dimension_numbers<[1], [0], [0], [1], [0, 0, 1, 1], [], []>} : vector<128x32xbf16>, vector<32x32xbf16>, vector<128x32xf32> -> vector<128x32xf32>
    %51 = vector.extract_strided_slice %2 {offsets = [3, 0], sizes = [1, 32], strides = [1, 1]} : vector<14x32xf32> to vector<1x32xf32>
    %52 = vector.shape_cast %51 : vector<1x32xf32> to vector<32xf32>
    %53 = vector.shape_cast %52 : vector<32xf32> to vector<1x32xf32>
    %54 = vector.broadcast %53 : vector<1x32xf32> to vector<128x32xf32>
    %55 = arith.addf %50, %54 : vector<128x32xf32>
    %56 = arith.truncf %55 : vector<128x32xf32> to vector<128x32xbf16>
    %c2 = arith.constant 2 : index
    %c0_20 = arith.constant 0 : index
    %c0_21 = arith.constant 0 : index
    %57 = vector.load %arg3[%c2, %c0_20, %c0_21] : memref<6x32x32xbf16, #tpu.memory_space<vmem>>, vector<1x32x32xbf16>
    %58 = vector.shape_cast %57 : vector<1x32x32xbf16> to vector<32x32xbf16>
    %cst_22 = arith.constant dense<0.000000e+00> : vector<128x32xf32>
    %59 = tpu.matmul %56, %58, %cst_22 {dimension_numbers = #tpu.dot_dimension_numbers<[1], [0], [0], [1], [0, 0, 1, 1], [], []>} : vector<128x32xbf16>, vector<32x32xbf16>, vector<128x32xf32> -> vector<128x32xf32>
    %60 = vector.extract_strided_slice %2 {offsets = [4, 0], sizes = [1, 32], strides = [1, 1]} : vector<14x32xf32> to vector<1x32xf32>
    %61 = vector.shape_cast %60 : vector<1x32xf32> to vector<32xf32>
    %62 = vector.shape_cast %61 : vector<32xf32> to vector<1x32xf32>
    %63 = vector.broadcast %62 : vector<1x32xf32> to vector<128x32xf32>
    %64 = arith.addf %59, %63 : vector<128x32xf32>
    %cst_23 = arith.constant 0.000000e+00 : f32
    %65 = vector.broadcast %cst_23 : f32 to vector<128x32xf32>
    %66 = arith.maximumf %64, %65 : vector<128x32xf32>
    %67 = arith.truncf %66 : vector<128x32xf32> to vector<128x32xbf16>
    %c3 = arith.constant 3 : index
    %c0_24 = arith.constant 0 : index
    %c0_25 = arith.constant 0 : index
    %68 = vector.load %arg3[%c3, %c0_24, %c0_25] : memref<6x32x32xbf16, #tpu.memory_space<vmem>>, vector<1x32x32xbf16>
    %69 = vector.shape_cast %68 : vector<1x32x32xbf16> to vector<32x32xbf16>
    %cst_26 = arith.constant dense<0.000000e+00> : vector<128x32xf32>
    %70 = tpu.matmul %67, %69, %cst_26 {dimension_numbers = #tpu.dot_dimension_numbers<[1], [0], [0], [1], [0, 0, 1, 1], [], []>} : vector<128x32xbf16>, vector<32x32xbf16>, vector<128x32xf32> -> vector<128x32xf32>
    %71 = vector.extract_strided_slice %2 {offsets = [5, 0], sizes = [1, 32], strides = [1, 1]} : vector<14x32xf32> to vector<1x32xf32>
    %72 = vector.shape_cast %71 : vector<1x32xf32> to vector<32xf32>
    %73 = vector.shape_cast %72 : vector<32xf32> to vector<1x32xf32>
    %74 = vector.broadcast %73 : vector<1x32xf32> to vector<128x32xf32>
    %75 = arith.addf %70, %74 : vector<128x32xf32>
    %cst_27 = arith.constant dense<0.000000e+00> : vector<128xf32>
    %76 = vector.multi_reduction <add>, %75, %cst_27 [1] : vector<128x32xf32> to vector<128xf32>
    %77 = vector.shape_cast %76 : vector<128xf32> to vector<128x1xf32>
    %cst_28 = arith.constant 3.200000e+01 : f32
    %78 = vector.broadcast %cst_28 : f32 to vector<128x1xf32>
    %79 = arith.divf %77, %78 : vector<128x1xf32>
    %80 = vector.broadcast %79 : vector<128x1xf32> to vector<128x32xf32>
    %81 = arith.subf %75, %80 : vector<128x32xf32>
    %82 = arith.mulf %81, %81 : vector<128x32xf32>
    %cst_29 = arith.constant dense<0.000000e+00> : vector<128xf32>
    %83 = vector.multi_reduction <add>, %82, %cst_29 [1] : vector<128x32xf32> to vector<128xf32>
    %84 = vector.shape_cast %83 : vector<128xf32> to vector<128x1xf32>
    %cst_30 = arith.constant 3.200000e+01 : f32
    %85 = vector.broadcast %cst_30 : f32 to vector<128x1xf32>
    %86 = arith.divf %84, %85 : vector<128x1xf32>
    %87 = vector.broadcast %79 : vector<128x1xf32> to vector<128x32xf32>
    %88 = arith.subf %75, %87 : vector<128x32xf32>
    %cst_31 = arith.constant 9.99999974E-6 : f32
    %89 = vector.broadcast %cst_31 : f32 to vector<128x1xf32>
    %90 = arith.addf %86, %89 : vector<128x1xf32>
    %91 = math.rsqrt %90 : vector<128x1xf32>
    %92 = vector.broadcast %91 : vector<128x1xf32> to vector<128x32xf32>
    %93 = arith.mulf %88, %92 : vector<128x32xf32>
    %94 = vector.extract_strided_slice %2 {offsets = [6, 0], sizes = [1, 32], strides = [1, 1]} : vector<14x32xf32> to vector<1x32xf32>
    %95 = vector.shape_cast %94 : vector<1x32xf32> to vector<32xf32>
    %96 = vector.shape_cast %95 : vector<32xf32> to vector<1x32xf32>
    %97 = vector.broadcast %96 : vector<1x32xf32> to vector<128x32xf32>
    %98 = arith.mulf %93, %97 : vector<128x32xf32>
    %99 = vector.extract_strided_slice %2 {offsets = [7, 0], sizes = [1, 32], strides = [1, 1]} : vector<14x32xf32> to vector<1x32xf32>
    %100 = vector.shape_cast %99 : vector<1x32xf32> to vector<32xf32>
    %101 = vector.shape_cast %100 : vector<32xf32> to vector<1x32xf32>
    %102 = vector.broadcast %101 : vector<1x32xf32> to vector<128x32xf32>
    %103 = arith.addf %98, %102 : vector<128x32xf32>
    %104 = vector.shape_cast %103 : vector<128x32xf32> to vector<16x8x32xf32>
    %105 = arith.truncf %104 : vector<16x8x32xf32> to vector<16x8x32xbf16>
    %cst_32 = arith.constant dense<0.000000e+00> : vector<16x8x8xf32>
    %106 = tpu.matmul %105, %105, %cst_32 {dimension_numbers = #tpu.dot_dimension_numbers<[2], [2], [1], [1], [0, 0, 0, 1, 1, 1], [0], [0]>} : vector<16x8x32xbf16>, vector<16x8x32xbf16>, vector<16x8x8xf32> -> vector<16x8x8xf32>
    %cst_33 = arith.constant 0.176776692 : f32
    %107 = vector.broadcast %cst_33 : f32 to vector<16x8x8xf32>
    %108 = arith.mulf %106, %107 : vector<16x8x8xf32>
    %109 = vector.shape_cast %108 : vector<16x8x8xf32> to vector<16x64xf32>
    %c0_34 = arith.constant 0 : index
    %c0_35 = arith.constant 0 : index
    %110 = vector.load %arg7[%c0_34, %c0_35] : memref<16x64xf32, #tpu.memory_space<vmem>>, vector<16x64xf32>
    tpu.vector_store %arg7[%c0_34, %c0_35], %109 {strides = array<i32>} : memref<16x64xf32, #tpu.memory_space<vmem>>, vector<16x64xf32>,
    %cst_36 = arith.constant dense<0.000000e+00> : vector<16x32xf32>
    %111 = vector.multi_reduction <add>, %104, %cst_36 [1] : vector<16x8x32xf32> to vector<16x32xf32>
    %cst_37 = arith.constant 8.000000e+00 : f32
    %112 = vector.broadcast %cst_37 : f32 to vector<16x32xf32>
    %113 = arith.divf %111, %112 : vector<16x32xf32>
    %114 = arith.truncf %113 : vector<16x32xf32> to vector<16x32xbf16>
    %c4 = arith.constant 4 : index
    %c0_38 = arith.constant 0 : index
    %c0_39 = arith.constant 0 : index
    %115 = vector.load %arg3[%c4, %c0_38, %c0_39] : memref<6x32x32xbf16, #tpu.memory_space<vmem>>, vector<1x32x32xbf16>
    %116 = vector.shape_cast %115 : vector<1x32x32xbf16> to vector<32x32xbf16>
    %cst_40 = arith.constant dense<0.000000e+00> : vector<16x32xf32>
    %117 = tpu.matmul %114, %116, %cst_40 {dimension_numbers = #tpu.dot_dimension_numbers<[1], [0], [0], [1], [0, 0, 1, 1], [], []>} : vector<16x32xbf16>, vector<32x32xbf16>, vector<16x32xf32> -> vector<16x32xf32>
    %118 = vector.extract_strided_slice %2 {offsets = [8, 0], sizes = [1, 32], strides = [1, 1]} : vector<14x32xf32> to vector<1x32xf32>
    %119 = vector.shape_cast %118 : vector<1x32xf32> to vector<32xf32>
    %120 = vector.shape_cast %119 : vector<32xf32> to vector<1x32xf32>
    %121 = vector.broadcast %120 : vector<1x32xf32> to vector<16x32xf32>
    %122 = arith.addf %117, %121 : vector<16x32xf32>
    %cst_41 = arith.constant dense<0.000000e+00> : vector<16xf32>
    %123 = vector.multi_reduction <add>, %122, %cst_41 [1] : vector<16x32xf32> to vector<16xf32>
    %124 = vector.shape_cast %123 : vector<16xf32> to vector<16x1xf32>
    %cst_42 = arith.constant 3.200000e+01 : f32
    %125 = vector.broadcast %cst_42 : f32 to vector<16x1xf32>
    %126 = arith.divf %124, %125 : vector<16x1xf32>
    %127 = vector.broadcast %126 : vector<16x1xf32> to vector<16x32xf32>
    %128 = arith.subf %122, %127 : vector<16x32xf32>
    %129 = arith.mulf %128, %128 : vector<16x32xf32>
    %cst_43 = arith.constant dense<0.000000e+00> : vector<16xf32>
    %130 = vector.multi_reduction <add>, %129, %cst_43 [1] : vector<16x32xf32> to vector<16xf32>
    %131 = vector.shape_cast %130 : vector<16xf32> to vector<16x1xf32>
    %cst_44 = arith.constant 3.200000e+01 : f32
    %132 = vector.broadcast %cst_44 : f32 to vector<16x1xf32>
    %133 = arith.divf %131, %132 : vector<16x1xf32>
    %134 = vector.broadcast %126 : vector<16x1xf32> to vector<16x32xf32>
    %135 = arith.subf %122, %134 : vector<16x32xf32>
    %cst_45 = arith.constant 9.99999974E-6 : f32
    %136 = vector.broadcast %cst_45 : f32 to vector<16x1xf32>
    %137 = arith.addf %133, %136 : vector<16x1xf32>
    %138 = math.rsqrt %137 : vector<16x1xf32>
    %139 = vector.broadcast %138 : vector<16x1xf32> to vector<16x32xf32>
    %140 = arith.mulf %135, %139 : vector<16x32xf32>
    %141 = vector.extract_strided_slice %2 {offsets = [9, 0], sizes = [1, 32], strides = [1, 1]} : vector<14x32xf32> to vector<1x32xf32>
    %142 = vector.shape_cast %141 : vector<1x32xf32> to vector<32xf32>
    %143 = vector.shape_cast %142 : vector<32xf32> to vector<1x32xf32>
    %144 = vector.broadcast %143 : vector<1x32xf32> to vector<16x32xf32>
    %145 = arith.mulf %140, %144 : vector<16x32xf32>
    %146 = vector.extract_strided_slice %2 {offsets = [10, 0], sizes = [1, 32], strides = [1, 1]} : vector<14x32xf32> to vector<1x32xf32>
    %147 = vector.shape_cast %146 : vector<1x32xf32> to vector<32xf32>
    %148 = vector.shape_cast %147 : vector<32xf32> to vector<1x32xf32>
    %149 = vector.broadcast %148 : vector<1x32xf32> to vector<16x32xf32>
    %150 = arith.addf %145, %149 : vector<16x32xf32>
    %cst_46 = arith.constant 0.000000e+00 : f32
    %151 = vector.broadcast %cst_46 : f32 to vector<16x32xf32>
    %152 = arith.maximumf %150, %151 : vector<16x32xf32>
    %153 = arith.truncf %113 : vector<16x32xf32> to vector<16x32xbf16>
    %c5 = arith.constant 5 : index
    %c0_47 = arith.constant 0 : index
    %c0_48 = arith.constant 0 : index
    %154 = vector.load %arg3[%c5, %c0_47, %c0_48] : memref<6x32x32xbf16, #tpu.memory_space<vmem>>, vector<1x32x32xbf16>
    %155 = vector.shape_cast %154 : vector<1x32x32xbf16> to vector<32x32xbf16>
    %cst_49 = arith.constant dense<0.000000e+00> : vector<16x32xf32>
    %156 = tpu.matmul %153, %155, %cst_49 {dimension_numbers = #tpu.dot_dimension_numbers<[1], [0], [0], [1], [0, 0, 1, 1], [], []>} : vector<16x32xbf16>, vector<32x32xbf16>, vector<16x32xf32> -> vector<16x32xf32>
    %157 = vector.extract_strided_slice %2 {offsets = [11, 0], sizes = [1, 32], strides = [1, 1]} : vector<14x32xf32> to vector<1x32xf32>
    %158 = vector.shape_cast %157 : vector<1x32xf32> to vector<32xf32>
    %159 = vector.shape_cast %158 : vector<32xf32> to vector<1x32xf32>
    %160 = vector.broadcast %159 : vector<1x32xf32> to vector<16x32xf32>
    %161 = arith.addf %156, %160 : vector<16x32xf32>
    %cst_50 = arith.constant dense<0.000000e+00> : vector<16xf32>
    %162 = vector.multi_reduction <add>, %161, %cst_50 [1] : vector<16x32xf32> to vector<16xf32>
    %163 = vector.shape_cast %162 : vector<16xf32> to vector<16x1xf32>
    %cst_51 = arith.constant 3.200000e+01 : f32
    %164 = vector.broadcast %cst_51 : f32 to vector<16x1xf32>
    %165 = arith.divf %163, %164 : vector<16x1xf32>
    %166 = vector.broadcast %165 : vector<16x1xf32> to vector<16x32xf32>
    %167 = arith.subf %161, %166 : vector<16x32xf32>
    %168 = arith.mulf %167, %167 : vector<16x32xf32>
    %cst_52 = arith.constant dense<0.000000e+00> : vector<16xf32>
    %169 = vector.multi_reduction <add>, %168, %cst_52 [1] : vector<16x32xf32> to vector<16xf32>
    %170 = vector.shape_cast %169 : vector<16xf32> to vector<16x1xf32>
    %cst_53 = arith.constant 3.200000e+01 : f32
    %171 = vector.broadcast %cst_53 : f32 to vector<16x1xf32>
    %172 = arith.divf %170, %171 : vector<16x1xf32>
    %173 = vector.broadcast %165 : vector<16x1xf32> to vector<16x32xf32>
    %174 = arith.subf %161, %173 : vector<16x32xf32>
    %cst_54 = arith.constant 9.99999974E-6 : f32
    %175 = vector.broadcast %cst_54 : f32 to vector<16x1xf32>
    %176 = arith.addf %172, %175 : vector<16x1xf32>
    %177 = math.rsqrt %176 : vector<16x1xf32>
    %178 = vector.broadcast %177 : vector<16x1xf32> to vector<16x32xf32>
    %179 = arith.mulf %174, %178 : vector<16x32xf32>
    %180 = vector.extract_strided_slice %2 {offsets = [12, 0], sizes = [1, 32], strides = [1, 1]} : vector<14x32xf32> to vector<1x32xf32>
    %181 = vector.shape_cast %180 : vector<1x32xf32> to vector<32xf32>
    %182 = vector.shape_cast %181 : vector<32xf32> to vector<1x32xf32>
    %183 = vector.broadcast %182 : vector<1x32xf32> to vector<16x32xf32>
    %184 = arith.mulf %179, %183 : vector<16x32xf32>
    %185 = vector.extract_strided_slice %2 {offsets = [13, 0], sizes = [1, 32], strides = [1, 1]} : vector<14x32xf32> to vector<1x32xf32>
    %186 = vector.shape_cast %185 : vector<1x32xf32> to vector<32xf32>
    %187 = vector.shape_cast %186 : vector<32xf32> to vector<1x32xf32>
    %188 = vector.broadcast %187 : vector<1x32xf32> to vector<16x32xf32>
    %189 = arith.addf %184, %188 : vector<16x32xf32>
    %cst_55 = arith.constant 0.000000e+00 : f32
    %190 = vector.broadcast %cst_55 : f32 to vector<16x32xf32>
    %191 = arith.maximumf %189, %190 : vector<16x32xf32>
    %192 = tpu.concatenate %152, %191 in 1 : vector<16x32xf32>, vector<16x32xf32> -> vector<16x64xf32>
    %193 = arith.truncf %192 : vector<16x64xf32> to vector<16x64xbf16>
    %c0_56 = arith.constant 0 : index
    %c0_57 = arith.constant 0 : index
    %194 = vector.load %arg5[%c0_56, %c0_57] : memref<64x128xbf16, #tpu.memory_space<vmem>>, vector<64x128xbf16>
    %cst_58 = arith.constant dense<0.000000e+00> : vector<16x128xf32>
    %195 = tpu.matmul %193, %194, %cst_58 {dimension_numbers = #tpu.dot_dimension_numbers<[1], [0], [0], [1], [0, 0, 1, 1], [], []>} : vector<16x64xbf16>, vector<64x128xbf16>, vector<16x128xf32> -> vector<16x128xf32>
    %c0_59 = arith.constant 0 : index
    %c0_60 = arith.constant 0 : index
    %196 = vector.load %arg6[%c0_59, %c0_60] : memref<1x128xf32, #tpu.memory_space<vmem>>, vector<1x128xf32>
    %197 = vector.broadcast %196 : vector<1x128xf32> to vector<16x128xf32>
    %198 = arith.addf %195, %197 : vector<16x128xf32>
    %c0_61 = arith.constant 0 : index
    %c0_62 = arith.constant 0 : index
    %199 = vector.load %arg8[%c0_61, %c0_62] : memref<16x128xf32, #tpu.memory_space<vmem>>, vector<16x128xf32>
    tpu.vector_store %arg8[%c0_61, %c0_62], %198 {strides = array<i32>} : memref<16x128xf32, #tpu.memory_space<vmem>>, vector<16x128xf32>,
    return
  }
  func.func @transform_0(%arg0: i32) -> (i32, i32, i32) {
    %c0_i32 = arith.constant 0 : i32
    %c0_i32_0 = arith.constant 0 : i32
    %c0_i32_1 = arith.constant 0 : i32
    return %arg0, %c0_i32, %c0_i32_0 : i32, i32, i32
  }
  func.func @transform_1(%arg0: i32) -> (i32, i32, i32) {
    %c0_i32 = arith.constant 0 : i32
    %c0_i32_0 = arith.constant 0 : i32
    %c0_i32_1 = arith.constant 0 : i32
    return %arg0, %c0_i32, %c0_i32_0 : i32, i32, i32
  }
  func.func @transform_2(%arg0: i32) -> (i32, i32, i32) {
    %c0_i32 = arith.constant 0 : i32
    %c0_i32_0 = arith.constant 0 : i32
    %c0_i32_1 = arith.constant 0 : i32
    %c0_i32_2 = arith.constant 0 : i32
    return %c0_i32, %c0_i32_0, %c0_i32_1 : i32, i32, i32
  }
  func.func @transform_3(%arg0: i32) -> (i32, i32) {
    %c0_i32 = arith.constant 0 : i32
    %c0_i32_0 = arith.constant 0 : i32
    %c0_i32_1 = arith.constant 0 : i32
    return %c0_i32, %c0_i32_0 : i32, i32
  }
  func.func @transform_4(%arg0: i32) -> (i32, i32) {
    %c0_i32 = arith.constant 0 : i32
    %c0_i32_0 = arith.constant 0 : i32
    %c0_i32_1 = arith.constant 0 : i32
    return %c0_i32, %c0_i32_0 : i32, i32
  }
  func.func @transform_5(%arg0: i32) -> (i32, i32) {
    %c0_i32 = arith.constant 0 : i32
    %c0_i32_0 = arith.constant 0 : i32
    %c0_i32_1 = arith.constant 0 : i32
    return %c0_i32, %c0_i32_0 : i32, i32
  }
  func.func @transform_6(%arg0: i32) -> (i32, i32) {
    %c0_i32 = arith.constant 0 : i32
    %c0_i32_0 = arith.constant 0 : i32
    return %arg0, %c0_i32 : i32, i32
  }
  func.func @transform_7(%arg0: i32) -> (i32, i32) {
    %c0_i32 = arith.constant 0 : i32
    %c0_i32_0 = arith.constant 0 : i32
    return %arg0, %c0_i32 : i32, i32
  }
}

</mosaic_0001>

<llo_original>
// kernel: tpu_custom_call.1
$region0: #{tpu_custom_call.1}
  #allocation0 [shape = 'u32[]', space=smem, size = 0x4, offset = 0x4, fixed_abs, tag = 'smem constant byte address 0x4 - core index']
  #allocation1 [shape = 'u32[144,128]{1,0:T(1,128)}', space=vmem, size = 0x12000, scoped, tag = 'internal scratch']
  %s0 = inlined_call_operand.vmem [shape: f32[32,8,32], index: 0, kind: input, shape index: {}]
  %s1 = inlined_call_operand.vmem [shape: f32[32,8,8], index: 1, kind: input, shape index: {}]
  %s2 = inlined_call_operand.hbm [shape: bf16[6,32,32], index: 2, kind: input, shape index: {}]
  %s3 = inlined_call_operand.vmem [shape: f32[14,32], index: 3, kind: input, shape index: {}]
  %s4 = inlined_call_operand.vmem [shape: bf16[64,128], index: 4, kind: input, shape index: {}]
  %s5 = inlined_call_operand.vmem [shape: f32[1,128], index: 5, kind: input, shape index: {}]
  %s6 = inlined_call_operand.hbm [shape: f32[32,64], index: 6, kind: output, shape index: {0}]
  %s7 = inlined_call_operand.hbm [shape: f32[32,128], index: 7, kind: output, shape index: {1}]
  %8 = xla_tuple %s6, %s7
  %s9 = sld [smem:[#allocation0]]
  $region69: #{tpu_custom_call.1} parent=0
    _
  %s11 = ssub.s32 1, %s9
  %s12 = scalar_select 0, %s11, %s9
  $region1: #{tpu_custom_call.1} parent=0
    #allocation2 [shape = 'u8[49152]{0}', space=vmem, size = 0xc000, scoped, tag = 'input window, operand 2, single buffered']
    #allocation3 [shape = 's32[2]{0}', space=sflag, size = 0x8, scoped, tag = 'scoped memory for tpu_custom_call.1']
    #allocation4 [shape = 's32[2]{0}', space=sflag, size = 0x8, scoped, tag = 'scoped memory for tpu_custom_call.1']
    #allocation5 [shape = 'u8[16384]{0}', space=vmem, size = 0x4000, scoped, tag = 'output window, operand 0']
    #allocation6 [shape = 'u8[16384]{0}', space=vmem, size = 0x4000, scoped, tag = 'output window, operand 1']
    #allocation7 [shape = 's32[2]{0}', space=sflag, size = 0x8, scoped, tag = 'scoped memory for tpu_custom_call.1']
    %13 = vsyncpa [#allocation3], 0
    %14 = vsyncpa [#allocation4], 0
    %s15 = scalar_lea.sflag [#allocation4], 1
    %16 = vsyncpa %s15, 0
    %17 = vsyncpa [#allocation7], 0
    %s18 = scalar_lea.sflag [#allocation7], 1
    %19 = vsyncpa %s18, 0
    loop: start=0, step=1, limit=4
    $region2: #{tpu_custom_call.1} parent=1 // loop_pre_header
      _
    $region3: #{tpu_custom_call.1} parent=1 // loop_header
      %s21 = sphi 0, %s25
      %p22 = scmp.ge.s32.totalorder %s21, 4
      %s31 = sphi 0, %s33
      %s34 = sphi 0, %s31
      %s35 = sphi 0, %s34
      %s51 = sphi 0, %s35
      %s57 = sphi 0, %s59
      %s60 = sphi 0, %s57
      %s61 = sphi 0, %s60
      %s77 = sphi 0, %s61
      %s81 = sphi 0, %s81
      %s83 = sphi 0, %s81
      %s84 = sphi 0, %s83
      %s98 = sphi 0, %s84
      %s102 = sphi 0, %s102
      %s104 = sphi 0, %s102
      %s105 = sphi 0, %s104
      %s119 = sphi 0, %s105
      %s123 = sphi 0, %s123
      %s125 = sphi 0, %s123
      %s126 = sphi 0, %s125
      %s140 = sphi 0, %s126
      %s144 = sphi 0, %s144
      %s146 = sphi 0, %s144
      %s147 = sphi 0, %s146
      %s161 = sphi 0, %s147
      %s167 = sphi 0, %s169
      %s170 = sphi 0, %s167
      %s171 = sphi 0, %s170
      %s187 = sphi 0, %s171
      %s193 = sphi 0, %s195
      %s196 = sphi 0, %s193
      %s197 = sphi 0, %s196
      %s213 = sphi 0, %s197
    $region4: #{tpu_custom_call.1} parent=1 // loop_header_branch
      %24 = sbr.rel (%p22) target = $region8
    $region5: #{tpu_custom_call.1} parent=1 // loop_body
      %s26 = ssub.s32 %s21, 1
      %s27 = ssub.s32 %s21, 2
      %s28 = sadd.s32 %s21, 1
      %s29 = ssub.s32 %s21, %s28
      %p30 = scmp.eq.s32.totalorder %s29, 0
      %s32 = sadd.s32 %s31, 1
      %s33 = scalar_select %p30, %s31, %s32
      %p36 = pneg %p30
      %p37 = scmp.eq.s32.totalorder %s21, 1
      %p38 = por %p36, %p37
      %p39 = scmp.ne.s32.totalorder %s31, %s34
      %p40 = scmp.eq.s32.totalorder %s21, 0
      %p41 = por %p39, %p40
      %p42 = scmp.ne.s32.totalorder %s31, %s34
      %p43 = scmp.eq.s32.totalorder %s26, 1
      %p44 = por %p42, %p43
      %p45 = scmp.ne.s32.totalorder %s34, %s35
      %p46 = scmp.eq.s32.totalorder %s26, 0
      %p47 = por %p45, %p46
      %p48 = scmp.ne.s32.totalorder %s34, %s35
      %p49 = scmp.eq.s32.totalorder %s27, 1
      %p50 = por %p48, %p49
      %p52 = scmp.ne.s32.totalorder %s35, %s51
      %p53 = scmp.eq.s32.totalorder %s27, 0
      %p54 = por %p52, %p53
      %s55 = ssub.s32 %s21, %s28
      %p56 = scmp.eq.s32.totalorder %s55, 0
      %s58 = sadd.s32 %s57, 1
      %s59 = scalar_select %p56, %s57, %s58
      %p62 = pneg %p56
      %p63 = scmp.eq.s32.totalorder %s21, 1
      %p64 = por %p62, %p63
      %p65 = scmp.ne.s32.totalorder %s57, %s60
      %p66 = scmp.eq.s32.totalorder %s21, 0
      %p67 = por %p65, %p66
      %p68 = scmp.ne.s32.totalorder %s57, %s60
      %p69 = scmp.eq.s32.totalorder %s26, 1
      %p70 = por %p68, %p69
      %p71 = scmp.ne.s32.totalorder %s60, %s61
      %p72 = scmp.eq.s32.totalorder %s26, 0
      %p73 = por %p71, %p72
      %p74 = scmp.ne.s32.totalorder %s60, %s61
      %p75 = scmp.eq.s32.totalorder %s27, 1
      %p76 = por %p74, %p75
      %p78 = scmp.ne.s32.totalorder %s61, %s77
      %p79 = scmp.eq.s32.totalorder %s27, 0
      %p80 = por %p78, %p79
      %s82 = sadd.s32 %s81, 1
      %p85 = scmp.eq.s32.totalorder %s21, 1
      %p86 = scmp.ne.s32.totalorder %s81, %s83
      %p87 = scmp.eq.s32.totalorder %s21, 0
      %p88 = por %p86, %p87
      %p89 = scmp.ne.s32.totalorder %s81, %s83
      %p90 = scmp.eq.s32.totalorder %s26, 1
      %p91 = por %p89, %p90
      %p92 = scmp.ne.s32.totalorder %s83, %s84
      %p93 = scmp.eq.s32.totalorder %s26, 0
      %p94 = por %p92, %p93
      %p95 = scmp.ne.s32.totalorder %s83, %s84
      %p96 = scmp.eq.s32.totalorder %s27, 1
      %p97 = por %p95, %p96
      %p99 = scmp.ne.s32.totalorder %s84, %s98
      %p100 = scmp.eq.s32.totalorder %s27, 0
      %p101 = por %p99, %p100
      %s103 = sadd.s32 %s102, 1
      %p106 = scmp.eq.s32.totalorder %s21, 1
      %p107 = scmp.ne.s32.totalorder %s102, %s104
      %p108 = scmp.eq.s32.totalorder %s21, 0
      %p109 = por %p107, %p108
      %p110 = scmp.ne.s32.totalorder %s102, %s104
      %p111 = scmp.eq.s32.totalorder %s26, 1
      %p112 = por %p110, %p111
      %p113 = scmp.ne.s32.totalorder %s104, %s105
      %p114 = scmp.eq.s32.totalorder %s26, 0
      %p115 = por %p113, %p114
      %p116 = scmp.ne.s32.totalorder %s104, %s105
      %p117 = scmp.eq.s32.totalorder %s27, 1
      %p118 = por %p116, %p117
      %p120 = scmp.ne.s32.totalorder %s105, %s119
      %p121 = scmp.eq.s32.totalorder %s27, 0
      %p122 = por %p120, %p121
      %s124 = sadd.s32 %s123, 1
      %p127 = scmp.eq.s32.totalorder %s21, 1
      %p128 = scmp.ne.s32.totalorder %s123, %s125
      %p129 = scmp.eq.s32.totalorder %s21, 0
      %p130 = por %p128, %p129
      %p131 = scmp.ne.s32.totalorder %s123, %s125
      %p132 = scmp.eq.s32.totalorder %s26, 1
      %p133 = por %p131, %p132
      %p134 = scmp.ne.s32.totalorder %s125, %s126
      %p135 = scmp.eq.s32.totalorder %s26, 0
      %p136 = por %p134, %p135
      %p137 = scmp.ne.s32.totalorder %s125, %s126
      %p138 = scmp.eq.s32.totalorder %s27, 1
      %p139 = por %p137, %p138
      %p141 = scmp.ne.s32.totalorder %s126, %s140
      %p142 = scmp.eq.s32.totalorder %s27, 0
      %p143 = por %p141, %p142
      %s145 = sadd.s32 %s144, 1
      %p148 = scmp.eq.s32.totalorder %s21, 1
      %p149 = scmp.ne.s32.totalorder %s144, %s146
      %p150 = scmp.eq.s32.totalorder %s21, 0
      %p151 = por %p149, %p150
      %p152 = scmp.ne.s32.totalorder %s144, %s146
      %p153 = scmp.eq.s32.totalorder %s26, 1
      %p154 = por %p152, %p153
      %p155 = scmp.ne.s32.totalorder %s146, %s147
      %p156 = scmp.eq.s32.totalorder %s26, 0
      %p157 = por %p155, %p156
      %p158 = scmp.ne.s32.totalorder %s146, %s147
      %p159 = scmp.eq.s32.totalorder %s27, 1
      %p160 = por %p158, %p159
      %p162 = scmp.ne.s32.totalorder %s147, %s161
      %p163 = scmp.eq.s32.totalorder %s27, 0
      %p164 = por %p162, %p163
      %s165 = ssub.s32 %s21, %s28
      %p166 = scmp.eq.s32.totalorder %s165, 0
      %s168 = sadd.s32 %s167, 1
      %s169 = scalar_select %p166, %s167, %s168
      %p172 = pneg %p166
      %p173 = scmp.eq.s32.totalorder %s21, 1
      %p174 = por %p172, %p173
      %p175 = scmp.ne.s32.totalorder %s167, %s170
      %p176 = scmp.eq.s32.totalorder %s21, 0
      %p177 = por %p175, %p176
      %p178 = scmp.ne.s32.totalorder %s167, %s170
      %p179 = scmp.eq.s32.totalorder %s26, 1
      %p180 = por %p178, %p179
      %p181 = scmp.ne.s32.totalorder %s170, %s171
      %p182 = scmp.eq.s32.totalorder %s26, 0
      %p183 = por %p181, %p182
      %p184 = scmp.ne.s32.totalorder %s170, %s171
      %p185 = scmp.eq.s32.totalorder %s27, 1
      %p186 = por %p184, %p185
      %p188 = scmp.ne.s32.totalorder %s171, %s187
      %p189 = scmp.eq.s32.totalorder %s27, 0
      %p190 = por %p188, %p189
      %s191 = ssub.s32 %s21, %s28
      %p192 = scmp.eq.s32.totalorder %s191, 0
      %s194 = sadd.s32 %s193, 1
      %s195 = scalar_select %p192, %s193, %s194
      %p198 = pneg %p192
      %p199 = scmp.eq.s32.totalorder %s21, 1
      %p200 = por %p198, %p199
      %p201 = scmp.ne.s32.totalorder %s193, %s196
      %p202 = scmp.eq.s32.totalorder %s21, 0
      %p203 = por %p201, %p202
      %p204 = scmp.ne.s32.totalorder %s193, %s196
      %p205 = scmp.eq.s32.totalorder %s26, 1
      %p206 = por %p204, %p205
      %p207 = scmp.ne.s32.totalorder %s196, %s197
      %p208 = scmp.eq.s32.totalorder %s26, 0
      %p209 = por %p207, %p208
      %p210 = scmp.ne.s32.totalorder %s196, %s197
      %p211 = scmp.eq.s32.totalorder %s27, 1
      %p212 = por %p210, %p211
      %p214 = scmp.ne.s32.totalorder %s197, %s213
      %p215 = scmp.eq.s32.totalorder %s27, 0
      %p216 = por %p214, %p215
      %p217 = scmp.le.s32.totalorder 1, %s21
      %p218 = scmp.lt.s32.totalorder %s21, 3
      %p219 = pnand %p217, %p218
      %p220 = pneg %p219
      // Predicated region
      $region9: #{tpu_custom_call.1} parent=5 // pred_check
        _
      $region10: #{tpu_custom_call.1} parent=5 // pred_check_branch
        %222 = sbr.rel (%p219) target = $region12
      $region11: #{tpu_custom_call.1} parent=5 // pred_region
        %s223 = ssub.s32 %s21, 1
        // Predicated region
        $region13: #{tpu_custom_call.1} parent=11 // pred_check
          %p224 = pneg %p94
        $region14: #{tpu_custom_call.1} parent=11 // pred_check_branch
          %226 = sbr.rel (%p224) target = $region16
        $region15: #{tpu_custom_call.1} parent=11 // pred_region
          %s228 = ssub.s32 1536, 1536
          %229 = vsyncadd [#allocation3], %s228
          %s230 = sshll.u32 [#allocation2], 4
          %s231 = int_to_ptr.vmem [resolvable:$true] %s230
          %236 = dma.hbm_to_vmem [thread:$0]  %s2, 1536, %s231, [#allocation3], 64, 64, 4
        $region16: #{tpu_custom_call.1} parent=11 // pred_fallthru
          _
        // Predicated region
        $region17: #{tpu_custom_call.1} parent=11 // pred_check
          %p237 = pneg %p115
        $region18: #{tpu_custom_call.1} parent=11 // pred_check_branch
          %239 = sbr.rel (%p237) target = $region20
        $region19: #{tpu_custom_call.1} parent=11 // pred_region
          _
        $region20: #{tpu_custom_call.1} parent=11 // pred_fallthru
          _
        // Predicated region
        $region21: #{tpu_custom_call.1} parent=11 // pred_check
          %p240 = pneg %p136
        $region22: #{tpu_custom_call.1} parent=11 // pred_check_branch
          %242 = sbr.rel (%p240) target = $region24
        $region23: #{tpu_custom_call.1} parent=11 // pred_region
          _
        $region24: #{tpu_custom_call.1} parent=11 // pred_fallthru
          _
        // Predicated region
        $region25: #{tpu_custom_call.1} parent=11 // pred_check
          %p243 = pneg %p157
        $region26: #{tpu_custom_call.1} parent=11 // pred_check_branch
          %245 = sbr.rel (%p243) target = $region28
        $region27: #{tpu_custom_call.1} parent=11 // pred_region
          _
        $region28: #{tpu_custom_call.1} parent=11 // pred_fallthru
          _
      $region12: #{tpu_custom_call.1} parent=5 // pred_fallthru
        _
      %p246 = scmp.lt.s32.totalorder %s21, 2
      // Predicated region
      $region29: #{tpu_custom_call.1} parent=5 // pred_check
        %p247 = pneg %p246
      $region30: #{tpu_custom_call.1} parent=5 // pred_check_branch
        %249 = sbr.rel (%p247) target = $region32
      $region31: #{tpu_custom_call.1} parent=5 // pred_region
        // Predicated region
        $region33: #{tpu_custom_call.1} parent=31 // pred_check
          %p250 = pneg %p41
        $region34: #{tpu_custom_call.1} parent=31 // pred_check_branch
          %252 = sbr.rel (%p250) target = $region36
        $region35: #{tpu_custom_call.1} parent=31 // pred_region
          %s253 = smul.u32 16, %s21
          %p254 = scmp.lt.s32.totalorder %s253, 31
          %s255 = scalar_select %p254, %s253, 31
          %s256 = smul.addr %s255, 8
          %s257 = scalar_lea.vmem %s0, %s256
          %s258 = smul.u32 16, %s21
        $region36: #{tpu_custom_call.1} parent=31 // pred_fallthru
          _
        // Predicated region
        $region37: #{tpu_custom_call.1} parent=31 // pred_check
          %p259 = pneg %p67
        $region38: #{tpu_custom_call.1} parent=31 // pred_check_branch
          %261 = sbr.rel (%p259) target = $region40
        $region39: #{tpu_custom_call.1} parent=31 // pred_region
          %s262 = smul.u32 16, %s21
          %p263 = scmp.lt.s32.totalorder %s262, 31
          %s264 = scalar_select %p263, %s262, 31
          %s265 = smul.addr %s264, 8
          %s266 = scalar_lea.vmem %s1, %s265
          %s267 = smul.u32 16, %s21
        $region40: #{tpu_custom_call.1} parent=31 // pred_fallthru
          _
      $region32: #{tpu_custom_call.1} parent=5 // pred_fallthru
        _
      %p268 = scmp.le.s32.totalorder 1, %s21
      %p269 = scmp.lt.s32.totalorder %s21, 3
      %p270 = pnand %p268, %p269
      %p271 = pneg %p270
      // Predicated region
      $region41: #{tpu_custom_call.1} parent=5 // pred_check
        _
      $region42: #{tpu_custom_call.1} parent=5 // pred_check_branch
        %273 = sbr.rel (%p270) target = $region44
      $region43: #{tpu_custom_call.1} parent=5 // pred_region
        %s274 = ssub.s32 %s21, 1
        // Predicated region
        $region45: #{tpu_custom_call.1} parent=43 // pred_check
          %p275 = pneg %p94
        $region46: #{tpu_custom_call.1} parent=43 // pred_check_branch
          %277 = sbr.rel (%p275) target = $region48
        $region47: #{tpu_custom_call.1} parent=43 // pred_region
          %278 = dma.done [#allocation3], 1536
        $region48: #{tpu_custom_call.1} parent=43 // pred_fallthru
          _
        %s279 = smul.u32 16, %s26
        %p280 = scmp.lt.s32.totalorder %s279, 31
        %s281 = scalar_select %p280, %s279, 31
        %s282 = smul.addr %s281, 8
        %s283 = scalar_lea.vmem %s0, %s282
        %p284 = pneg %p47
        %p285 = pneg %p44
        %s286 = smul.u32 16, %s26
        %p287 = scmp.lt.s32.totalorder %s286, 31
        %s288 = scalar_select %p287, %s286, 31
        %s289 = smul.addr %s288, 8
        %s290 = scalar_lea.vmem %s1, %s289
        %p291 = pneg %p73
        %p292 = pneg %p70
        %p293 = pneg %p94
        %p294 = pneg %p91
        %p295 = pneg %p115
        %p296 = pneg %p112
        %p297 = pneg %p136
        %p298 = pneg %p133
        %p299 = pneg %p157
        %p300 = pneg %p154
        %p301 = pneg %p183
        %p302 = pneg %p180
        %s303 = sand.u32 %s170, 1
        %s304 = scalar_lea.sflag [#allocation4], %s303
        %s305 = sand.u32 %s170, 1
        %s306 = smul.addr %s305, 16
        %s307 = scalar_lea.vmem [#allocation5], %s306
        %p308 = pneg %p209
        %p309 = pneg %p206
        %s310 = sand.u32 %s196, 1
        %s311 = scalar_lea.sflag [#allocation7], %s310
        %s312 = sand.u32 %s196, 1
        %s313 = smul.addr %s312, 16
        %s314 = scalar_lea.vmem [#allocation6], %s313
        %s315 = smul.u32 16, %s26
        %p316 = scmp.lt.s32.totalorder %s315, 31
        %s317 = scalar_select %p316, %s315, 31
        %s318 = smul.addr %s317, 8
        %s319 = scalar_lea.vmem %s0, %s318
        %s320 = smul.u32 16, %s26
        %s321 = smul.u32 16, %s26
        %p322 = scmp.lt.s32.totalorder %s321, 31
        %s323 = scalar_select %p322, %s321, 31
        %s324 = smul.addr %s323, 8
        %s325 = scalar_lea.vmem %s1, %s324
        %s326 = smul.u32 16, %s26
        %s327 = smul.u32 2, %s26
        %s328 = smul.u32 2, %s26
        %v330 = vld [vmem:[%s319] sm:$0xff]
        %v331 = vld [vmem:[%s319 + $0x8] sm:$0xff]
        %v332 = vld [vmem:[%s319 + $0x10] sm:$0xff]
        %v333 = vld [vmem:[%s319 + $0x18] sm:$0xff]
        %v334 = vld [vmem:[%s319 + $0x20] sm:$0xff]
        %v335 = vld [vmem:[%s319 + $0x28] sm:$0xff]
        %v336 = vld [vmem:[%s319 + $0x30] sm:$0xff]
        %v337 = vld [vmem:[%s319 + $0x38] sm:$0xff]
        %v338 = vld [vmem:[%s319 + $0x40] sm:$0xff]
        %v339 = vld [vmem:[%s319 + $0x48] sm:$0xff]
        %v340 = vld [vmem:[%s319 + $0x50] sm:$0xff]
        %v341 = vld [vmem:[%s319 + $0x58] sm:$0xff]
        %v342 = vld [vmem:[%s319 + $0x60] sm:$0xff]
        %v343 = vld [vmem:[%s319 + $0x68] sm:$0xff]
        %v344 = vld [vmem:[%s319 + $0x70] sm:$0xff]
        %v345 = vld [vmem:[%s319 + $0x78] sm:$0xff]
        %v346 = vld [vmem:[%s325] sm:$0xff]
        %v347 = vld [vmem:[%s325 + $0x8] sm:$0xff]
        %v348 = vld [vmem:[%s325 + $0x10] sm:$0xff]
        %v349 = vld [vmem:[%s325 + $0x18] sm:$0xff]
        %v350 = vld [vmem:[%s325 + $0x20] sm:$0xff]
        %v351 = vld [vmem:[%s325 + $0x28] sm:$0xff]
        %v352 = vld [vmem:[%s325 + $0x30] sm:$0xff]
        %v353 = vld [vmem:[%s325 + $0x38] sm:$0xff]
        %v354 = vld [vmem:[%s325 + $0x40] sm:$0xff]
        %v355 = vld [vmem:[%s325 + $0x48] sm:$0xff]
        %v356 = vld [vmem:[%s325 + $0x50] sm:$0xff]
        %v357 = vld [vmem:[%s325 + $0x58] sm:$0xff]
        %v358 = vld [vmem:[%s325 + $0x60] sm:$0xff]
        %v359 = vld [vmem:[%s325 + $0x68] sm:$0xff]
        %v360 = vld [vmem:[%s325 + $0x70] sm:$0xff]
        %v361 = vld [vmem:[%s325 + $0x78] sm:$0xff]
        %v362 = vld [vmem:[%s3] sm:$0xff]
        %v363 = vld [vmem:[%s3 + $0x8] sm:$0x3f]
        %v364 = vpack.c.bf16 %v346, %v346
        %v365 = vpack.c.bf16 %v347, %v347
        %v366 = vpack.c.bf16 %v348, %v348
        %v367 = vpack.c.bf16 %v349, %v349
        %v368 = vpack.c.bf16 %v350, %v350
        %v369 = vpack.c.bf16 %v351, %v351
        %v370 = vpack.c.bf16 %v352, %v352
        %v371 = vpack.c.bf16 %v353, %v353
        %v372 = vpack.c.bf16 %v354, %v354
        %v373 = vpack.c.bf16 %v355, %v355
        %v374 = vpack.c.bf16 %v356, %v356
        %v375 = vpack.c.bf16 %v357, %v357
        %v376 = vpack.c.bf16 %v358, %v358
        %v377 = vpack.c.bf16 %v359, %v359
        %v378 = vpack.c.bf16 %v360, %v360
        %v379 = vpack.c.bf16 %v361, %v361
        %v380 = vpack.c.bf16 %v330, %v330
        %v381 = vpack.c.bf16 %v331, %v331
        %v382 = vpack.c.bf16 %v332, %v332
        %v383 = vpack.c.bf16 %v333, %v333
        %v384 = vpack.c.bf16 %v334, %v334
        %v385 = vpack.c.bf16 %v335, %v335
        %v386 = vpack.c.bf16 %v336, %v336
        %v387 = vpack.c.bf16 %v337, %v337
        %v388 = vpack.c.bf16 %v338, %v338
        %v389 = vpack.c.bf16 %v339, %v339
        %v390 = vpack.c.bf16 %v340, %v340
        %v391 = vpack.c.bf16 %v341, %v341
        %v392 = vpack.c.bf16 %v342, %v342
        %v393 = vpack.c.bf16 %v343, %v343
        %v394 = vpack.c.bf16 %v344, %v344
        %v395 = vpack.c.bf16 %v345, %v345
        %vm396 = vcmask 64512
        %v398 = vsel %vm396, %v364, 0
        %vm400 = vcmask 1043456
        %v402 = vsel %vm400, %v380, 0
        %404 = vmatprep.subr.bf16.mxu0 0
        %405 = vmatpush1.bf16.msra.mxu0 %v402
        %406 = vmatprep.subr.bf16.mxu0 0
        %407 = vmatpush1.bf16.msra.mxu0 0
        %408 = vmatprep.subr.bf16.mxu0 0
        %409 = vmatpush1.bf16.msra.mxu0 0
        %410 = vmatprep.subr.bf16.mxu0 0
        %411 = vmatpush1.bf16.msra.mxu0 0
        %412 = vmatprep.subr.bf16.mxu0 0
        %413 = vmatpush1.bf16.msra.mxu0 0
        %414 = vmatprep.subr.bf16.mxu0 0
        %415 = vmatpush1.bf16.msra.mxu0 0
        %416 = vmatprep.subr.bf16.mxu0 0
        %417 = vmatpush1.bf16.msra.mxu0 0
        %418 = vmatprep.subr.bf16.mxu0 0
        %419 = vmatpush1.bf16.msra.mxu0 0
        %420 = vmatprep.subr.bf16.mxu0 0
        %421 = vmatpush1.bf16.msra.mxu0 0
        %422 = vmatprep.subr.bf16.mxu0 0
        %423 = vmatpush1.bf16.msra.mxu0 0
        %424 = vmatprep.subr.bf16.mxu0 0
        %425 = vmatpush1.bf16.msra.mxu0 0
        %426 = vmatprep.subr.bf16.mxu0 0
        %427 = vmatpush1.bf16.msra.mxu0 0
        %428 = vmatprep.subr.bf16.mxu0 0
        %429 = vmatpush1.bf16.msra.mxu0 0
        %430 = vmatprep.subr.bf16.mxu0 0
        %431 = vmatpush1.bf16.msra.mxu0 0
        %432 = vmatprep.subr.bf16.mxu0 0
        %433 = vmatpush1.bf16.msra.mxu0 0
        %434 = vmatprep.subr.bf16.mxu0 0
        %435 = vmatpush1.bf16.msra.mxu0 0
        %436 = vmatprep.mubr.bf16.mxu0 0
        %437 = vmatmul.mubr.bf16.gmra.mrb[0].mxu0 %v398
        %v438 = vpop.f32.mrb[0].mxu0
        %v439 = vadd.f32 0.0, %v438
        %v440 = vpop.f32.mrb[0].mxu0
        %v441 = vpop.f32.mrb[0].mxu0
        %v442 = vpop.f32.mrb[0].mxu0
        %443 = vdwg.mxu0
        %v445 = vsel %vm396, %v365, 0
        %v448 = vsel %vm400, %v381, 0
        %450 = vmatprep.subr.bf16.mxu0 0
        %451 = vmatpush1.bf16.msra.mxu0 %v448
        %452 = vmatprep.subr.bf16.mxu0 0
        %453 = vmatpush1.bf16.msra.mxu0 0
        %454 = vmatprep.subr.bf16.mxu0 0
        %455 = vmatpush1.bf16.msra.mxu0 0
        %456 = vmatprep.subr.bf16.mxu0 0
        %457 = vmatpush1.bf16.msra.mxu0 0
        %458 = vmatprep.subr.bf16.mxu0 0
        %459 = vmatpush1.bf16.msra.mxu0 0
        %460 = vmatprep.subr.bf16.mxu0 0
        %461 = vmatpush1.bf16.msra.mxu0 0
        %462 = vmatprep.subr.bf16.mxu0 0
        %463 = vmatpush1.bf16.msra.mxu0 0
        %464 = vmatprep.subr.bf16.mxu0 0
        %465 = vmatpush1.bf16.msra.mxu0 0
        %466 = vmatprep.subr.bf16.mxu0 0
        %467 = vmatpush1.bf16.msra.mxu0 0
        %468 = vmatprep.subr.bf16.mxu0 0
        %469 = vmatpush1.bf16.msra.mxu0 0
        %470 = vmatprep.subr.bf16.mxu0 0
        %471 = vmatpush1.bf16.msra.mxu0 0
        %472 = vmatprep.subr.bf16.mxu0 0
        %473 = vmatpush1.bf16.msra.mxu0 0
        %474 = vmatprep.subr.bf16.mxu0 0
        %475 = vmatpush1.bf16.msra.mxu0 0
        %476 = vmatprep.subr.bf16.mxu0 0
        %477 = vmatpush1.bf16.msra.mxu0 0
        %478 = vmatprep.subr.bf16.mxu0 0
        %479 = vmatpush1.bf16.msra.mxu0 0
        %480 = vmatprep.subr.bf16.mxu0 0
        %481 = vmatpush1.bf16.msra.mxu0 0
        %482 = vmatprep.mubr.bf16.mxu0 0
        %483 = vmatmul.mubr.bf16.gmra.mrb[0].mxu0 %v445
        %v484 = vpop.f32.mrb[0].mxu0
        %v485 = vadd.f32 0.0, %v484
        %v486 = vpop.f32.mrb[0].mxu0
        %v487 = vpop.f32.mrb[0].mxu0
        %v488 = vpop.f32.mrb[0].mxu0
        %489 = vdwg.mxu0
        %v491 = vsel %vm396, %v366, 0
        %v494 = vsel %vm400, %v382, 0
        %496 = vmatprep.subr.bf16.mxu0 0
        %497 = vmatpush1.bf16.msra.mxu0 %v494
        %498 = vmatprep.subr.bf16.mxu0 0
        %499 = vmatpush1.bf16.msra.mxu0 0
        %500 = vmatprep.subr.bf16.mxu0 0
        %501 = vmatpush1.bf16.msra.mxu0 0
        %502 = vmatprep.subr.bf16.mxu0 0
        %503 = vmatpush1.bf16.msra.mxu0 0
        %504 = vmatprep.subr.bf16.mxu0 0
        %505 = vmatpush1.bf16.msra.mxu0 0
        %506 = vmatprep.subr.bf16.mxu0 0
        %507 = vmatpush1.bf16.msra.mxu0 0
        %508 = vmatprep.subr.bf16.mxu0 0
        %509 = vmatpush1.bf16.msra.mxu0 0
        %510 = vmatprep.subr.bf16.mxu0 0
        %511 = vmatpush1.bf16.msra.mxu0 0
        %512 = vmatprep.subr.bf16.mxu0 0
        %513 = vmatpush1.bf16.msra.mxu0 0
        %514 = vmatprep.subr.bf16.mxu0 0
        %515 = vmatpush1.bf16.msra.mxu0 0
        %516 = vmatprep.subr.bf16.mxu0 0
        %517 = vmatpush1.bf16.msra.mxu0 0
        %518 = vmatprep.subr.bf16.mxu0 0
        %519 = vmatpush1.bf16.msra.mxu0 0
        %520 = vmatprep.subr.bf16.mxu0 0
        %521 = vmatpush1.bf16.msra.mxu0 0
        %522 = vmatprep.subr.bf16.mxu0 0
        %523 = vmatpush1.bf16.msra.mxu0 0
        %524 = vmatprep.subr.bf16.mxu0 0
        %525 = vmatpush1.bf16.msra.mxu0 0
        %526 = vmatprep.subr.bf16.mxu0 0
        %527 = vmatpush1.bf16.msra.mxu0 0
        %528 = vmatprep.mubr.bf16.mxu0 0
        %529 = vmatmul.mubr.bf16.gmra.mrb[0].mxu0 %v491
        %v530 = vpop.f32.mrb[0].mxu0
        %v531 = vadd.f32 0.0, %v530
        %v532 = vpop.f32.mrb[0].mxu0
        %v533 = vpop.f32.mrb[0].mxu0
        %v534 = vpop.f32.mrb[0].mxu0
        %535 = vdwg.mxu0
        %v537 = vsel %vm396, %v367, 0
        %v540 = vsel %vm400, %v383, 0
        %542 = vmatprep.subr.bf16.mxu0 0
        %543 = vmatpush1.bf16.msra.mxu0 %v540
        %544 = vmatprep.subr.bf16.mxu0 0
        %545 = vmatpush1.bf16.msra.mxu0 0
        %546 = vmatprep.subr.bf16.mxu0 0
        %547 = vmatpush1.bf16.msra.mxu0 0
        %548 = vmatprep.subr.bf16.mxu0 0
        %549 = vmatpush1.bf16.msra.mxu0 0
        %550 = vmatprep.subr.bf16.mxu0 0
        %551 = vmatpush1.bf16.msra.mxu0 0
        %552 = vmatprep.subr.bf16.mxu0 0
        %553 = vmatpush1.bf16.msra.mxu0 0
        %554 = vmatprep.subr.bf16.mxu0 0
        %555 = vmatpush1.bf16.msra.mxu0 0
        %556 = vmatprep.subr.bf16.mxu0 0
        %557 = vmatpush1.bf16.msra.mxu0 0
        %558 = vmatprep.subr.bf16.mxu0 0
        %559 = vmatpush1.bf16.msra.mxu0 0
        %560 = vmatprep.subr.bf16.mxu0 0
        %561 = vmatpush1.bf16.msra.mxu0 0
        %562 = vmatprep.subr.bf16.mxu0 0
        %563 = vmatpush1.bf16.msra.mxu0 0
        %564 = vmatprep.subr.bf16.mxu0 0
        %565 = vmatpush1.bf16.msra.mxu0 0
        %566 = vmatprep.subr.bf16.mxu0 0
        %567 = vmatpush1.bf16.msra.mxu0 0
        %568 = vmatprep.subr.bf16.mxu0 0
        %569 = vmatpush1.bf16.msra.mxu0 0
        %570 = vmatprep.subr.bf16.mxu0 0
        %571 = vmatpush1.bf16.msra.mxu0 0
        %572 = vmatprep.subr.bf16.mxu0 0
        %573 = vmatpush1.bf16.msra.mxu0 0
        %574 = vmatprep.mubr.bf16.mxu0 0
        %575 = vmatmul.mubr.bf16.gmra.mrb[0].mxu0 %v537
        %v576 = vpop.f32.mrb[0].mxu0
        %v577 = vadd.f32 0.0, %v576
        %v578 = vpop.f32.mrb[0].mxu0
        %v579 = vpop.f32.mrb[0].mxu0
        %v580 = vpop.f32.mrb[0].mxu0
        %581 = vdwg.mxu0
        %v583 = vsel %vm396, %v368, 0
        %v586 = vsel %vm400, %v384, 0
        %588 = vmatprep.subr.bf16.mxu0 0
        %589 = vmatpush1.bf16.msra.mxu0 %v586
        %590 = vmatprep.subr.bf16.mxu0 0
        %591 = vmatpush1.bf16.msra.mxu0 0
        %592 = vmatprep.subr.bf16.mxu0 0
        %593 = vmatpush1.bf16.msra.mxu0 0
        %594 = vmatprep.subr.bf16.mxu0 0
        %595 = vmatpush1.bf16.msra.mxu0 0
        %596 = vmatprep.subr.bf16.mxu0 0
        %597 = vmatpush1.bf16.msra.mxu0 0
        %598 = vmatprep.subr.bf16.mxu0 0
        %599 = vmatpush1.bf16.msra.mxu0 0
        %600 = vmatprep.subr.bf16.mxu0 0
        %601 = vmatpush1.bf16.msra.mxu0 0
        %602 = vmatprep.subr.bf16.mxu0 0
        %603 = vmatpush1.bf16.msra.mxu0 0
        %604 = vmatprep.subr.bf16.mxu0 0
        %605 = vmatpush1.bf16.msra.mxu0 0
        %606 = vmatprep.subr.bf16.mxu0 0
        %607 = vmatpush1.bf16.msra.mxu0 0
        %608 = vmatprep.subr.bf16.mxu0 0
        %609 = vmatpush1.bf16.msra.mxu0 0
        %610 = vmatprep.subr.bf16.mxu0 0
        %611 = vmatpush1.bf16.msra.mxu0 0
        %612 = vmatprep.subr.bf16.mxu0 0
        %613 = vmatpush1.bf16.msra.mxu0 0
        %614 = vmatprep.subr.bf16.mxu0 0
        %615 = vmatpush1.bf16.msra.mxu0 0
        %616 = vmatprep.subr.bf16.mxu0 0
        %617 = vmatpush1.bf16.msra.mxu0 0
        %618 = vmatprep.subr.bf16.mxu0 0
        %619 = vmatpush1.bf16.msra.mxu0 0
        %620 = vmatprep.mubr.bf16.mxu0 0
        %621 = vmatmul.mubr.bf16.gmra.mrb[0].mxu0 %v583
        %v622 = vpop.f32.mrb[0].mxu0
        %v623 = vadd.f32 0.0, %v622
        %v624 = vpop.f32.mrb[0].mxu0
        %v625 = vpop.f32.mrb[0].mxu0
        %v626 = vpop.f32.mrb[0].mxu0
        %627 = vdwg.mxu0
        %v629 = vsel %vm396, %v369, 0
        %v632 = vsel %vm400, %v385, 0
        %634 = vmatprep.subr.bf16.mxu0 0
        %635 = vmatpush1.bf16.msra.mxu0 %v632
        %636 = vmatprep.subr.bf16.mxu0 0
        %637 = vmatpush1.bf16.msra.mxu0 0
        %638 = vmatprep.subr.bf16.mxu0 0
        %639 = vmatpush1.bf16.msra.mxu0 0
        %640 = vmatprep.subr.bf16.mxu0 0
        %641 = vmatpush1.bf16.msra.mxu0 0
        %642 = vmatprep.subr.bf16.mxu0 0
        %643 = vmatpush1.bf16.msra.mxu0 0
        %644 = vmatprep.subr.bf16.mxu0 0
        %645 = vmatpush1.bf16.msra.mxu0 0
        %646 = vmatprep.subr.bf16.mxu0 0
        %647 = vmatpush1.bf16.msra.mxu0 0
        %648 = vmatprep.subr.bf16.mxu0 0
        %649 = vmatpush1.bf16.msra.mxu0 0
        %650 = vmatprep.subr.bf16.mxu0 0
        %651 = vmatpush1.bf16.msra.mxu0 0
        %652 = vmatprep.subr.bf16.mxu0 0
        %653 = vmatpush1.bf16.msra.mxu0 0
        %654 = vmatprep.subr.bf16.mxu0 0
        %655 = vmatpush1.bf16.msra.mxu0 0
        %656 = vmatprep.subr.bf16.mxu0 0
        %657 = vmatpush1.bf16.msra.mxu0 0
        %658 = vmatprep.subr.bf16.mxu0 0
        %659 = vmatpush1.bf16.msra.mxu0 0
        %660 = vmatprep.subr.bf16.mxu0 0
        %661 = vmatpush1.bf16.msra.mxu0 0
        %662 = vmatprep.subr.bf16.mxu0 0
        %663 = vmatpush1.bf16.msra.mxu0 0
        %664 = vmatprep.subr.bf16.mxu0 0
        %665 = vmatpush1.bf16.msra.mxu0 0
        %666 = vmatprep.mubr.bf16.mxu0 0
        %667 = vmatmul.mubr.bf16.gmra.mrb[0].mxu0 %v629
        %v668 = vpop.f32.mrb[0].mxu0
        %v669 = vadd.f32 0.0, %v668
        %v670 = vpop.f32.mrb[0].mxu0
        %v671 = vpop.f32.mrb[0].mxu0
        %v672 = vpop.f32.mrb[0].mxu0
        %673 = vdwg.mxu0
        %v675 = vsel %vm396, %v370, 0
        %v678 = vsel %vm400, %v386, 0
        %680 = vmatprep.subr.bf16.mxu0 0
        %681 = vmatpush1.bf16.msra.mxu0 %v678
        %682 = vmatprep.subr.bf16.mxu0 0
        %683 = vmatpush1.bf16.msra.mxu0 0
        %684 = vmatprep.subr.bf16.mxu0 0
        %685 = vmatpush1.bf16.msra.mxu0 0
        %686 = vmatprep.subr.bf16.mxu0 0
        %687 = vmatpush1.bf16.msra.mxu0 0
        %688 = vmatprep.subr.bf16.mxu0 0
        %689 = vmatpush1.bf16.msra.mxu0 0
        %690 = vmatprep.subr.bf16.mxu0 0
        %691 = vmatpush1.bf16.msra.mxu0 0
        %692 = vmatprep.subr.bf16.mxu0 0
        %693 = vmatpush1.bf16.msra.mxu0 0
        %694 = vmatprep.subr.bf16.mxu0 0
        %695 = vmatpush1.bf16.msra.mxu0 0
        %696 = vmatprep.subr.bf16.mxu0 0
        %697 = vmatpush1.bf16.msra.mxu0 0
        %698 = vmatprep.subr.bf16.mxu0 0
        %699 = vmatpush1.bf16.msra.mxu0 0
        %700 = vmatprep.subr.bf16.mxu0 0
        %701 = vmatpush1.bf16.msra.mxu0 0
        %702 = vmatprep.subr.bf16.mxu0 0
        %703 = vmatpush1.bf16.msra.mxu0 0
        %704 = vmatprep.subr.bf16.mxu0 0
        %705 = vmatpush1.bf16.msra.mxu0 0
        %706 = vmatprep.subr.bf16.mxu0 0
        %707 = vmatpush1.bf16.msra.mxu0 0
        %708 = vmatprep.subr.bf16.mxu0 0
        %709 = vmatpush1.bf16.msra.mxu0 0
        %710 = vmatprep.subr.bf16.mxu0 0
        %711 = vmatpush1.bf16.msra.mxu0 0
        %712 = vmatprep.mubr.bf16.mxu0 0
        %713 = vmatmul.mubr.bf16.gmra.mrb[0].mxu0 %v675
        %v714 = vpop.f32.mrb[0].mxu0
        %v715 = vadd.f32 0.0, %v714
        %v716 = vpop.f32.mrb[0].mxu0
        %v717 = vpop.f32.mrb[0].mxu0
        %v718 = vpop.f32.mrb[0].mxu0
        %719 = vdwg.mxu0
        %v721 = vsel %vm396, %v371, 0
        %v724 = vsel %vm400, %v387, 0
        %726 = vmatprep.subr.bf16.mxu0 0
        %727 = vmatpush1.bf16.msra.mxu0 %v724
        %728 = vmatprep.subr.bf16.mxu0 0
        %729 = vmatpush1.bf16.msra.mxu0 0
        %730 = vmatprep.subr.bf16.mxu0 0
        %731 = vmatpush1.bf16.msra.mxu0 0
        %732 = vmatprep.subr.bf16.mxu0 0
        %733 = vmatpush1.bf16.msra.mxu0 0
        %734 = vmatprep.subr.bf16.mxu0 0
        %735 = vmatpush1.bf16.msra.mxu0 0
        %736 = vmatprep.subr.bf16.mxu0 0
        %737 = vmatpush1.bf16.msra.mxu0 0
        %738 = vmatprep.subr.bf16.mxu0 0
        %739 = vmatpush1.bf16.msra.mxu0 0
        %740 = vmatprep.subr.bf16.mxu0 0
        %741 = vmatpush1.bf16.msra.mxu0 0
        %742 = vmatprep.subr.bf16.mxu0 0
        %743 = vmatpush1.bf16.msra.mxu0 0
        %744 = vmatprep.subr.bf16.mxu0 0
        %745 = vmatpush1.bf16.msra.mxu0 0
        %746 = vmatprep.subr.bf16.mxu0 0
        %747 = vmatpush1.bf16.msra.mxu0 0
        %748 = vmatprep.subr.bf16.mxu0 0
        %749 = vmatpush1.bf16.msra.mxu0 0
        %750 = vmatprep.subr.bf16.mxu0 0
        %751 = vmatpush1.bf16.msra.mxu0 0
        %752 = vmatprep.subr.bf16.mxu0 0
        %753 = vmatpush1.bf16.msra.mxu0 0
        %754 = vmatprep.subr.bf16.mxu0 0
        %755 = vmatpush1.bf16.msra.mxu0 0
        %756 = vmatprep.subr.bf16.mxu0 0
        %757 = vmatpush1.bf16.msra.mxu0 0
        %758 = vmatprep.mubr.bf16.mxu0 0
        %759 = vmatmul.mubr.bf16.gmra.mrb[0].mxu0 %v721
        %v760 = vpop.f32.mrb[0].mxu0
        %v761 = vadd.f32 0.0, %v760
        %v762 = vpop.f32.mrb[0].mxu0
        %v763 = vpop.f32.mrb[0].mxu0
        %v764 = vpop.f32.mrb[0].mxu0
        %765 = vdwg.mxu0
        %v767 = vsel %vm396, %v372, 0
        %v770 = vsel %vm400, %v388, 0
        %772 = vmatprep.subr.bf16.mxu0 0
        %773 = vmatpush1.bf16.msra.mxu0 %v770
        %774 = vmatprep.subr.bf16.mxu0 0
        %775 = vmatpush1.bf16.msra.mxu0 0
        %776 = vmatprep.subr.bf16.mxu0 0
        %777 = vmatpush1.bf16.msra.mxu0 0
        %778 = vmatprep.subr.bf16.mxu0 0
        %779 = vmatpush1.bf16.msra.mxu0 0
        %780 = vmatprep.subr.bf16.mxu0 0
        %781 = vmatpush1.bf16.msra.mxu0 0
        %782 = vmatprep.subr.bf16.mxu0 0
        %783 = vmatpush1.bf16.msra.mxu0 0
        %784 = vmatprep.subr.bf16.mxu0 0
        %785 = vmatpush1.bf16.msra.mxu0 0
        %786 = vmatprep.subr.bf16.mxu0 0
        %787 = vmatpush1.bf16.msra.mxu0 0
        %788 = vmatprep.subr.bf16.mxu0 0
        %789 = vmatpush1.bf16.msra.mxu0 0
        %790 = vmatprep.subr.bf16.mxu0 0
        %791 = vmatpush1.bf16.msra.mxu0 0
        %792 = vmatprep.subr.bf16.mxu0 0
        %793 = vmatpush1.bf16.msra.mxu0 0
        %794 = vmatprep.subr.bf16.mxu0 0
        %795 = vmatpush1.bf16.msra.mxu0 0
        %796 = vmatprep.subr.bf16.mxu0 0
        %797 = vmatpush1.bf16.msra.mxu0 0
        %798 = vmatprep.subr.bf16.mxu0 0
        %799 = vmatpush1.bf16.msra.mxu0 0
        %800 = vmatprep.subr.bf16.mxu0 0
        %801 = vmatpush1.bf16.msra.mxu0 0
        %802 = vmatprep.subr.bf16.mxu0 0
        %803 = vmatpush1.bf16.msra.mxu0 0
        %804 = vmatprep.mubr.bf16.mxu0 0
        %805 = vmatmul.mubr.bf16.gmra.mrb[0].mxu0 %v767
        %v806 = vpop.f32.mrb[0].mxu0
        %v807 = vadd.f32 0.0, %v806
        %v808 = vpop.f32.mrb[0].mxu0
        %v809 = vpop.f32.mrb[0].mxu0
        %v810 = vpop.f32.mrb[0].mxu0
        %811 = vdwg.mxu0
        %v813 = vsel %vm396, %v373, 0
        %v816 = vsel %vm400, %v389, 0
        %818 = vmatprep.subr.bf16.mxu0 0
        %819 = vmatpush1.bf16.msra.mxu0 %v816
        %820 = vmatprep.subr.bf16.mxu0 0
        %821 = vmatpush1.bf16.msra.mxu0 0
        %822 = vmatprep.subr.bf16.mxu0 0
        %823 = vmatpush1.bf16.msra.mxu0 0
        %824 = vmatprep.subr.bf16.mxu0 0
        %825 = vmatpush1.bf16.msra.mxu0 0
        %826 = vmatprep.subr.bf16.mxu0 0
        %827 = vmatpush1.bf16.msra.mxu0 0
        %828 = vmatprep.subr.bf16.mxu0 0
        %829 = vmatpush1.bf16.msra.mxu0 0
        %830 = vmatprep.subr.bf16.mxu0 0
        %831 = vmatpush1.bf16.msra.mxu0 0
        %832 = vmatprep.subr.bf16.mxu0 0
        %833 = vmatpush1.bf16.msra.mxu0 0
        %834 = vmatprep.subr.bf16.mxu0 0
        %835 = vmatpush1.bf16.msra.mxu0 0
        %836 = vmatprep.subr.bf16.mxu0 0
        %837 = vmatpush1.bf16.msra.mxu0 0
        %838 = vmatprep.subr.bf16.mxu0 0
        %839 = vmatpush1.bf16.msra.mxu0 0
        %840 = vmatprep.subr.bf16.mxu0 0
        %841 = vmatpush1.bf16.msra.mxu0 0
        %842 = vmatprep.subr.bf16.mxu0 0
        %843 = vmatpush1.bf16.msra.mxu0 0
        %844 = vmatprep.subr.bf16.mxu0 0
        %845 = vmatpush1.bf16.msra.mxu0 0
        %846 = vmatprep.subr.bf16.mxu0 0
        %847 = vmatpush1.bf16.msra.mxu0 0
        %848 = vmatprep.subr.bf16.mxu0 0
        %849 = vmatpush1.bf16.msra.mxu0 0
        %850 = vmatprep.mubr.bf16.mxu0 0
        %851 = vmatmul.mubr.bf16.gmra.mrb[0].mxu0 %v813
        %v852 = vpop.f32.mrb[0].mxu0
        %v853 = vadd.f32 0.0, %v852
        %v854 = vpop.f32.mrb[0].mxu0
        %v855 = vpop.f32.mrb[0].mxu0
        %v856 = vpop.f32.mrb[0].mxu0
        %857 = vdwg.mxu0
        %v859 = vsel %vm396, %v374, 0
        %v862 = vsel %vm400, %v390, 0
        %864 = vmatprep.subr.bf16.mxu0 0
        %865 = vmatpush1.bf16.msra.mxu0 %v862
        %866 = vmatprep.subr.bf16.mxu0 0
        %867 = vmatpush1.bf16.msra.mxu0 0
        %868 = vmatprep.subr.bf16.mxu0 0
        %869 = vmatpush1.bf16.msra.mxu0 0
        %870 = vmatprep.subr.bf16.mxu0 0
        %871 = vmatpush1.bf16.msra.mxu0 0
        %872 = vmatprep.subr.bf16.mxu0 0
        %873 = vmatpush1.bf16.msra.mxu0 0
        %874 = vmatprep.subr.bf16.mxu0 0
        %875 = vmatpush1.bf16.msra.mxu0 0
        %876 = vmatprep.subr.bf16.mxu0 0
        %877 = vmatpush1.bf16.msra.mxu0 0
        %878 = vmatprep.subr.bf16.mxu0 0
        %879 = vmatpush1.bf16.msra.mxu0 0
        %880 = vmatprep.subr.bf16.mxu0 0
        %881 = vmatpush1.bf16.msra.mxu0 0
        %882 = vmatprep.subr.bf16.mxu0 0
        %883 = vmatpush1.bf16.msra.mxu0 0
        %884 = vmatprep.subr.bf16.mxu0 0
        %885 = vmatpush1.bf16.msra.mxu0 0
        %886 = vmatprep.subr.bf16.mxu0 0
        %887 = vmatpush1.bf16.msra.mxu0 0
        %888 = vmatprep.subr.bf16.mxu0 0
        %889 = vmatpush1.bf16.msra.mxu0 0
        %890 = vmatprep.subr.bf16.mxu0 0
        %891 = vmatpush1.bf16.msra.mxu0 0
        %892 = vmatprep.subr.bf16.mxu0 0
        %893 = vmatpush1.bf16.msra.mxu0 0
        %894 = vmatprep.subr.bf16.mxu0 0
        %895 = vmatpush1.bf16.msra.mxu0 0
        %896 = vmatprep.mubr.bf16.mxu0 0
        %897 = vmatmul.mubr.bf16.gmra.mrb[0].mxu0 %v859
        %v898 = vpop.f32.mrb[0].mxu0
        %v899 = vadd.f32 0.0, %v898
        %v900 = vpop.f32.mrb[0].mxu0
        %v901 = vpop.f32.mrb[0].mxu0
        %v902 = vpop.f32.mrb[0].mxu0
        %903 = vdwg.mxu0
        %v905 = vsel %vm396, %v375, 0
        %v908 = vsel %vm400, %v391, 0
        %910 = vmatprep.subr.bf16.mxu0 0
        %911 = vmatpush1.bf16.msra.mxu0 %v908
        %912 = vmatprep.subr.bf16.mxu0 0
        %913 = vmatpush1.bf16.msra.mxu0 0
        %914 = vmatprep.subr.bf16.mxu0 0
        %915 = vmatpush1.bf16.msra.mxu0 0
        %916 = vmatprep.subr.bf16.mxu0 0
        %917 = vmatpush1.bf16.msra.mxu0 0
        %918 = vmatprep.subr.bf16.mxu0 0
        %919 = vmatpush1.bf16.msra.mxu0 0
        %920 = vmatprep.subr.bf16.mxu0 0
        %921 = vmatpush1.bf16.msra.mxu0 0
        %922 = vmatprep.subr.bf16.mxu0 0
        %923 = vmatpush1.bf16.msra.mxu0 0
        %924 = vmatprep.subr.bf16.mxu0 0
        %925 = vmatpush1.bf16.msra.mxu0 0
        %926 = vmatprep.subr.bf16.mxu0 0
        %927 = vmatpush1.bf16.msra.mxu0 0
        %928 = vmatprep.subr.bf16.mxu0 0
        %929 = vmatpush1.bf16.msra.mxu0 0
        %930 = vmatprep.subr.bf16.mxu0 0
        %931 = vmatpush1.bf16.msra.mxu0 0
        %932 = vmatprep.subr.bf16.mxu0 0
        %933 = vmatpush1.bf16.msra.mxu0 0
        %934 = vmatprep.subr.bf16.mxu0 0
        %935 = vmatpush1.bf16.msra.mxu0 0
        %936 = vmatprep.subr.bf16.mxu0 0
        %937 = vmatpush1.bf16.msra.mxu0 0
        %938 = vmatprep.subr.bf16.mxu0 0
        %939 = vmatpush1.bf16.msra.mxu0 0
        %940 = vmatprep.subr.bf16.mxu0 0
        %941 = vmatpush1.bf16.msra.mxu0 0
        %942 = vmatprep.mubr.bf16.mxu0 0
        %943 = vmatmul.mubr.bf16.gmra.mrb[0].mxu0 %v905
        %v944 = vpop.f32.mrb[0].mxu0
        %v945 = vadd.f32 0.0, %v944
        %v946 = vpop.f32.mrb[0].mxu0
        %v947 = vpop.f32.mrb[0].mxu0
        %v948 = vpop.f32.mrb[0].mxu0
        %949 = vdwg.mxu0
        %v951 = vsel %vm396, %v376, 0
        %v954 = vsel %vm400, %v392, 0
        %956 = vmatprep.subr.bf16.mxu0 0
        %957 = vmatpush1.bf16.msra.mxu0 %v954
        %958 = vmatprep.subr.bf16.mxu0 0
        %959 = vmatpush1.bf16.msra.mxu0 0
        %960 = vmatprep.subr.bf16.mxu0 0
        %961 = vmatpush1.bf16.msra.mxu0 0
        %962 = vmatprep.subr.bf16.mxu0 0
        %963 = vmatpush1.bf16.msra.mxu0 0
        %964 = vmatprep.subr.bf16.mxu0 0
        %965 = vmatpush1.bf16.msra.mxu0 0
        %966 = vmatprep.subr.bf16.mxu0 0
        %967 = vmatpush1.bf16.msra.mxu0 0
        %968 = vmatprep.subr.bf16.mxu0 0
        %969 = vmatpush1.bf16.msra.mxu0 0
        %970 = vmatprep.subr.bf16.mxu0 0
        %971 = vmatpush1.bf16.msra.mxu0 0
        %972 = vmatprep.subr.bf16.mxu0 0
        %973 = vmatpush1.bf16.msra.mxu0 0
        %974 = vmatprep.subr.bf16.mxu0 0
        %975 = vmatpush1.bf16.msra.mxu0 0
        %976 = vmatprep.subr.bf16.mxu0 0
        %977 = vmatpush1.bf16.msra.mxu0 0
        %978 = vmatprep.subr.bf16.mxu0 0
        %979 = vmatpush1.bf16.msra.mxu0 0
        %980 = vmatprep.subr.bf16.mxu0 0
        %981 = vmatpush1.bf16.msra.mxu0 0
        %982 = vmatprep.subr.bf16.mxu0 0
        %983 = vmatpush1.bf16.msra.mxu0 0
        %984 = vmatprep.subr.bf16.mxu0 0
        %985 = vmatpush1.bf16.msra.mxu0 0
        %986 = vmatprep.subr.bf16.mxu0 0
        %987 = vmatpush1.bf16.msra.mxu0 0
        %988 = vmatprep.mubr.bf16.mxu0 0
        %989 = vmatmul.mubr.bf16.gmra.mrb[0].mxu0 %v951
        %v990 = vpop.f32.mrb[0].mxu0
        %v991 = vadd.f32 0.0, %v990
        %v992 = vpop.f32.mrb[0].mxu0
        %v993 = vpop.f32.mrb[0].mxu0
        %v994 = vpop.f32.mrb[0].mxu0
        %995 = vdwg.mxu0
        %v997 = vsel %vm396, %v377, 0
        %v1000 = vsel %vm400, %v393, 0
        %1002 = vmatprep.subr.bf16.mxu0 0
        %1003 = vmatpush1.bf16.msra.mxu0 %v1000
        %1004 = vmatprep.subr.bf16.mxu0 0
        %1005 = vmatpush1.bf16.msra.mxu0 0
        %1006 = vmatprep.subr.bf16.mxu0 0
        %1007 = vmatpush1.bf16.msra.mxu0 0
        %1008 = vmatprep.subr.bf16.mxu0 0
        %1009 = vmatpush1.bf16.msra.mxu0 0
        %1010 = vmatprep.subr.bf16.mxu0 0
        %1011 = vmatpush1.bf16.msra.mxu0 0
        %1012 = vmatprep.subr.bf16.mxu0 0
        %1013 = vmatpush1.bf16.msra.mxu0 0
        %1014 = vmatprep.subr.bf16.mxu0 0
        %1015 = vmatpush1.bf16.msra.mxu0 0
        %1016 = vmatprep.subr.bf16.mxu0 0
        %1017 = vmatpush1.bf16.msra.mxu0 0
        %1018 = vmatprep.subr.bf16.mxu0 0
        %1019 = vmatpush1.bf16.msra.mxu0 0
        %1020 = vmatprep.subr.bf16.mxu0 0
        %1021 = vmatpush1.bf16.msra.mxu0 0
        %1022 = vmatprep.subr.bf16.mxu0 0
        %1023 = vmatpush1.bf16.msra.mxu0 0
        %1024 = vmatprep.subr.bf16.mxu0 0
        %1025 = vmatpush1.bf16.msra.mxu0 0
        %1026 = vmatprep.subr.bf16.mxu0 0
        %1027 = vmatpush1.bf16.msra.mxu0 0
        %1028 = vmatprep.subr.bf16.mxu0 0
        %1029 = vmatpush1.bf16.msra.mxu0 0
        %1030 = vmatprep.subr.bf16.mxu0 0
        %1031 = vmatpush1.bf16.msra.mxu0 0
        %1032 = vmatprep.subr.bf16.mxu0 0
        %1033 = vmatpush1.bf16.msra.mxu0 0
        %1034 = vmatprep.mubr.bf16.mxu0 0
        %1035 = vmatmul.mubr.bf16.gmra.mrb[0].mxu0 %v997
        %v1036 = vpop.f32.mrb[0].mxu0
        %v1037 = vadd.f32 0.0, %v1036
        %v1038 = vpop.f32.mrb[0].mxu0
        %v1039 = vpop.f32.mrb[0].mxu0
        %v1040 = vpop.f32.mrb[0].mxu0
        %1041 = vdwg.mxu0
        %v1043 = vsel %vm396, %v378, 0
        %v1046 = vsel %vm400, %v394, 0
        %1048 = vmatprep.subr.bf16.mxu0 0
        %1049 = vmatpush1.bf16.msra.mxu0 %v1046
        %1050 = vmatprep.subr.bf16.mxu0 0
        %1051 = vmatpush1.bf16.msra.mxu0 0
        %1052 = vmatprep.subr.bf16.mxu0 0
        %1053 = vmatpush1.bf16.msra.mxu0 0
        %1054 = vmatprep.subr.bf16.mxu0 0
        %1055 = vmatpush1.bf16.msra.mxu0 0
        %1056 = vmatprep.subr.bf16.mxu0 0
        %1057 = vmatpush1.bf16.msra.mxu0 0
        %1058 = vmatprep.subr.bf16.mxu0 0
        %1059 = vmatpush1.bf16.msra.mxu0 0
        %1060 = vmatprep.subr.bf16.mxu0 0
        %1061 = vmatpush1.bf16.msra.mxu0 0
        %1062 = vmatprep.subr.bf16.mxu0 0
        %1063 = vmatpush1.bf16.msra.mxu0 0
        %1064 = vmatprep.subr.bf16.mxu0 0
        %1065 = vmatpush1.bf16.msra.mxu0 0
        %1066 = vmatprep.subr.bf16.mxu0 0
        %1067 = vmatpush1.bf16.msra.mxu0 0
        %1068 = vmatprep.subr.bf16.mxu0 0
        %1069 = vmatpush1.bf16.msra.mxu0 0
        %1070 = vmatprep.subr.bf16.mxu0 0
        %1071 = vmatpush1.bf16.msra.mxu0 0
        %1072 = vmatprep.subr.bf16.mxu0 0
        %1073 = vmatpush1.bf16.msra.mxu0 0
        %1074 = vmatprep.subr.bf16.mxu0 0
        %1075 = vmatpush1.bf16.msra.mxu0 0
        %1076 = vmatprep.subr.bf16.mxu0 0
        %1077 = vmatpush1.bf16.msra.mxu0 0
        %1078 = vmatprep.subr.bf16.mxu0 0
        %1079 = vmatpush1.bf16.msra.mxu0 0
        %1080 = vmatprep.mubr.bf16.mxu0 0
        %1081 = vmatmul.mubr.bf16.gmra.mrb[0].mxu0 %v1043
        %v1082 = vpop.f32.mrb[0].mxu0
        %v1083 = vadd.f32 0.0, %v1082
        %v1084 = vpop.f32.mrb[0].mxu0
        %v1085 = vpop.f32.mrb[0].mxu0
        %v1086 = vpop.f32.mrb[0].mxu0
        %1087 = vdwg.mxu0
        %v1089 = vsel %vm396, %v379, 0
        %v1092 = vsel %vm400, %v395, 0
        %1094 = vmatprep.subr.bf16.mxu0 0
        %1095 = vmatpush1.bf16.msra.mxu0 %v1092
        %1096 = vmatprep.subr.bf16.mxu0 0
        %1097 = vmatpush1.bf16.msra.mxu0 0
        %1098 = vmatprep.subr.bf16.mxu0 0
        %1099 = vmatpush1.bf16.msra.mxu0 0
        %1100 = vmatprep.subr.bf16.mxu0 0
        %1101 = vmatpush1.bf16.msra.mxu0 0
        %1102 = vmatprep.subr.bf16.mxu0 0
        %1103 = vmatpush1.bf16.msra.mxu0 0
        %1104 = vmatprep.subr.bf16.mxu0 0
        %1105 = vmatpush1.bf16.msra.mxu0 0
        %1106 = vmatprep.subr.bf16.mxu0 0
        %1107 = vmatpush1.bf16.msra.mxu0 0
        %1108 = vmatprep.subr.bf16.mxu0 0
        %1109 = vmatpush1.bf16.msra.mxu0 0
        %1110 = vmatprep.subr.bf16.mxu0 0
        %1111 = vmatpush1.bf16.msra.mxu0 0
        %1112 = vmatprep.subr.bf16.mxu0 0
        %1113 = vmatpush1.bf16.msra.mxu0 0
        %1114 = vmatprep.subr.bf16.mxu0 0
        %1115 = vmatpush1.bf16.msra.mxu0 0
        %1116 = vmatprep.subr.bf16.mxu0 0
        %1117 = vmatpush1.bf16.msra.mxu0 0
        %1118 = vmatprep.subr.bf16.mxu0 0
        %1119 = vmatpush1.bf16.msra.mxu0 0
        %1120 = vmatprep.subr.bf16.mxu0 0
        %1121 = vmatpush1.bf16.msra.mxu0 0
        %1122 = vmatprep.subr.bf16.mxu0 0
        %1123 = vmatpush1.bf16.msra.mxu0 0
        %1124 = vmatprep.subr.bf16.mxu0 0
        %1125 = vmatpush1.bf16.msra.mxu0 0
        %1126 = vmatprep.mubr.bf16.mxu0 0
        %1127 = vmatmul.mubr.bf16.gmra.mrb[0].mxu0 %v1089
        %v1128 = vpop.f32.mrb[0].mxu0
        %v1129 = vadd.f32 0.0, %v1128
        %v1130 = vpop.f32.mrb[0].mxu0
        %v1131 = vpop.f32.mrb[0].mxu0
        %v1132 = vpop.f32.mrb[0].mxu0
        %1133 = vdwg.mxu0
        %v1134 = vadd.f32 %v330, %v439
        %v1135 = vadd.f32 %v331, %v485
        %v1136 = vadd.f32 %v332, %v531
        %v1137 = vadd.f32 %v333, %v577
        %v1138 = vadd.f32 %v334, %v623
        %v1139 = vadd.f32 %v335, %v669
        %v1140 = vadd.f32 %v336, %v715
        %v1141 = vadd.f32 %v337, %v761
        %v1142 = vadd.f32 %v338, %v807
        %v1143 = vadd.f32 %v339, %v853
        %v1144 = vadd.f32 %v340, %v899
        %v1145 = vadd.f32 %v341, %v945
        %v1146 = vadd.f32 %v342, %v991
        %v1147 = vadd.f32 %v343, %v1037
        %v1148 = vadd.f32 %v344, %v1083
        %v1149 = vadd.f32 %v345, %v1129
        %v1150 = vpack.c.bf16 %v1135, %v1134
        %v1151 = vpack.c.bf16 %v1137, %v1136
        %v1152 = vpack.c.bf16 %v1139, %v1138
        %v1153 = vpack.c.bf16 %v1141, %v1140
        %v1154 = vpack.c.bf16 %v1143, %v1142
        %v1155 = vpack.c.bf16 %v1145, %v1144
        %v1156 = vpack.c.bf16 %v1147, %v1146
        %v1157 = vpack.c.bf16 %v1149, %v1148
        %v1158 = vld [vmem:[#allocation2] sm:$0xf]
        %v1159 = vld [vmem:[#allocation2 + $0x4] sm:$0xf]
        %v1160 = vld [vmem:[#allocation2 + $0x8] sm:$0xf]
        %v1161 = vld [vmem:[#allocation2 + $0xc] sm:$0xf]
        %v1162 = vlaneseq
        %v1163 = vshrl.u32 %v1162, 7
        %v1164 = vsub.s32 0, %v1163
        %v1165 = vrot.slane %v362, %v1164
        %v1170 = vunpack.c.l.b16 %v1158
        %v1171 = vunpack.c.l.b16 %v1159
        %v1172 = vunpack.c.l.b16 %v1160
        %v1173 = vunpack.c.l.b16 %v1161
        %v1174 = vpack.c.b16 %v1171, %v1170
        %v1175 = vpack.c.b16 %v1173, %v1172
        %vm1178 = vcmask 261120
        %v1180 = vsel %vm1178, %v1150, 0
        %v1183 = vsel %vm1178, %v1151, 0
        %v1186 = vsel %vm1178, %v1152, 0
        %v1189 = vsel %vm1178, %v1153, 0
        %v1192 = vsel %vm1178, %v1154, 0
        %v1195 = vsel %vm1178, %v1155, 0
        %v1198 = vsel %vm1178, %v1156, 0
        %v1201 = vsel %vm1178, %v1157, 0
        %1203 = vmatprep.subr.bf16.mxu0 0
        %1204 = vmatpush1.bf16.msra.mxu0 %v1174
        %1205 = vmatprep.subr.bf16.mxu0 0
        %1206 = vmatpush1.bf16.msra.mxu0 %v1175
        %1207 = vmatprep.subr.bf16.mxu0 0
        %1208 = vmatpush1.bf16.msra.mxu0 0
        %1209 = vmatprep.subr.bf16.mxu0 0
        %1210 = vmatpush1.bf16.msra.mxu0 0
        %1211 = vmatprep.subr.bf16.mxu0 0
        %1212 = vmatpush1.bf16.msra.mxu0 0
        %1213 = vmatprep.subr.bf16.mxu0 0
        %1214 = vmatpush1.bf16.msra.mxu0 0
        %1215 = vmatprep.subr.bf16.mxu0 0
        %1216 = vmatpush1.bf16.msra.mxu0 0
        %1217 = vmatprep.subr.bf16.mxu0 0
        %1218 = vmatpush1.bf16.msra.mxu0 0
        %1219 = vmatprep.subr.bf16.mxu0 0
        %1220 = vmatpush1.bf16.msra.mxu0 0
        %1221 = vmatprep.subr.bf16.mxu0 0
        %1222 = vmatpush1.bf16.msra.mxu0 0
        %1223 = vmatprep.subr.bf16.mxu0 0
        %1224 = vmatpush1.bf16.msra.mxu0 0
        %1225 = vmatprep.subr.bf16.mxu0 0
        %1226 = vmatpush1.bf16.msra.mxu0 0
        %1227 = vmatprep.subr.bf16.mxu0 0
        %1228 = vmatpush1.bf16.msra.mxu0 0
        %1229 = vmatprep.subr.bf16.mxu0 0
        %1230 = vmatpush1.bf16.msra.mxu0 0
        %1231 = vmatprep.subr.bf16.mxu0 0
        %1232 = vmatpush1.bf16.msra.mxu0 0
        %1233 = vmatprep.subr.bf16.mxu0 0
        %1234 = vmatpush1.bf16.msra.mxu0 0
        %1235 = vmatprep.mubr.bf16.mxu0 0
        %1236 = vmatmul.mubr.bf16.gmra.mrb[0].mxu0 %v1180
        %v1237 = vpop.f32.mrb[0].mxu0
        %v1238 = vadd.f32 %v1165, %v1237
        %v1239 = vpop.f32.mrb[0].mxu0
        %v1240 = vpop.f32.mrb[0].mxu0
        %v1241 = vadd.f32 %v1165, %v1240
        %v1242 = vpop.f32.mrb[0].mxu0
        %1243 = vmatprep.mubr.bf16.mxu0 0
        %1244 = vmatmul.mubr.bf16.gmra.mrb[0].mxu0 %v1183
        %v1245 = vpop.f32.mrb[0].mxu0
        %v1246 = vadd.f32 %v1165, %v1245
        %v1247 = vpop.f32.mrb[0].mxu0
        %v1248 = vpop.f32.mrb[0].mxu0
        %v1249 = vadd.f32 %v1165, %v1248
        %v1250 = vpop.f32.mrb[0].mxu0
        %1251 = vmatprep.mubr.bf16.mxu0 0
        %1252 = vmatmul.mubr.bf16.gmra.mrb[0].mxu0 %v1186
        %v1253 = vpop.f32.mrb[0].mxu0
        %v1254 = vadd.f32 %v1165, %v1253
        %v1255 = vpop.f32.mrb[0].mxu0
        %v1256 = vpop.f32.mrb[0].mxu0
        %v1257 = vadd.f32 %v1165, %v1256
        %v1258 = vpop.f32.mrb[0].mxu0
        %1259 = vmatprep.mubr.bf16.mxu0 0
        %1260 = vmatmul.mubr.bf16.gmra.mrb[0].mxu0 %v1189
        %v1261 = vpop.f32.mrb[0].mxu0
        %v1262 = vadd.f32 %v1165, %v1261
        %v1263 = vpop.f32.mrb[0].mxu0
        %v1264 = vpop.f32.mrb[0].mxu0
        %v1265 = vadd.f32 %v1165, %v1264
        %v1266 = vpop.f32.mrb[0].mxu0
        %1267 = vmatprep.mubr.bf16.mxu0 0
        %1268 = vmatmul.mubr.bf16.gmra.mrb[0].mxu0 %v1192
        %v1269 = vpop.f32.mrb[0].mxu0
        %v1270 = vadd.f32 %v1165, %v1269
        %v1271 = vpop.f32.mrb[0].mxu0
        %v1272 = vpop.f32.mrb[0].mxu0
        %v1273 = vadd.f32 %v1165, %v1272
        %v1274 = vpop.f32.mrb[0].mxu0
        %1275 = vmatprep.mubr.bf16.mxu0 0
        %1276 = vmatmul.mubr.bf16.gmra.mrb[0].mxu0 %v1195
        %v1277 = vpop.f32.mrb[0].mxu0
        %v1278 = vadd.f32 %v1165, %v1277
        %v1279 = vpop.f32.mrb[0].mxu0
        %v1280 = vpop.f32.mrb[0].mxu0
        %v1281 = vadd.f32 %v1165, %v1280
        %v1282 = vpop.f32.mrb[0].mxu0
        %1283 = vmatprep.mubr.bf16.mxu0 0
        %1284 = vmatmul.mubr.bf16.gmra.mrb[0].mxu0 %v1198
        %v1285 = vpop.f32.mrb[0].mxu0
        %v1286 = vadd.f32 %v1165, %v1285
        %v1287 = vpop.f32.mrb[0].mxu0
        %v1288 = vpop.f32.mrb[0].mxu0
        %v1289 = vadd.f32 %v1165, %v1288
        %v1290 = vpop.f32.mrb[0].mxu0
        %1291 = vmatprep.mubr.bf16.mxu0 0
        %1292 = vmatmul.mubr.bf16.gmra.mrb[0].mxu0 %v1201
        %v1293 = vpop.f32.mrb[0].mxu0
        %v1294 = vadd.f32 %v1165, %v1293
        %v1295 = vpop.f32.mrb[0].mxu0
        %v1296 = vpop.f32.mrb[0].mxu0
        %v1297 = vadd.f32 %v1165, %v1296
        %v1298 = vpop.f32.mrb[0].mxu0
        %1299 = vdwg.mxu0
        %v1300 = vsel %vm1178, %v1238, 0.0
        %1301 = vadd.xlane.f32.xlu0 %v1300
        %v1302 = vpop.xlane.xlu0 %1301
        %v1303 = vsel %vm1178, %v1241, 0.0
        %1304 = vadd.xlane.f32.xlu0 %v1303
        %v1305 = vpop.xlane.xlu0 %1304
        %v1306 = vsel %vm1178, %v1246, 0.0
        %1307 = vadd.xlane.f32.xlu0 %v1306
        %v1308 = vpop.xlane.xlu0 %1307
        %v1309 = vsel %vm1178, %v1249, 0.0
        %1310 = vadd.xlane.f32.xlu0 %v1309
        %v1311 = vpop.xlane.xlu0 %1310
        %v1312 = vsel %vm1178, %v1254, 0.0
        %1313 = vadd.xlane.f32.xlu0 %v1312
        %v1314 = vpop.xlane.xlu0 %1313
        %v1315 = vsel %vm1178, %v1257, 0.0
        %1316 = vadd.xlane.f32.xlu0 %v1315
        %v1317 = vpop.xlane.xlu0 %1316
        %v1318 = vsel %vm1178, %v1262, 0.0
        %1319 = vadd.xlane.f32.xlu0 %v1318
        %v1320 = vpop.xlane.xlu0 %1319
        %v1321 = vsel %vm1178, %v1265, 0.0
        %1322 = vadd.xlane.f32.xlu0 %v1321
        %v1323 = vpop.xlane.xlu0 %1322
        %v1324 = vsel %vm1178, %v1270, 0.0
        %1325 = vadd.xlane.f32.xlu0 %v1324
        %v1326 = vpop.xlane.xlu0 %1325
        %v1327 = vsel %vm1178, %v1273, 0.0
        %1328 = vadd.xlane.f32.xlu0 %v1327
        %v1329 = vpop.xlane.xlu0 %1328
        %v1330 = vsel %vm1178, %v1278, 0.0
        %1331 = vadd.xlane.f32.xlu0 %v1330
        %v1332 = vpop.xlane.xlu0 %1331
        %v1333 = vsel %vm1178, %v1281, 0.0
        %1334 = vadd.xlane.f32.xlu0 %v1333
        %v1335 = vpop.xlane.xlu0 %1334
        %v1336 = vsel %vm1178, %v1286, 0.0
        %1337 = vadd.xlane.f32.xlu0 %v1336
        %v1338 = vpop.xlane.xlu0 %1337
        %v1339 = vsel %vm1178, %v1289, 0.0
        %1340 = vadd.xlane.f32.xlu0 %v1339
        %v1341 = vpop.xlane.xlu0 %1340
        %v1342 = vsel %vm1178, %v1294, 0.0
        %1343 = vadd.xlane.f32.xlu0 %v1342
        %v1344 = vpop.xlane.xlu0 %1343
        %v1345 = vsel %vm1178, %v1297, 0.0
        %1346 = vadd.xlane.f32.xlu0 %v1345
        %v1347 = vpop.xlane.xlu0 %1346
        %v1348 = vrcp.pop 32.0
        %v1349 = vmul.f32 %v1302, %v1348
        %v1350 = vmul.f32 %v1305, %v1348
        %v1351 = vmul.f32 %v1308, %v1348
        %v1352 = vmul.f32 %v1311, %v1348
        %v1353 = vmul.f32 %v1314, %v1348
        %v1354 = vmul.f32 %v1317, %v1348
        %v1355 = vmul.f32 %v1320, %v1348
        %v1356 = vmul.f32 %v1323, %v1348
        %v1357 = vmul.f32 %v1326, %v1348
        %v1358 = vmul.f32 %v1329, %v1348
        %v1359 = vmul.f32 %v1332, %v1348
        %v1360 = vmul.f32 %v1335, %v1348
        %v1361 = vmul.f32 %v1338, %v1348
        %v1362 = vmul.f32 %v1341, %v1348
        %v1363 = vmul.f32 %v1344, %v1348
        %v1364 = vmul.f32 %v1347, %v1348
        %v1365 = vsub.f32 %v1238, %v1349
        %v1366 = vsub.f32 %v1241, %v1350
        %v1367 = vsub.f32 %v1246, %v1351
        %v1368 = vsub.f32 %v1249, %v1352
        %v1369 = vsub.f32 %v1254, %v1353
        %v1370 = vsub.f32 %v1257, %v1354
        %v1371 = vsub.f32 %v1262, %v1355
        %v1372 = vsub.f32 %v1265, %v1356
        %v1373 = vsub.f32 %v1270, %v1357
        %v1374 = vsub.f32 %v1273, %v1358
        %v1375 = vsub.f32 %v1278, %v1359
        %v1376 = vsub.f32 %v1281, %v1360
        %v1377 = vsub.f32 %v1286, %v1361
        %v1378 = vsub.f32 %v1289, %v1362
        %v1379 = vsub.f32 %v1294, %v1363
        %v1380 = vsub.f32 %v1297, %v1364
        %v1381 = vmul.f32 %v1365, %v1365
        %v1382 = vmul.f32 %v1366, %v1366
        %v1383 = vmul.f32 %v1367, %v1367
        %v1384 = vmul.f32 %v1368, %v1368
        %v1385 = vmul.f32 %v1369, %v1369
        %v1386 = vmul.f32 %v1370, %v1370
        %v1387 = vmul.f32 %v1371, %v1371
        %v1388 = vmul.f32 %v1372, %v1372
        %v1389 = vmul.f32 %v1373, %v1373
        %v1390 = vmul.f32 %v1374, %v1374
        %v1391 = vmul.f32 %v1375, %v1375
        %v1392 = vmul.f32 %v1376, %v1376
        %v1393 = vmul.f32 %v1377, %v1377
        %v1394 = vmul.f32 %v1378, %v1378
        %v1395 = vmul.f32 %v1379, %v1379
        %v1396 = vmul.f32 %v1380, %v1380
        %v1397 = vsel %vm1178, %v1381, 0.0
        %1398 = vadd.xlane.f32.xlu0 %v1397
        %v1399 = vpop.xlane.xlu0 %1398
        %v1400 = vsel %vm1178, %v1382, 0.0
        %1401 = vadd.xlane.f32.xlu0 %v1400
        %v1402 = vpop.xlane.xlu0 %1401
        %v1403 = vsel %vm1178, %v1383, 0.0
        %1404 = vadd.xlane.f32.xlu0 %v1403
        %v1405 = vpop.xlane.xlu0 %1404
        %v1406 = vsel %vm1178, %v1384, 0.0
        %1407 = vadd.xlane.f32.xlu0 %v1406
        %v1408 = vpop.xlane.xlu0 %1407
        %v1409 = vsel %vm1178, %v1385, 0.0
        %1410 = vadd.xlane.f32.xlu0 %v1409
        %v1411 = vpop.xlane.xlu0 %1410
        %v1412 = vsel %vm1178, %v1386, 0.0
        %1413 = vadd.xlane.f32.xlu0 %v1412
        %v1414 = vpop.xlane.xlu0 %1413
        %v1415 = vsel %vm1178, %v1387, 0.0
        %1416 = vadd.xlane.f32.xlu0 %v1415
        %v1417 = vpop.xlane.xlu0 %1416
        %v1418 = vsel %vm1178, %v1388, 0.0
        %1419 = vadd.xlane.f32.xlu0 %v1418
        %v1420 = vpop.xlane.xlu0 %1419
        %v1421 = vsel %vm1178, %v1389, 0.0
        %1422 = vadd.xlane.f32.xlu0 %v1421
        %v1423 = vpop.xlane.xlu0 %1422
        %v1424 = vsel %vm1178, %v1390, 0.0
        %1425 = vadd.xlane.f32.xlu0 %v1424
        %v1426 = vpop.xlane.xlu0 %1425
        %v1427 = vsel %vm1178, %v1391, 0.0
        %1428 = vadd.xlane.f32.xlu0 %v1427
        %v1429 = vpop.xlane.xlu0 %1428
        %v1430 = vsel %vm1178, %v1392, 0.0
        %1431 = vadd.xlane.f32.xlu0 %v1430
        %v1432 = vpop.xlane.xlu0 %1431
        %v1433 = vsel %vm1178, %v1393, 0.0
        %1434 = vadd.xlane.f32.xlu0 %v1433
        %v1435 = vpop.xlane.xlu0 %1434
        %v1436 = vsel %vm1178, %v1394, 0.0
        %1437 = vadd.xlane.f32.xlu0 %v1436
        %v1438 = vpop.xlane.xlu0 %1437
        %v1439 = vsel %vm1178, %v1395, 0.0
        %1440 = vadd.xlane.f32.xlu0 %v1439
        %v1441 = vpop.xlane.xlu0 %1440
        %v1442 = vsel %vm1178, %v1396, 0.0
        %1443 = vadd.xlane.f32.xlu0 %v1442
        %v1444 = vpop.xlane.xlu0 %1443
        %v1445 = vmul.f32 %v1399, %v1348
        %v1446 = vmul.f32 %v1402, %v1348
        %v1447 = vmul.f32 %v1405, %v1348
        %v1448 = vmul.f32 %v1408, %v1348
        %v1449 = vmul.f32 %v1411, %v1348
        %v1450 = vmul.f32 %v1414, %v1348
        %v1451 = vmul.f32 %v1417, %v1348
        %v1452 = vmul.f32 %v1420, %v1348
        %v1453 = vmul.f32 %v1423, %v1348
        %v1454 = vmul.f32 %v1426, %v1348
        %v1455 = vmul.f32 %v1429, %v1348
        %v1456 = vmul.f32 %v1432, %v1348
        %v1457 = vmul.f32 %v1435, %v1348
        %v1458 = vmul.f32 %v1438, %v1348
        %v1459 = vmul.f32 %v1441, %v1348
        %v1460 = vmul.f32 %v1444, %v1348
        %v1461 = vadd.f32 %v1445, 1e-05
        %v1462 = vadd.f32 %v1446, 1e-05
        %v1463 = vadd.f32 %v1447, 1e-05
        %v1464 = vadd.f32 %v1448, 1e-05
        %v1465 = vadd.f32 %v1449, 1e-05
        %v1466 = vadd.f32 %v1450, 1e-05
        %v1467 = vadd.f32 %v1451, 1e-05
        %v1468 = vadd.f32 %v1452, 1e-05
        %v1469 = vadd.f32 %v1453, 1e-05
        %v1470 = vadd.f32 %v1454, 1e-05
        %v1471 = vadd.f32 %v1455, 1e-05
        %v1472 = vadd.f32 %v1456, 1e-05
        %v1473 = vadd.f32 %v1457, 1e-05
        %v1474 = vadd.f32 %v1458, 1e-05
        %v1475 = vadd.f32 %v1459, 1e-05
        %v1476 = vadd.f32 %v1460, 1e-05
        %v1477 = vrsqrt.pop %v1461
        %v1478 = vrsqrt.pop %v1462
        %v1479 = vrsqrt.pop %v1463
        %v1480 = vrsqrt.pop %v1464
        %v1481 = vrsqrt.pop %v1465
        %v1482 = vrsqrt.pop %v1466
        %v1483 = vrsqrt.pop %v1467
        %v1484 = vrsqrt.pop %v1468
        %v1485 = vrsqrt.pop %v1469
        %v1486 = vrsqrt.pop %v1470
        %v1487 = vrsqrt.pop %v1471
        %v1488 = vrsqrt.pop %v1472
        %v1489 = vrsqrt.pop %v1473
        %v1490 = vrsqrt.pop %v1474
        %v1491 = vrsqrt.pop %v1475
        %v1492 = vrsqrt.pop %v1476
        %v1493 = vmul.f32 %v1365, %v1477
        %v1494 = vmul.f32 %v1366, %v1478
        %v1495 = vmul.f32 %v1367, %v1479
        %v1496 = vmul.f32 %v1368, %v1480
        %v1497 = vmul.f32 %v1369, %v1481
        %v1498 = vmul.f32 %v1370, %v1482
        %v1499 = vmul.f32 %v1371, %v1483
        %v1500 = vmul.f32 %v1372, %v1484
        %v1501 = vmul.f32 %v1373, %v1485
        %v1502 = vmul.f32 %v1374, %v1486
        %v1503 = vmul.f32 %v1375, %v1487
        %v1504 = vmul.f32 %v1376, %v1488
        %v1505 = vmul.f32 %v1377, %v1489
        %v1506 = vmul.f32 %v1378, %v1490
        %v1507 = vmul.f32 %v1379, %v1491
        %v1508 = vmul.f32 %v1380, %v1492
        %v1509 = vlaneseq
        %v1510 = vshrl.u32 %v1509, 7
        %v1511 = vsub.s32 1, %v1510
        %v1512 = vrot.slane %v362, %v1511
        %v1513 = vmul.f32 %v1493, %v1512
        %v1514 = vmul.f32 %v1494, %v1512
        %v1515 = vmul.f32 %v1495, %v1512
        %v1516 = vmul.f32 %v1496, %v1512
        %v1517 = vmul.f32 %v1497, %v1512
        %v1518 = vmul.f32 %v1498, %v1512
        %v1519 = vmul.f32 %v1499, %v1512
        %v1520 = vmul.f32 %v1500, %v1512
        %v1521 = vmul.f32 %v1501, %v1512
        %v1522 = vmul.f32 %v1502, %v1512
        %v1523 = vmul.f32 %v1503, %v1512
        %v1524 = vmul.f32 %v1504, %v1512
        %v1525 = vmul.f32 %v1505, %v1512
        %v1526 = vmul.f32 %v1506, %v1512
        %v1527 = vmul.f32 %v1507, %v1512
        %v1528 = vmul.f32 %v1508, %v1512
        %v1529 = vlaneseq
        %v1530 = vshrl.u32 %v1529, 7
        %v1531 = vsub.s32 2, %v1530
        %v1532 = vrot.slane %v362, %v1531
        %v1533 = vadd.f32 %v1513, %v1532
        %v1534 = vadd.f32 %v1514, %v1532
        %v1535 = vadd.f32 %v1515, %v1532
        %v1536 = vadd.f32 %v1516, %v1532
        %v1537 = vadd.f32 %v1517, %v1532
        %v1538 = vadd.f32 %v1518, %v1532
        %v1539 = vadd.f32 %v1519, %v1532
        %v1540 = vadd.f32 %v1520, %v1532
        %v1541 = vadd.f32 %v1521, %v1532
        %v1542 = vadd.f32 %v1522, %v1532
        %v1543 = vadd.f32 %v1523, %v1532
        %v1544 = vadd.f32 %v1524, %v1532
        %v1545 = vadd.f32 %v1525, %v1532
        %v1546 = vadd.f32 %v1526, %v1532
        %v1547 = vadd.f32 %v1527, %v1532
        %v1548 = vadd.f32 %v1528, %v1532
        %v1549 = vmax.f32 %v1533, 0.0
        %v1550 = vmax.f32 %v1534, 0.0
        %v1551 = vmax.f32 %v1535, 0.0
        %v1552 = vmax.f32 %v1536, 0.0
        %v1553 = vmax.f32 %v1537, 0.0
        %v1554 = vmax.f32 %v1538, 0.0
        %v1555 = vmax.f32 %v1539, 0.0
        %v1556 = vmax.f32 %v1540, 0.0
        %v1557 = vmax.f32 %v1541, 0.0
        %v1558 = vmax.f32 %v1542, 0.0
        %v1559 = vmax.f32 %v1543, 0.0
        %v1560 = vmax.f32 %v1544, 0.0
        %v1561 = vmax.f32 %v1545, 0.0
        %v1562 = vmax.f32 %v1546, 0.0
        %v1563 = vmax.f32 %v1547, 0.0
        %v1564 = vmax.f32 %v1548, 0.0
        %v1565 = vpack.c.bf16 %v1550, %v1549
        %v1566 = vpack.c.bf16 %v1552, %v1551
        %v1567 = vpack.c.bf16 %v1554, %v1553
        %v1568 = vpack.c.bf16 %v1556, %v1555
        %v1569 = vpack.c.bf16 %v1558, %v1557
        %v1570 = vpack.c.bf16 %v1560, %v1559
        %v1571 = vpack.c.bf16 %v1562, %v1561
        %v1572 = vpack.c.bf16 %v1564, %v1563
        %s1573 = scalar_lea.vmem [#allocation2], 16
        %v1574 = vld [vmem:[%s1573] sm:$0xf]
        %v1575 = vld [vmem:[%s1573 + $0x4] sm:$0xf]
        %v1576 = vld [vmem:[%s1573 + $0x8] sm:$0xf]
        %v1577 = vld [vmem:[%s1573 + $0xc] sm:$0xf]
        %v1578 = vlaneseq
        %v1579 = vshrl.u32 %v1578, 7
        %v1580 = vsub.s32 3, %v1579
        %v1581 = vrot.slane %v362, %v1580
        %v1586 = vunpack.c.l.b16 %v1574
        %v1587 = vunpack.c.l.b16 %v1575
        %v1588 = vunpack.c.l.b16 %v1576
        %v1589 = vunpack.c.l.b16 %v1577
        %v1590 = vpack.c.b16 %v1587, %v1586
        %v1591 = vpack.c.b16 %v1589, %v1588
        %v1595 = vsel %vm1178, %v1565, 0
        %v1598 = vsel %vm1178, %v1566, 0
        %v1601 = vsel %vm1178, %v1567, 0
        %v1604 = vsel %vm1178, %v1568, 0
        %v1607 = vsel %vm1178, %v1569, 0
        %v1610 = vsel %vm1178, %v1570, 0
        %v1613 = vsel %vm1178, %v1571, 0
        %v1616 = vsel %vm1178, %v1572, 0
        %1618 = vmatprep.subr.bf16.mxu0 0
        %1619 = vmatpush1.bf16.msra.mxu0 %v1590
        %1620 = vmatprep.subr.bf16.mxu0 0
        %1621 = vmatpush1.bf16.msra.mxu0 %v1591
        %1622 = vmatprep.subr.bf16.mxu0 0
        %1623 = vmatpush1.bf16.msra.mxu0 0
        %1624 = vmatprep.subr.bf16.mxu0 0
        %1625 = vmatpush1.bf16.msra.mxu0 0
        %1626 = vmatprep.subr.bf16.mxu0 0
        %1627 = vmatpush1.bf16.msra.mxu0 0
        %1628 = vmatprep.subr.bf16.mxu0 0
        %1629 = vmatpush1.bf16.msra.mxu0 0
        %1630 = vmatprep.subr.bf16.mxu0 0
        %1631 = vmatpush1.bf16.msra.mxu0 0
        %1632 = vmatprep.subr.bf16.mxu0 0
        %1633 = vmatpush1.bf16.msra.mxu0 0
        %1634 = vmatprep.subr.bf16.mxu0 0
        %1635 = vmatpush1.bf16.msra.mxu0 0
        %1636 = vmatprep.subr.bf16.mxu0 0
        %1637 = vmatpush1.bf16.msra.mxu0 0
        %1638 = vmatprep.subr.bf16.mxu0 0
        %1639 = vmatpush1.bf16.msra.mxu0 0
        %1640 = vmatprep.subr.bf16.mxu0 0
        %1641 = vmatpush1.bf16.msra.mxu0 0
        %1642 = vmatprep.subr.bf16.mxu0 0
        %1643 = vmatpush1.bf16.msra.mxu0 0
        %1644 = vmatprep.subr.bf16.mxu0 0
        %1645 = vmatpush1.bf16.msra.mxu0 0
        %1646 = vmatprep.subr.bf16.mxu0 0
        %1647 = vmatpush1.bf16.msra.mxu0 0
        %1648 = vmatprep.subr.bf16.mxu0 0
        %1649 = vmatpush1.bf16.msra.mxu0 0
        %1650 = vmatprep.mubr.bf16.mxu0 0
        %1651 = vmatmul.mubr.bf16.gmra.mrb[0].mxu0 %v1595
        %v1652 = vpop.f32.mrb[0].mxu0
        %v1653 = vadd.f32 %v1581, %v1652
        %v1654 = vpop.f32.mrb[0].mxu0
        %v1655 = vpop.f32.mrb[0].mxu0
        %v1656 = vadd.f32 %v1581, %v1655
        %v1657 = vpop.f32.mrb[0].mxu0
        %1658 = vmatprep.mubr.bf16.mxu0 0
        %1659 = vmatmul.mubr.bf16.gmra.mrb[0].mxu0 %v1598
        %v1660 = vpop.f32.mrb[0].mxu0
        %v1661 = vadd.f32 %v1581, %v1660
        %v1662 = vpop.f32.mrb[0].mxu0
        %v1663 = vpop.f32.mrb[0].mxu0
        %v1664 = vadd.f32 %v1581, %v1663
        %v1665 = vpop.f32.mrb[0].mxu0
        %1666 = vmatprep.mubr.bf16.mxu0 0
        %1667 = vmatmul.mubr.bf16.gmra.mrb[0].mxu0 %v1601
        %v1668 = vpop.f32.mrb[0].mxu0
        %v1669 = vadd.f32 %v1581, %v1668
        %v1670 = vpop.f32.mrb[0].mxu0
        %v1671 = vpop.f32.mrb[0].mxu0
        %v1672 = vadd.f32 %v1581, %v1671
        %v1673 = vpop.f32.mrb[0].mxu0
        %1674 = vmatprep.mubr.bf16.mxu0 0
        %1675 = vmatmul.mubr.bf16.gmra.mrb[0].mxu0 %v1604
        %v1676 = vpop.f32.mrb[0].mxu0
        %v1677 = vadd.f32 %v1581, %v1676
        %v1678 = vpop.f32.mrb[0].mxu0
        %v1679 = vpop.f32.mrb[0].mxu0
        %v1680 = vadd.f32 %v1581, %v1679
        %v1681 = vpop.f32.mrb[0].mxu0
        %1682 = vmatprep.mubr.bf16.mxu0 0
        %1683 = vmatmul.mubr.bf16.gmra.mrb[0].mxu0 %v1607
        %v1684 = vpop.f32.mrb[0].mxu0
        %v1685 = vadd.f32 %v1581, %v1684
        %v1686 = vpop.f32.mrb[0].mxu0
        %v1687 = vpop.f32.mrb[0].mxu0
        %v1688 = vadd.f32 %v1581, %v1687
        %v1689 = vpop.f32.mrb[0].mxu0
        %1690 = vmatprep.mubr.bf16.mxu0 0
        %1691 = vmatmul.mubr.bf16.gmra.mrb[0].mxu0 %v1610
        %v1692 = vpop.f32.mrb[0].mxu0
        %v1693 = vadd.f32 %v1581, %v1692
        %v1694 = vpop.f32.mrb[0].mxu0
        %v1695 = vpop.f32.mrb[0].mxu0
        %v1696 = vadd.f32 %v1581, %v1695
        %v1697 = vpop.f32.mrb[0].mxu0
        %1698 = vmatprep.mubr.bf16.mxu0 0
        %1699 = vmatmul.mubr.bf16.gmra.mrb[0].mxu0 %v1613
        %v1700 = vpop.f32.mrb[0].mxu0
        %v1701 = vadd.f32 %v1581, %v1700
        %v1702 = vpop.f32.mrb[0].mxu0
        %v1703 = vpop.f32.mrb[0].mxu0
        %v1704 = vadd.f32 %v1581, %v1703
        %v1705 = vpop.f32.mrb[0].mxu0
        %1706 = vmatprep.mubr.bf16.mxu0 0
        %1707 = vmatmul.mubr.bf16.gmra.mrb[0].mxu0 %v1616
        %v1708 = vpop.f32.mrb[0].mxu0
        %v1709 = vadd.f32 %v1581, %v1708
        %v1710 = vpop.f32.mrb[0].mxu0
        %v1711 = vpop.f32.mrb[0].mxu0
        %v1712 = vadd.f32 %v1581, %v1711
        %v1713 = vpop.f32.mrb[0].mxu0
        %1714 = vdwg.mxu0
        %v1715 = vpack.c.bf16 %v1656, %v1653
        %v1716 = vpack.c.bf16 %v1664, %v1661
        %v1717 = vpack.c.bf16 %v1672, %v1669
        %v1718 = vpack.c.bf16 %v1680, %v1677
        %v1719 = vpack.c.bf16 %v1688, %v1685
        %v1720 = vpack.c.bf16 %v1696, %v1693
        %v1721 = vpack.c.bf16 %v1704, %v1701
        %v1722 = vpack.c.bf16 %v1712, %v1709
        %s1723 = scalar_lea.vmem [#allocation2], 32
        %v1724 = vld [vmem:[%s1723] sm:$0xf]
        %v1725 = vld [vmem:[%s1723 + $0x4] sm:$0xf]
        %v1726 = vld [vmem:[%s1723 + $0x8] sm:$0xf]
        %v1727 = vld [vmem:[%s1723 + $0xc] sm:$0xf]
        %v1728 = vlaneseq
        %v1729 = vshrl.u32 %v1728, 7
        %v1730 = vsub.s32 4, %v1729
        %v1731 = vrot.slane %v362, %v1730
        %v1736 = vunpack.c.l.b16 %v1724
        %v1737 = vunpack.c.l.b16 %v1725
        %v1738 = vunpack.c.l.b16 %v1726
        %v1739 = vunpack.c.l.b16 %v1727
        %v1740 = vpack.c.b16 %v1737, %v1736
        %v1741 = vpack.c.b16 %v1739, %v1738
        %v1745 = vsel %vm1178, %v1715, 0
        %v1748 = vsel %vm1178, %v1716, 0
        %v1751 = vsel %vm1178, %v1717, 0
        %v1754 = vsel %vm1178, %v1718, 0
        %v1757 = vsel %vm1178, %v1719, 0
        %v1760 = vsel %vm1178, %v1720, 0
        %v1763 = vsel %vm1178, %v1721, 0
        %v1766 = vsel %vm1178, %v1722, 0
        %1768 = vmatprep.subr.bf16.mxu0 0
        %1769 = vmatpush1.bf16.msra.mxu0 %v1740
        %1770 = vmatprep.subr.bf16.mxu0 0
        %1771 = vmatpush1.bf16.msra.mxu0 %v1741
        %1772 = vmatprep.subr.bf16.mxu0 0
        %1773 = vmatpush1.bf16.msra.mxu0 0
        %1774 = vmatprep.subr.bf16.mxu0 0
        %1775 = vmatpush1.bf16.msra.mxu0 0
        %1776 = vmatprep.subr.bf16.mxu0 0
        %1777 = vmatpush1.bf16.msra.mxu0 0
        %1778 = vmatprep.subr.bf16.mxu0 0
        %1779 = vmatpush1.bf16.msra.mxu0 0
        %1780 = vmatprep.subr.bf16.mxu0 0
        %1781 = vmatpush1.bf16.msra.mxu0 0
        %1782 = vmatprep.subr.bf16.mxu0 0
        %1783 = vmatpush1.bf16.msra.mxu0 0
        %1784 = vmatprep.subr.bf16.mxu0 0
        %1785 = vmatpush1.bf16.msra.mxu0 0
        %1786 = vmatprep.subr.bf16.mxu0 0
        %1787 = vmatpush1.bf16.msra.mxu0 0
        %1788 = vmatprep.subr.bf16.mxu0 0
        %1789 = vmatpush1.bf16.msra.mxu0 0
        %1790 = vmatprep.subr.bf16.mxu0 0
        %1791 = vmatpush1.bf16.msra.mxu0 0
        %1792 = vmatprep.subr.bf16.mxu0 0
        %1793 = vmatpush1.bf16.msra.mxu0 0
        %1794 = vmatprep.subr.bf16.mxu0 0
        %1795 = vmatpush1.bf16.msra.mxu0 0
        %1796 = vmatprep.subr.bf16.mxu0 0
        %1797 = vmatpush1.bf16.msra.mxu0 0
        %1798 = vmatprep.subr.bf16.mxu0 0
        %1799 = vmatpush1.bf16.msra.mxu0 0
        %1800 = vmatprep.mubr.bf16.mxu0 0
        %1801 = vmatmul.mubr.bf16.gmra.mrb[0].mxu0 %v1745
        %v1802 = vpop.f32.mrb[0].mxu0
        %v1803 = vadd.f32 %v1731, %v1802
        %v1804 = vpop.f32.mrb[0].mxu0
        %v1805 = vpop.f32.mrb[0].mxu0
        %v1806 = vadd.f32 %v1731, %v1805
        %v1807 = vpop.f32.mrb[0].mxu0
        %1808 = vmatprep.mubr.bf16.mxu0 0
        %1809 = vmatmul.mubr.bf16.gmra.mrb[0].mxu0 %v1748
        %v1810 = vpop.f32.mrb[0].mxu0
        %v1811 = vadd.f32 %v1731, %v1810
        %v1812 = vpop.f32.mrb[0].mxu0
        %v1813 = vpop.f32.mrb[0].mxu0
        %v1814 = vadd.f32 %v1731, %v1813
        %v1815 = vpop.f32.mrb[0].mxu0
        %1816 = vmatprep.mubr.bf16.mxu0 0
        %1817 = vmatmul.mubr.bf16.gmra.mrb[0].mxu0 %v1751
        %v1818 = vpop.f32.mrb[0].mxu0
        %v1819 = vadd.f32 %v1731, %v1818
        %v1820 = vpop.f32.mrb[0].mxu0
        %v1821 = vpop.f32.mrb[0].mxu0
        %v1822 = vadd.f32 %v1731, %v1821
        %v1823 = vpop.f32.mrb[0].mxu0
        %1824 = vmatprep.mubr.bf16.mxu0 0
        %1825 = vmatmul.mubr.bf16.gmra.mrb[0].mxu0 %v1754
        %v1826 = vpop.f32.mrb[0].mxu0
        %v1827 = vadd.f32 %v1731, %v1826
        %v1828 = vpop.f32.mrb[0].mxu0
        %v1829 = vpop.f32.mrb[0].mxu0
        %v1830 = vadd.f32 %v1731, %v1829
        %v1831 = vpop.f32.mrb[0].mxu0
        %1832 = vmatprep.mubr.bf16.mxu0 0
        %1833 = vmatmul.mubr.bf16.gmra.mrb[0].mxu0 %v1757
        %v1834 = vpop.f32.mrb[0].mxu0
        %v1835 = vadd.f32 %v1731, %v1834
        %v1836 = vpop.f32.mrb[0].mxu0
        %v1837 = vpop.f32.mrb[0].mxu0
        %v1838 = vadd.f32 %v1731, %v1837
        %v1839 = vpop.f32.mrb[0].mxu0
        %1840 = vmatprep.mubr.bf16.mxu0 0
        %1841 = vmatmul.mubr.bf16.gmra.mrb[0].mxu0 %v1760
        %v1842 = vpop.f32.mrb[0].mxu0
        %v1843 = vadd.f32 %v1731, %v1842
        %v1844 = vpop.f32.mrb[0].mxu0
        %v1845 = vpop.f32.mrb[0].mxu0
        %v1846 = vadd.f32 %v1731, %v1845
        %v1847 = vpop.f32.mrb[0].mxu0
        %1848 = vmatprep.mubr.bf16.mxu0 0
        %1849 = vmatmul.mubr.bf16.gmra.mrb[0].mxu0 %v1763
        %v1850 = vpop.f32.mrb[0].mxu0
        %v1851 = vadd.f32 %v1731, %v1850
        %v1852 = vpop.f32.mrb[0].mxu0
        %v1853 = vpop.f32.mrb[0].mxu0
        %v1854 = vadd.f32 %v1731, %v1853
        %v1855 = vpop.f32.mrb[0].mxu0
        %1856 = vmatprep.mubr.bf16.mxu0 0
        %1857 = vmatmul.mubr.bf16.gmra.mrb[0].mxu0 %v1766
        %v1858 = vpop.f32.mrb[0].mxu0
        %v1859 = vadd.f32 %v1731, %v1858
        %v1860 = vpop.f32.mrb[0].mxu0
        %v1861 = vpop.f32.mrb[0].mxu0
        %v1862 = vadd.f32 %v1731, %v1861
        %v1863 = vpop.f32.mrb[0].mxu0
        %1864 = vdwg.mxu0
        %v1865 = vmax.f32 %v1803, 0.0
        %v1866 = vmax.f32 %v1806, 0.0
        %v1867 = vmax.f32 %v1811, 0.0
        %v1868 = vmax.f32 %v1814, 0.0
        %v1869 = vmax.f32 %v1819, 0.0
        %v1870 = vmax.f32 %v1822, 0.0
        %v1871 = vmax.f32 %v1827, 0.0
        %v1872 = vmax.f32 %v1830, 0.0
        %v1873 = vmax.f32 %v1835, 0.0
        %v1874 = vmax.f32 %v1838, 0.0
        %v1875 = vmax.f32 %v1843, 0.0
        %v1876 = vmax.f32 %v1846, 0.0
        %v1877 = vmax.f32 %v1851, 0.0
        %v1878 = vmax.f32 %v1854, 0.0
        %v1879 = vmax.f32 %v1859, 0.0
        %v1880 = vmax.f32 %v1862, 0.0
        %v1881 = vpack.c.bf16 %v1866, %v1865
        %v1882 = vpack.c.bf16 %v1868, %v1867
        %v1883 = vpack.c.bf16 %v1870, %v1869
        %v1884 = vpack.c.bf16 %v1872, %v1871
        %v1885 = vpack.c.bf16 %v1874, %v1873
        %v1886 = vpack.c.bf16 %v1876, %v1875
        %v1887 = vpack.c.bf16 %v1878, %v1877
        %v1888 = vpack.c.bf16 %v1880, %v1879
        %s1889 = scalar_lea.vmem [#allocation2], 48
        %v1890 = vld [vmem:[%s1889] sm:$0xf]
        %v1891 = vld [vmem:[%s1889 + $0x4] sm:$0xf]
        %v1892 = vld [vmem:[%s1889 + $0x8] sm:$0xf]
        %v1893 = vld [vmem:[%s1889 + $0xc] sm:$0xf]
        %v1894 = vlaneseq
        %v1895 = vshrl.u32 %v1894, 7
        %v1896 = vsub.s32 5, %v1895
        %v1897 = vrot.slane %v362, %v1896
        %v1902 = vunpack.c.l.b16 %v1890
        %v1903 = vunpack.c.l.b16 %v1891
        %v1904 = vunpack.c.l.b16 %v1892
        %v1905 = vunpack.c.l.b16 %v1893
        %v1906 = vpack.c.b16 %v1903, %v1902
        %v1907 = vpack.c.b16 %v1905, %v1904
        %v1911 = vsel %vm1178, %v1881, 0
        %v1914 = vsel %vm1178, %v1882, 0
        %v1917 = vsel %vm1178, %v1883, 0
        %v1920 = vsel %vm1178, %v1884, 0
        %v1923 = vsel %vm1178, %v1885, 0
        %v1926 = vsel %vm1178, %v1886, 0
        %v1929 = vsel %vm1178, %v1887, 0
        %v1932 = vsel %vm1178, %v1888, 0
        %1934 = vmatprep.subr.bf16.mxu0 0
        %1935 = vmatpush1.bf16.msra.mxu0 %v1906
        %1936 = vmatprep.subr.bf16.mxu0 0
        %1937 = vmatpush1.bf16.msra.mxu0 %v1907
        %1938 = vmatprep.subr.bf16.mxu0 0
        %1939 = vmatpush1.bf16.msra.mxu0 0
        %1940 = vmatprep.subr.bf16.mxu0 0
        %1941 = vmatpush1.bf16.msra.mxu0 0
        %1942 = vmatprep.subr.bf16.mxu0 0
        %1943 = vmatpush1.bf16.msra.mxu0 0
        %1944 = vmatprep.subr.bf16.mxu0 0
        %1945 = vmatpush1.bf16.msra.mxu0 0
        %1946 = vmatprep.subr.bf16.mxu0 0
        %1947 = vmatpush1.bf16.msra.mxu0 0
        %1948 = vmatprep.subr.bf16.mxu0 0
        %1949 = vmatpush1.bf16.msra.mxu0 0
        %1950 = vmatprep.subr.bf16.mxu0 0
        %1951 = vmatpush1.bf16.msra.mxu0 0
        %1952 = vmatprep.subr.bf16.mxu0 0
        %1953 = vmatpush1.bf16.msra.mxu0 0
        %1954 = vmatprep.subr.bf16.mxu0 0
        %1955 = vmatpush1.bf16.msra.mxu0 0
        %1956 = vmatprep.subr.bf16.mxu0 0
        %1957 = vmatpush1.bf16.msra.mxu0 0
        %1958 = vmatprep.subr.bf16.mxu0 0
        %1959 = vmatpush1.bf16.msra.mxu0 0
        %1960 = vmatprep.subr.bf16.mxu0 0
        %1961 = vmatpush1.bf16.msra.mxu0 0
        %1962 = vmatprep.subr.bf16.mxu0 0
        %1963 = vmatpush1.bf16.msra.mxu0 0
        %1964 = vmatprep.subr.bf16.mxu0 0
        %1965 = vmatpush1.bf16.msra.mxu0 0
        %1966 = vmatprep.mubr.bf16.mxu0 0
        %1967 = vmatmul.mubr.bf16.gmra.mrb[0].mxu0 %v1911
        %v1968 = vpop.f32.mrb[0].mxu0
        %v1969 = vadd.f32 %v1897, %v1968
        %v1970 = vpop.f32.mrb[0].mxu0
        %v1971 = vpop.f32.mrb[0].mxu0
        %v1972 = vadd.f32 %v1897, %v1971
        %v1973 = vpop.f32.mrb[0].mxu0
        %1974 = vmatprep.mubr.bf16.mxu0 0
        %1975 = vmatmul.mubr.bf16.gmra.mrb[0].mxu0 %v1914
        %v1976 = vpop.f32.mrb[0].mxu0
        %v1977 = vadd.f32 %v1897, %v1976
        %v1978 = vpop.f32.mrb[0].mxu0
        %v1979 = vpop.f32.mrb[0].mxu0
        %v1980 = vadd.f32 %v1897, %v1979
        %v1981 = vpop.f32.mrb[0].mxu0
        %1982 = vmatprep.mubr.bf16.mxu0 0
        %1983 = vmatmul.mubr.bf16.gmra.mrb[0].mxu0 %v1917
        %v1984 = vpop.f32.mrb[0].mxu0
        %v1985 = vadd.f32 %v1897, %v1984
        %v1986 = vpop.f32.mrb[0].mxu0
        %v1987 = vpop.f32.mrb[0].mxu0
        %v1988 = vadd.f32 %v1897, %v1987
        %v1989 = vpop.f32.mrb[0].mxu0
        %1990 = vmatprep.mubr.bf16.mxu0 0
        %1991 = vmatmul.mubr.bf16.gmra.mrb[0].mxu0 %v1920
        %v1992 = vpop.f32.mrb[0].mxu0
        %v1993 = vadd.f32 %v1897, %v1992
        %v1994 = vpop.f32.mrb[0].mxu0
        %v1995 = vpop.f32.mrb[0].mxu0
        %v1996 = vadd.f32 %v1897, %v1995
        %v1997 = vpop.f32.mrb[0].mxu0
        %1998 = vmatprep.mubr.bf16.mxu0 0
        %1999 = vmatmul.mubr.bf16.gmra.mrb[0].mxu0 %v1923
        %v2000 = vpop.f32.mrb[0].mxu0
        %v2001 = vadd.f32 %v1897, %v2000
        %v2002 = vpop.f32.mrb[0].mxu0
        %v2003 = vpop.f32.mrb[0].mxu0
        %v2004 = vadd.f32 %v1897, %v2003
        %v2005 = vpop.f32.mrb[0].mxu0
        %2006 = vmatprep.mubr.bf16.mxu0 0
        %2007 = vmatmul.mubr.bf16.gmra.mrb[0].mxu0 %v1926
        %v2008 = vpop.f32.mrb[0].mxu0
        %v2009 = vadd.f32 %v1897, %v2008
        %v2010 = vpop.f32.mrb[0].mxu0
        %v2011 = vpop.f32.mrb[0].mxu0
        %v2012 = vadd.f32 %v1897, %v2011
        %v2013 = vpop.f32.mrb[0].mxu0
        %2014 = vmatprep.mubr.bf16.mxu0 0
        %2015 = vmatmul.mubr.bf16.gmra.mrb[0].mxu0 %v1929
        %v2016 = vpop.f32.mrb[0].mxu0
        %v2017 = vadd.f32 %v1897, %v2016
        %v2018 = vpop.f32.mrb[0].mxu0
        %v2019 = vpop.f32.mrb[0].mxu0
        %v2020 = vadd.f32 %v1897, %v2019
        %v2021 = vpop.f32.mrb[0].mxu0
        %2022 = vmatprep.mubr.bf16.mxu0 0
        %2023 = vmatmul.mubr.bf16.gmra.mrb[0].mxu0 %v1932
        %v2024 = vpop.f32.mrb[0].mxu0
        %v2025 = vadd.f32 %v1897, %v2024
        %v2026 = vpop.f32.mrb[0].mxu0
        %v2027 = vpop.f32.mrb[0].mxu0
        %v2028 = vadd.f32 %v1897, %v2027
        %v2029 = vpop.f32.mrb[0].mxu0
        %2030 = vdwg.mxu0
        %v2031 = vsel %vm1178, %v1969, 0.0
        %2032 = vadd.xlane.f32.xlu0 %v2031
        %v2033 = vpop.xlane.xlu0 %2032
        %v2034 = vsel %vm1178, %v1972, 0.0
        %2035 = vadd.xlane.f32.xlu0 %v2034
        %v2036 = vpop.xlane.xlu0 %2035
        %v2037 = vsel %vm1178, %v1977, 0.0
        %2038 = vadd.xlane.f32.xlu0 %v2037
        %v2039 = vpop.xlane.xlu0 %2038
        %v2040 = vsel %vm1178, %v1980, 0.0
        %2041 = vadd.xlane.f32.xlu0 %v2040
        %v2042 = vpop.xlane.xlu0 %2041
        %v2043 = vsel %vm1178, %v1985, 0.0
        %2044 = vadd.xlane.f32.xlu0 %v2043
        %v2045 = vpop.xlane.xlu0 %2044
        %v2046 = vsel %vm1178, %v1988, 0.0
        %2047 = vadd.xlane.f32.xlu0 %v2046
        %v2048 = vpop.xlane.xlu0 %2047
        %v2049 = vsel %vm1178, %v1993, 0.0
        %2050 = vadd.xlane.f32.xlu0 %v2049
        %v2051 = vpop.xlane.xlu0 %2050
        %v2052 = vsel %vm1178, %v1996, 0.0
        %2053 = vadd.xlane.f32.xlu0 %v2052
        %v2054 = vpop.xlane.xlu0 %2053
        %v2055 = vsel %vm1178, %v2001, 0.0
        %2056 = vadd.xlane.f32.xlu0 %v2055
        %v2057 = vpop.xlane.xlu0 %2056
        %v2058 = vsel %vm1178, %v2004, 0.0
        %2059 = vadd.xlane.f32.xlu0 %v2058
        %v2060 = vpop.xlane.xlu0 %2059
        %v2061 = vsel %vm1178, %v2009, 0.0
        %2062 = vadd.xlane.f32.xlu0 %v2061
        %v2063 = vpop.xlane.xlu0 %2062
        %v2064 = vsel %vm1178, %v2012, 0.0
        %2065 = vadd.xlane.f32.xlu0 %v2064
        %v2066 = vpop.xlane.xlu0 %2065
        %v2067 = vsel %vm1178, %v2017, 0.0
        %2068 = vadd.xlane.f32.xlu0 %v2067
        %v2069 = vpop.xlane.xlu0 %2068
        %v2070 = vsel %vm1178, %v2020, 0.0
        %2071 = vadd.xlane.f32.xlu0 %v2070
        %v2072 = vpop.xlane.xlu0 %2071
        %v2073 = vsel %vm1178, %v2025, 0.0
        %2074 = vadd.xlane.f32.xlu0 %v2073
        %v2075 = vpop.xlane.xlu0 %2074
        %v2076 = vsel %vm1178, %v2028, 0.0
        %2077 = vadd.xlane.f32.xlu0 %v2076
        %v2078 = vpop.xlane.xlu0 %2077
        %v2079 = vmul.f32 %v2033, %v1348
        %v2080 = vmul.f32 %v2036, %v1348
        %v2081 = vmul.f32 %v2039, %v1348
        %v2082 = vmul.f32 %v2042, %v1348
        %v2083 = vmul.f32 %v2045, %v1348
        %v2084 = vmul.f32 %v2048, %v1348
        %v2085 = vmul.f32 %v2051, %v1348
        %v2086 = vmul.f32 %v2054, %v1348
        %v2087 = vmul.f32 %v2057, %v1348
        %v2088 = vmul.f32 %v2060, %v1348
        %v2089 = vmul.f32 %v2063, %v1348
        %v2090 = vmul.f32 %v2066, %v1348
        %v2091 = vmul.f32 %v2069, %v1348
        %v2092 = vmul.f32 %v2072, %v1348
        %v2093 = vmul.f32 %v2075, %v1348
        %v2094 = vmul.f32 %v2078, %v1348
        %v2095 = vsub.f32 %v1969, %v2079
        %v2096 = vsub.f32 %v1972, %v2080
        %v2097 = vsub.f32 %v1977, %v2081
        %v2098 = vsub.f32 %v1980, %v2082
        %v2099 = vsub.f32 %v1985, %v2083
        %v2100 = vsub.f32 %v1988, %v2084
        %v2101 = vsub.f32 %v1993, %v2085
        %v2102 = vsub.f32 %v1996, %v2086
        %v2103 = vsub.f32 %v2001, %v2087
        %v2104 = vsub.f32 %v2004, %v2088
        %v2105 = vsub.f32 %v2009, %v2089
        %v2106 = vsub.f32 %v2012, %v2090
        %v2107 = vsub.f32 %v2017, %v2091
        %v2108 = vsub.f32 %v2020, %v2092
        %v2109 = vsub.f32 %v2025, %v2093
        %v2110 = vsub.f32 %v2028, %v2094
        %v2111 = vmul.f32 %v2095, %v2095
        %v2112 = vmul.f32 %v2096, %v2096
        %v2113 = vmul.f32 %v2097, %v2097
        %v2114 = vmul.f32 %v2098, %v2098
        %v2115 = vmul.f32 %v2099, %v2099
        %v2116 = vmul.f32 %v2100, %v2100
        %v2117 = vmul.f32 %v2101, %v2101
        %v2118 = vmul.f32 %v2102, %v2102
        %v2119 = vmul.f32 %v2103, %v2103
        %v2120 = vmul.f32 %v2104, %v2104
        %v2121 = vmul.f32 %v2105, %v2105
        %v2122 = vmul.f32 %v2106, %v2106
        %v2123 = vmul.f32 %v2107, %v2107
        %v2124 = vmul.f32 %v2108, %v2108
        %v2125 = vmul.f32 %v2109, %v2109
        %v2126 = vmul.f32 %v2110, %v2110
        %v2127 = vsel %vm1178, %v2111, 0.0
        %2128 = vadd.xlane.f32.xlu0 %v2127
        %v2129 = vpop.xlane.xlu0 %2128
        %v2130 = vsel %vm1178, %v2112, 0.0
        %2131 = vadd.xlane.f32.xlu0 %v2130
        %v2132 = vpop.xlane.xlu0 %2131
        %v2133 = vsel %vm1178, %v2113, 0.0
        %2134 = vadd.xlane.f32.xlu0 %v2133
        %v2135 = vpop.xlane.xlu0 %2134
        %v2136 = vsel %vm1178, %v2114, 0.0
        %2137 = vadd.xlane.f32.xlu0 %v2136
        %v2138 = vpop.xlane.xlu0 %2137
        %v2139 = vsel %vm1178, %v2115, 0.0
        %2140 = vadd.xlane.f32.xlu0 %v2139
        %v2141 = vpop.xlane.xlu0 %2140
        %v2142 = vsel %vm1178, %v2116, 0.0
        %2143 = vadd.xlane.f32.xlu0 %v2142
        %v2144 = vpop.xlane.xlu0 %2143
        %v2145 = vsel %vm1178, %v2117, 0.0
        %2146 = vadd.xlane.f32.xlu0 %v2145
        %v2147 = vpop.xlane.xlu0 %2146
        %v2148 = vsel %vm1178, %v2118, 0.0
        %2149 = vadd.xlane.f32.xlu0 %v2148
        %v2150 = vpop.xlane.xlu0 %2149
        %v2151 = vsel %vm1178, %v2119, 0.0
        %2152 = vadd.xlane.f32.xlu0 %v2151
        %v2153 = vpop.xlane.xlu0 %2152
        %v2154 = vsel %vm1178, %v2120, 0.0
        %2155 = vadd.xlane.f32.xlu0 %v2154
        %v2156 = vpop.xlane.xlu0 %2155
        %v2157 = vsel %vm1178, %v2121, 0.0
        %2158 = vadd.xlane.f32.xlu0 %v2157
        %v2159 = vpop.xlane.xlu0 %2158
        %v2160 = vsel %vm1178, %v2122, 0.0
        %2161 = vadd.xlane.f32.xlu0 %v2160
        %v2162 = vpop.xlane.xlu0 %2161
        %v2163 = vsel %vm1178, %v2123, 0.0
        %2164 = vadd.xlane.f32.xlu0 %v2163
        %v2165 = vpop.xlane.xlu0 %2164
        %v2166 = vsel %vm1178, %v2124, 0.0
        %2167 = vadd.xlane.f32.xlu0 %v2166
        %v2168 = vpop.xlane.xlu0 %2167
        %v2169 = vsel %vm1178, %v2125, 0.0
        %2170 = vadd.xlane.f32.xlu0 %v2169
        %v2171 = vpop.xlane.xlu0 %2170
        %v2172 = vsel %vm1178, %v2126, 0.0
        %2173 = vadd.xlane.f32.xlu0 %v2172
        %v2174 = vpop.xlane.xlu0 %2173
        %v2175 = vmul.f32 %v2129, %v1348
        %v2176 = vmul.f32 %v2132, %v1348
        %v2177 = vmul.f32 %v2135, %v1348
        %v2178 = vmul.f32 %v2138, %v1348
        %v2179 = vmul.f32 %v2141, %v1348
        %v2180 = vmul.f32 %v2144, %v1348
        %v2181 = vmul.f32 %v2147, %v1348
        %v2182 = vmul.f32 %v2150, %v1348
        %v2183 = vmul.f32 %v2153, %v1348
        %v2184 = vmul.f32 %v2156, %v1348
        %v2185 = vmul.f32 %v2159, %v1348
        %v2186 = vmul.f32 %v2162, %v1348
        %v2187 = vmul.f32 %v2165, %v1348
        %v2188 = vmul.f32 %v2168, %v1348
        %v2189 = vmul.f32 %v2171, %v1348
        %v2190 = vmul.f32 %v2174, %v1348
        %v2191 = vadd.f32 %v2175, 1e-05
        %v2192 = vadd.f32 %v2176, 1e-05
        %v2193 = vadd.f32 %v2177, 1e-05
        %v2194 = vadd.f32 %v2178, 1e-05
        %v2195 = vadd.f32 %v2179, 1e-05
        %v2196 = vadd.f32 %v2180, 1e-05
        %v2197 = vadd.f32 %v2181, 1e-05
        %v2198 = vadd.f32 %v2182, 1e-05
        %v2199 = vadd.f32 %v2183, 1e-05
        %v2200 = vadd.f32 %v2184, 1e-05
        %v2201 = vadd.f32 %v2185, 1e-05
        %v2202 = vadd.f32 %v2186, 1e-05
        %v2203 = vadd.f32 %v2187, 1e-05
        %v2204 = vadd.f32 %v2188, 1e-05
        %v2205 = vadd.f32 %v2189, 1e-05
        %v2206 = vadd.f32 %v2190, 1e-05
        %v2207 = vrsqrt.pop %v2191
        %v2208 = vrsqrt.pop %v2192
        %v2209 = vrsqrt.pop %v2193
        %v2210 = vrsqrt.pop %v2194
        %v2211 = vrsqrt.pop %v2195
        %v2212 = vrsqrt.pop %v2196
        %v2213 = vrsqrt.pop %v2197
        %v2214 = vrsqrt.pop %v2198
        %v2215 = vrsqrt.pop %v2199
        %v2216 = vrsqrt.pop %v2200
        %v2217 = vrsqrt.pop %v2201
        %v2218 = vrsqrt.pop %v2202
        %v2219 = vrsqrt.pop %v2203
        %v2220 = vrsqrt.pop %v2204
        %v2221 = vrsqrt.pop %v2205
        %v2222 = vrsqrt.pop %v2206
        %v2223 = vmul.f32 %v2095, %v2207
        %v2224 = vmul.f32 %v2096, %v2208
        %v2225 = vmul.f32 %v2097, %v2209
        %v2226 = vmul.f32 %v2098, %v2210
        %v2227 = vmul.f32 %v2099, %v2211
        %v2228 = vmul.f32 %v2100, %v2212
        %v2229 = vmul.f32 %v2101, %v2213
        %v2230 = vmul.f32 %v2102, %v2214
        %v2231 = vmul.f32 %v2103, %v2215
        %v2232 = vmul.f32 %v2104, %v2216
        %v2233 = vmul.f32 %v2105, %v2217
        %v2234 = vmul.f32 %v2106, %v2218
        %v2235 = vmul.f32 %v2107, %v2219
        %v2236 = vmul.f32 %v2108, %v2220
        %v2237 = vmul.f32 %v2109, %v2221
        %v2238 = vmul.f32 %v2110, %v2222
        %v2239 = vlaneseq
        %v2240 = vshrl.u32 %v2239, 7
        %v2241 = vsub.s32 6, %v2240
        %v2242 = vrot.slane %v362, %v2241
        %v2243 = vmul.f32 %v2223, %v2242
        %v2244 = vmul.f32 %v2224, %v2242
        %v2245 = vmul.f32 %v2225, %v2242
        %v2246 = vmul.f32 %v2226, %v2242
        %v2247 = vmul.f32 %v2227, %v2242
        %v2248 = vmul.f32 %v2228, %v2242
        %v2249 = vmul.f32 %v2229, %v2242
        %v2250 = vmul.f32 %v2230, %v2242
        %v2251 = vmul.f32 %v2231, %v2242
        %v2252 = vmul.f32 %v2232, %v2242
        %v2253 = vmul.f32 %v2233, %v2242
        %v2254 = vmul.f32 %v2234, %v2242
        %v2255 = vmul.f32 %v2235, %v2242
        %v2256 = vmul.f32 %v2236, %v2242
        %v2257 = vmul.f32 %v2237, %v2242
        %v2258 = vmul.f32 %v2238, %v2242
        %v2259 = vlaneseq
        %v2260 = vshrl.u32 %v2259, 7
        %v2261 = vsub.s32 7, %v2260
        %v2262 = vrot.slane %v362, %v2261
        %v2263 = vadd.f32 %v2243, %v2262
        %v2264 = vadd.f32 %v2244, %v2262
        %v2265 = vadd.f32 %v2245, %v2262
        %v2266 = vadd.f32 %v2246, %v2262
        %v2267 = vadd.f32 %v2247, %v2262
        %v2268 = vadd.f32 %v2248, %v2262
        %v2269 = vadd.f32 %v2249, %v2262
        %v2270 = vadd.f32 %v2250, %v2262
        %v2271 = vadd.f32 %v2251, %v2262
        %v2272 = vadd.f32 %v2252, %v2262
        %v2273 = vadd.f32 %v2253, %v2262
        %v2274 = vadd.f32 %v2254, %v2262
        %v2275 = vadd.f32 %v2255, %v2262
        %v2276 = vadd.f32 %v2256, %v2262
        %v2277 = vadd.f32 %v2257, %v2262
        %v2278 = vadd.f32 %v2258, %v2262
        %v2279 = vpack.c.bf16 %v2263, %v2263
        %v2280 = vpack.c.bf16 %v2264, %v2264
        %v2281 = vpack.c.bf16 %v2265, %v2265
        %v2282 = vpack.c.bf16 %v2266, %v2266
        %v2283 = vpack.c.bf16 %v2267, %v2267
        %v2284 = vpack.c.bf16 %v2268, %v2268
        %v2285 = vpack.c.bf16 %v2269, %v2269
        %v2286 = vpack.c.bf16 %v2270, %v2270
        %v2287 = vpack.c.bf16 %v2271, %v2271
        %v2288 = vpack.c.bf16 %v2272, %v2272
        %v2289 = vpack.c.bf16 %v2273, %v2273
        %v2290 = vpack.c.bf16 %v2274, %v2274
        %v2291 = vpack.c.bf16 %v2275, %v2275
        %v2292 = vpack.c.bf16 %v2276, %v2276
        %v2293 = vpack.c.bf16 %v2277, %v2277
        %v2294 = vpack.c.bf16 %v2278, %v2278
        %v2296 = vsel %vm1178, %v2279, 0
        %2298 = vmatprep.subr.bf16.mxu0 0
        %2299 = vmatpush1.bf16.xpose.msra.mxu0 %v2296
        %2300 = vmatprep.subr.bf16.mxu0 0
        %2301 = vmatpush1.bf16.xpose.msra.mxu0 0
        %2302 = vmatprep.subr.bf16.mxu0 0
        %2303 = vmatpush1.bf16.xpose.msra.mxu0 0
        %2304 = vmatprep.subr.bf16.mxu0 0
        %2305 = vmatpush1.bf16.xpose.msra.mxu0 0
        %2306 = vmatprep.subr.bf16.mxu0 0
        %2307 = vmatpush1.bf16.xpose.msra.mxu0 0
        %2308 = vmatprep.subr.bf16.mxu0 0
        %2309 = vmatpush1.bf16.xpose.msra.mxu0 0
        %2310 = vmatprep.subr.bf16.mxu0 0
        %2311 = vmatpush1.bf16.xpose.msra.mxu0 0
        %2312 = vmatprep.subr.bf16.mxu0 0
        %2313 = vmatpush1.bf16.xpose.msra.mxu0 0
        %2314 = vmatprep.subr.bf16.mxu0 0
        %2315 = vmatpush1.bf16.xpose.msra.mxu0 0
        %2316 = vmatprep.subr.bf16.mxu0 0
        %2317 = vmatpush1.bf16.xpose.msra.mxu0 0
        %2318 = vmatprep.subr.bf16.mxu0 0
        %2319 = vmatpush1.bf16.xpose.msra.mxu0 0
        %2320 = vmatprep.subr.bf16.mxu0 0
        %2321 = vmatpush1.bf16.xpose.msra.mxu0 0
        %2322 = vmatprep.subr.bf16.mxu0 0
        %2323 = vmatpush1.bf16.xpose.msra.mxu0 0
        %2324 = vmatprep.subr.bf16.mxu0 0
        %2325 = vmatpush1.bf16.xpose.msra.mxu0 0
        %2326 = vmatprep.subr.bf16.mxu0 0
        %2327 = vmatpush1.bf16.xpose.msra.mxu0 0
        %2328 = vmatprep.subr.bf16.mxu0 0
        %2329 = vmatpush1.bf16.xpose.msra.mxu0 0
        %2330 = vmatprep.mubr.bf16.mxu0 0
        %2331 = vmatmul.mubr.bf16.gmra.mrb[0].mxu0 %v2296
        %v2332 = vpop.f32.mrb[0].mxu0
        %v2333 = vadd.f32 0.0, %v2332
        %v2334 = vpop.f32.mrb[0].mxu0
        %v2335 = vpop.f32.mrb[0].mxu0
        %v2336 = vpop.f32.mrb[0].mxu0
        %2337 = vdwg.mxu0
        %v2339 = vsel %vm1178, %v2280, 0
        %2341 = vmatprep.subr.bf16.mxu0 0
        %2342 = vmatpush1.bf16.xpose.msra.mxu0 %v2339
        %2343 = vmatprep.subr.bf16.mxu0 0
        %2344 = vmatpush1.bf16.xpose.msra.mxu0 0
        %2345 = vmatprep.subr.bf16.mxu0 0
        %2346 = vmatpush1.bf16.xpose.msra.mxu0 0
        %2347 = vmatprep.subr.bf16.mxu0 0
        %2348 = vmatpush1.bf16.xpose.msra.mxu0 0
        %2349 = vmatprep.subr.bf16.mxu0 0
        %2350 = vmatpush1.bf16.xpose.msra.mxu0 0
        %2351 = vmatprep.subr.bf16.mxu0 0
        %2352 = vmatpush1.bf16.xpose.msra.mxu0 0
        %2353 = vmatprep.subr.bf16.mxu0 0
        %2354 = vmatpush1.bf16.xpose.msra.mxu0 0
        %2355 = vmatprep.subr.bf16.mxu0 0
        %2356 = vmatpush1.bf16.xpose.msra.mxu0 0
        %2357 = vmatprep.subr.bf16.mxu0 0
        %2358 = vmatpush1.bf16.xpose.msra.mxu0 0
        %2359 = vmatprep.subr.bf16.mxu0 0
        %2360 = vmatpush1.bf16.xpose.msra.mxu0 0
        %2361 = vmatprep.subr.bf16.mxu0 0
        %2362 = vmatpush1.bf16.xpose.msra.mxu0 0
        %2363 = vmatprep.subr.bf16.mxu0 0
        %2364 = vmatpush1.bf16.xpose.msra.mxu0 0
        %2365 = vmatprep.subr.bf16.mxu0 0
        %2366 = vmatpush1.bf16.xpose.msra.mxu0 0
        %2367 = vmatprep.subr.bf16.mxu0 0
        %2368 = vmatpush1.bf16.xpose.msra.mxu0 0
        %2369 = vmatprep.subr.bf16.mxu0 0
        %2370 = vmatpush1.bf16.xpose.msra.mxu0 0
        %2371 = vmatprep.subr.bf16.mxu0 0
        %2372 = vmatpush1.bf16.xpose.msra.mxu0 0
        %2373 = vmatprep.mubr.bf16.mxu0 0
        %2374 = vmatmul.mubr.bf16.gmra.mrb[0].mxu0 %v2339
        %v2375 = vpop.f32.mrb[0].mxu0
        %v2376 = vadd.f32 0.0, %v2375
        %v2377 = vpop.f32.mrb[0].mxu0
        %v2378 = vpop.f32.mrb[0].mxu0
        %v2379 = vpop.f32.mrb[0].mxu0
        %2380 = vdwg.mxu0
        %v2382 = vsel %vm1178, %v2281, 0
        %2384 = vmatprep.subr.bf16.mxu0 0
        %2385 = vmatpush1.bf16.xpose.msra.mxu0 %v2382
        %2386 = vmatprep.subr.bf16.mxu0 0
        %2387 = vmatpush1.bf16.xpose.msra.mxu0 0
        %2388 = vmatprep.subr.bf16.mxu0 0
        %2389 = vmatpush1.bf16.xpose.msra.mxu0 0
        %2390 = vmatprep.subr.bf16.mxu0 0
        %2391 = vmatpush1.bf16.xpose.msra.mxu0 0
        %2392 = vmatprep.subr.bf16.mxu0 0
        %2393 = vmatpush1.bf16.xpose.msra.mxu0 0
        %2394 = vmatprep.subr.bf16.mxu0 0
        %2395 = vmatpush1.bf16.xpose.msra.mxu0 0
        %2396 = vmatprep.subr.bf16.mxu0 0
        %2397 = vmatpush1.bf16.xpose.msra.mxu0 0
        %2398 = vmatprep.subr.bf16.mxu0 0
        %2399 = vmatpush1.bf16.xpose.msra.mxu0 0
        %2400 = vmatprep.subr.bf16.mxu0 0
        %2401 = vmatpush1.bf16.xpose.msra.mxu0 0
        %2402 = vmatprep.subr.bf16.mxu0 0
        %2403 = vmatpush1.bf16.xpose.msra.mxu0 0
        %2404 = vmatprep.subr.bf16.mxu0 0
        %2405 = vmatpush1.bf16.xpose.msra.mxu0 0
        %2406 = vmatprep.subr.bf16.mxu0 0
        %2407 = vmatpush1.bf16.xpose.msra.mxu0 0
        %2408 = vmatprep.subr.bf16.mxu0 0
        %2409 = vmatpush1.bf16.xpose.msra.mxu0 0
        %2410 = vmatprep.subr.bf16.mxu0 0
        %2411 = vmatpush1.bf16.xpose.msra.mxu0 0
        %2412 = vmatprep.subr.bf16.mxu0 0
        %2413 = vmatpush1.bf16.xpose.msra.mxu0 0
        %2414 = vmatprep.subr.bf16.mxu0 0
        %2415 = vmatpush1.bf16.xpose.msra.mxu0 0
        %2416 = vmatprep.mubr.bf16.mxu0 0
        %2417 = vmatmul.mubr.bf16.gmra.mrb[0].mxu0 %v2382
        %v2418 = vpop.f32.mrb[0].mxu0
        %v2419 = vadd.f32 0.0, %v2418
        %v2420 = vpop.f32.mrb[0].mxu0
        %v2421 = vpop.f32.mrb[0].mxu0
        %v2422 = vpop.f32.mrb[0].mxu0
        %2423 = vdwg.mxu0
        %v2425 = vsel %vm1178, %v2282, 0
        %2427 = vmatprep.subr.bf16.mxu0 0
        %2428 = vmatpush1.bf16.xpose.msra.mxu0 %v2425
        %2429 = vmatprep.subr.bf16.mxu0 0
        %2430 = vmatpush1.bf16.xpose.msra.mxu0 0
        %2431 = vmatprep.subr.bf16.mxu0 0
        %2432 = vmatpush1.bf16.xpose.msra.mxu0 0
        %2433 = vmatprep.subr.bf16.mxu0 0
        %2434 = vmatpush1.bf16.xpose.msra.mxu0 0
        %2435 = vmatprep.subr.bf16.mxu0 0
        %2436 = vmatpush1.bf16.xpose.msra.mxu0 0
        %2437 = vmatprep.subr.bf16.mxu0 0
        %2438 = vmatpush1.bf16.xpose.msra.mxu0 0
        %2439 = vmatprep.subr.bf16.mxu0 0
        %2440 = vmatpush1.bf16.xpose.msra.mxu0 0
        %2441 = vmatprep.subr.bf16.mxu0 0
        %2442 = vmatpush1.bf16.xpose.msra.mxu0 0
        %2443 = vmatprep.subr.bf16.mxu0 0
        %2444 = vmatpush1.bf16.xpose.msra.mxu0 0
        %2445 = vmatprep.subr.bf16.mxu0 0
        %2446 = vmatpush1.bf16.xpose.msra.mxu0 0
        %2447 = vmatprep.subr.bf16.mxu0 0
        %2448 = vmatpush1.bf16.xpose.msra.mxu0 0
        %2449 = vmatprep.subr.bf16.mxu0 0
        %2450 = vmatpush1.bf16.xpose.msra.mxu0 0
        %2451 = vmatprep.subr.bf16.mxu0 0
        %2452 = vmatpush1.bf16.xpose.msra.mxu0 0
        %2453 = vmatprep.subr.bf16.mxu0 0
        %2454 = vmatpush1.bf16.xpose.msra.mxu0 0
        %2455 = vmatprep.subr.bf16.mxu0 0
        %2456 = vmatpush1.bf16.xpose.msra.mxu0 0
        %2457 = vmatprep.subr.bf16.mxu0 0
        %2458 = vmatpush1.bf16.xpose.msra.mxu0 0
        %2459 = vmatprep.mubr.bf16.mxu0 0
        %2460 = vmatmul.mubr.bf16.gmra.mrb[0].mxu0 %v2425
        %v2461 = vpop.f32.mrb[0].mxu0
        %v2462 = vadd.f32 0.0, %v2461
        %v2463 = vpop.f32.mrb[0].mxu0
        %v2464 = vpop.f32.mrb[0].mxu0
        %v2465 = vpop.f32.mrb[0].mxu0
        %2466 = vdwg.mxu0
        %v2468 = vsel %vm1178, %v2283, 0
        %2470 = vmatprep.subr.bf16.mxu0 0
        %2471 = vmatpush1.bf16.xpose.msra.mxu0 %v2468
        %2472 = vmatprep.subr.bf16.mxu0 0
        %2473 = vmatpush1.bf16.xpose.msra.mxu0 0
        %2474 = vmatprep.subr.bf16.mxu0 0
        %2475 = vmatpush1.bf16.xpose.msra.mxu0 0
        %2476 = vmatprep.subr.bf16.mxu0 0
        %2477 = vmatpush1.bf16.xpose.msra.mxu0 0
        %2478 = vmatprep.subr.bf16.mxu0 0
        %2479 = vmatpush1.bf16.xpose.msra.mxu0 0
        %2480 = vmatprep.subr.bf16.mxu0 0
        %2481 = vmatpush1.bf16.xpose.msra.mxu0 0
        %2482 = vmatprep.subr.bf16.mxu0 0
        %2483 = vmatpush1.bf16.xpose.msra.mxu0 0
        %2484 = vmatprep.subr.bf16.mxu0 0
        %2485 = vmatpush1.bf16.xpose.msra.mxu0 0
        %2486 = vmatprep.subr.bf16.mxu0 0
        %2487 = vmatpush1.bf16.xpose.msra.mxu0 0
        %2488 = vmatprep.subr.bf16.mxu0 0
        %2489 = vmatpush1.bf16.xpose.msra.mxu0 0
        %2490 = vmatprep.subr.bf16.mxu0 0
        %2491 = vmatpush1.bf16.xpose.msra.mxu0 0
        %2492 = vmatprep.subr.bf16.mxu0 0
        %2493 = vmatpush1.bf16.xpose.msra.mxu0 0
        %2494 = vmatprep.subr.bf16.mxu0 0
        %2495 = vmatpush1.bf16.xpose.msra.mxu0 0
        %2496 = vmatprep.subr.bf16.mxu0 0
        %2497 = vmatpush1.bf16.xpose.msra.mxu0 0
        %2498 = vmatprep.subr.bf16.mxu0 0
        %2499 = vmatpush1.bf16.xpose.msra.mxu0 0
        %2500 = vmatprep.subr.bf16.mxu0 0
        %2501 = vmatpush1.bf16.xpose.msra.mxu0 0
        %2502 = vmatprep.mubr.bf16.mxu0 0
        %2503 = vmatmul.mubr.bf16.gmra.mrb[0].mxu0 %v2468
        %v2504 = vpop.f32.mrb[0].mxu0
        %v2505 = vadd.f32 0.0, %v2504
        %v2506 = vpop.f32.mrb[0].mxu0
        %v2507 = vpop.f32.mrb[0].mxu0
        %v2508 = vpop.f32.mrb[0].mxu0
        %2509 = vdwg.mxu0
        %v2511 = vsel %vm1178, %v2284, 0
        %2513 = vmatprep.subr.bf16.mxu0 0
        %2514 = vmatpush1.bf16.xpose.msra.mxu0 %v2511
        %2515 = vmatprep.subr.bf16.mxu0 0
        %2516 = vmatpush1.bf16.xpose.msra.mxu0 0
        %2517 = vmatprep.subr.bf16.mxu0 0
        %2518 = vmatpush1.bf16.xpose.msra.mxu0 0
        %2519 = vmatprep.subr.bf16.mxu0 0
        %2520 = vmatpush1.bf16.xpose.msra.mxu0 0
        %2521 = vmatprep.subr.bf16.mxu0 0
        %2522 = vmatpush1.bf16.xpose.msra.mxu0 0
        %2523 = vmatprep.subr.bf16.mxu0 0
        %2524 = vmatpush1.bf16.xpose.msra.mxu0 0
        %2525 = vmatprep.subr.bf16.mxu0 0
        %2526 = vmatpush1.bf16.xpose.msra.mxu0 0
        %2527 = vmatprep.subr.bf16.mxu0 0
        %2528 = vmatpush1.bf16.xpose.msra.mxu0 0
        %2529 = vmatprep.subr.bf16.mxu0 0
        %2530 = vmatpush1.bf16.xpose.msra.mxu0 0
        %2531 = vmatprep.subr.bf16.mxu0 0
        %2532 = vmatpush1.bf16.xpose.msra.mxu0 0
        %2533 = vmatprep.subr.bf16.mxu0 0
        %2534 = vmatpush1.bf16.xpose.msra.mxu0 0
        %2535 = vmatprep.subr.bf16.mxu0 0
        %2536 = vmatpush1.bf16.xpose.msra.mxu0 0
        %2537 = vmatprep.subr.bf16.mxu0 0
        %2538 = vmatpush1.bf16.xpose.msra.mxu0 0
        %2539 = vmatprep.subr.bf16.mxu0 0
        %2540 = vmatpush1.bf16.xpose.msra.mxu0 0
        %2541 = vmatprep.subr.bf16.mxu0 0
        %2542 = vmatpush1.bf16.xpose.msra.mxu0 0
        %2543 = vmatprep.subr.bf16.mxu0 0
        %2544 = vmatpush1.bf16.xpose.msra.mxu0 0
        %2545 = vmatprep.mubr.bf16.mxu0 0
        %2546 = vmatmul.mubr.bf16.gmra.mrb[0].mxu0 %v2511
        %v2547 = vpop.f32.mrb[0].mxu0
        %v2548 = vadd.f32 0.0, %v2547
        %v2549 = vpop.f32.mrb[0].mxu0
        %v2550 = vpop.f32.mrb[0].mxu0
        %v2551 = vpop.f32.mrb[0].mxu0
        %2552 = vdwg.mxu0
        %v2554 = vsel %vm1178, %v2285, 0
        %2556 = vmatprep.subr.bf16.mxu0 0
        %2557 = vmatpush1.bf16.xpose.msra.mxu0 %v2554
        %2558 = vmatprep.subr.bf16.mxu0 0
        %2559 = vmatpush1.bf16.xpose.msra.mxu0 0
        %2560 = vmatprep.subr.bf16.mxu0 0
        %2561 = vmatpush1.bf16.xpose.msra.mxu0 0
        %2562 = vmatprep.subr.bf16.mxu0 0
        %2563 = vmatpush1.bf16.xpose.msra.mxu0 0
        %2564 = vmatprep.subr.bf16.mxu0 0
        %2565 = vmatpush1.bf16.xpose.msra.mxu0 0
        %2566 = vmatprep.subr.bf16.mxu0 0
        %2567 = vmatpush1.bf16.xpose.msra.mxu0 0
        %2568 = vmatprep.subr.bf16.mxu0 0
        %2569 = vmatpush1.bf16.xpose.msra.mxu0 0
        %2570 = vmatprep.subr.bf16.mxu0 0
        %2571 = vmatpush1.bf16.xpose.msra.mxu0 0
        %2572 = vmatprep.subr.bf16.mxu0 0
        %2573 = vmatpush1.bf16.xpose.msra.mxu0 0
        %2574 = vmatprep.subr.bf16.mxu0 0
        %2575 = vmatpush1.bf16.xpose.msra.mxu0 0
        %2576 = vmatprep.subr.bf16.mxu0 0
        %2577 = vmatpush1.bf16.xpose.msra.mxu0 0
        %2578 = vmatprep.subr.bf16.mxu0 0
        %2579 = vmatpush1.bf16.xpose.msra.mxu0 0
        %2580 = vmatprep.subr.bf16.mxu0 0
        %2581 = vmatpush1.bf16.xpose.msra.mxu0 0
        %2582 = vmatprep.subr.bf16.mxu0 0
        %2583 = vmatpush1.bf16.xpose.msra.mxu0 0
        %2584 = vmatprep.subr.bf16.mxu0 0
        %2585 = vmatpush1.bf16.xpose.msra.mxu0 0
        %2586 = vmatprep.subr.bf16.mxu0 0
        %2587 = vmatpush1.bf16.xpose.msra.mxu0 0
        %2588 = vmatprep.mubr.bf16.mxu0 0
        %2589 = vmatmul.mubr.bf16.gmra.mrb[0].mxu0 %v2554
        %v2590 = vpop.f32.mrb[0].mxu0
        %v2591 = vadd.f32 0.0, %v2590
        %v2592 = vpop.f32.mrb[0].mxu0
        %v2593 = vpop.f32.mrb[0].mxu0
        %v2594 = vpop.f32.mrb[0].mxu0
        %2595 = vdwg.mxu0
        %v2597 = vsel %vm1178, %v2286, 0
        %2599 = vmatprep.subr.bf16.mxu0 0
        %2600 = vmatpush1.bf16.xpose.msra.mxu0 %v2597
        %2601 = vmatprep.subr.bf16.mxu0 0
        %2602 = vmatpush1.bf16.xpose.msra.mxu0 0
        %2603 = vmatprep.subr.bf16.mxu0 0
        %2604 = vmatpush1.bf16.xpose.msra.mxu0 0
        %2605 = vmatprep.subr.bf16.mxu0 0
        %2606 = vmatpush1.bf16.xpose.msra.mxu0 0
        %2607 = vmatprep.subr.bf16.mxu0 0
        %2608 = vmatpush1.bf16.xpose.msra.mxu0 0
        %2609 = vmatprep.subr.bf16.mxu0 0
        %2610 = vmatpush1.bf16.xpose.msra.mxu0 0
        %2611 = vmatprep.subr.bf16.mxu0 0
        %2612 = vmatpush1.bf16.xpose.msra.mxu0 0
        %2613 = vmatprep.subr.bf16.mxu0 0
        %2614 = vmatpush1.bf16.xpose.msra.mxu0 0
        %2615 = vmatprep.subr.bf16.mxu0 0
        %2616 = vmatpush1.bf16.xpose.msra.mxu0 0
        %2617 = vmatprep.subr.bf16.mxu0 0
        %2618 = vmatpush1.bf16.xpose.msra.mxu0 0
        %2619 = vmatprep.subr.bf16.mxu0 0
        %2620 = vmatpush1.bf16.xpose.msra.mxu0 0
        %2621 = vmatprep.subr.bf16.mxu0 0
        %2622 = vmatpush1.bf16.xpose.msra.mxu0 0
        %2623 = vmatprep.subr.bf16.mxu0 0
        %2624 = vmatpush1.bf16.xpose.msra.mxu0 0
        %2625 = vmatprep.subr.bf16.mxu0 0
        %2626 = vmatpush1.bf16.xpose.msra.mxu0 0
        %2627 = vmatprep.subr.bf16.mxu0 0
        %2628 = vmatpush1.bf16.xpose.msra.mxu0 0
        %2629 = vmatprep.subr.bf16.mxu0 0
        %2630 = vmatpush1.bf16.xpose.msra.mxu0 0
        %2631 = vmatprep.mubr.bf16.mxu0 0
        %2632 = vmatmul.mubr.bf16.gmra.mrb[0].mxu0 %v2597
        %v2633 = vpop.f32.mrb[0].mxu0
        %v2634 = vadd.f32 0.0, %v2633
        %v2635 = vpop.f32.mrb[0].mxu0
        %v2636 = vpop.f32.mrb[0].mxu0
        %v2637 = vpop.f32.mrb[0].mxu0
        %2638 = vdwg.mxu0
        %v2640 = vsel %vm1178, %v2287, 0
        %2642 = vmatprep.subr.bf16.mxu0 0
        %2643 = vmatpush1.bf16.xpose.msra.mxu0 %v2640
        %2644 = vmatprep.subr.bf16.mxu0 0
        %2645 = vmatpush1.bf16.xpose.msra.mxu0 0
        %2646 = vmatprep.subr.bf16.mxu0 0
        %2647 = vmatpush1.bf16.xpose.msra.mxu0 0
        %2648 = vmatprep.subr.bf16.mxu0 0
        %2649 = vmatpush1.bf16.xpose.msra.mxu0 0
        %2650 = vmatprep.subr.bf16.mxu0 0
        %2651 = vmatpush1.bf16.xpose.msra.mxu0 0
        %2652 = vmatprep.subr.bf16.mxu0 0
        %2653 = vmatpush1.bf16.xpose.msra.mxu0 0
        %2654 = vmatprep.subr.bf16.mxu0 0
        %2655 = vmatpush1.bf16.xpose.msra.mxu0 0
        %2656 = vmatprep.subr.bf16.mxu0 0
        %2657 = vmatpush1.bf16.xpose.msra.mxu0 0
        %2658 = vmatprep.subr.bf16.mxu0 0
        %2659 = vmatpush1.bf16.xpose.msra.mxu0 0
        %2660 = vmatprep.subr.bf16.mxu0 0
        %2661 = vmatpush1.bf16.xpose.msra.mxu0 0
        %2662 = vmatprep.subr.bf16.mxu0 0
        %2663 = vmatpush1.bf16.xpose.msra.mxu0 0
        %2664 = vmatprep.subr.bf16.mxu0 0
        %2665 = vmatpush1.bf16.xpose.msra.mxu0 0
        %2666 = vmatprep.subr.bf16.mxu0 0
        %2667 = vmatpush1.bf16.xpose.msra.mxu0 0
        %2668 = vmatprep.subr.bf16.mxu0 0
        %2669 = vmatpush1.bf16.xpose.msra.mxu0 0
        %2670 = vmatprep.subr.bf16.mxu0 0
        %2671 = vmatpush1.bf16.xpose.msra.mxu0 0
        %2672 = vmatprep.subr.bf16.mxu0 0
        %2673 = vmatpush1.bf16.xpose.msra.mxu0 0
        %2674 = vmatprep.mubr.bf16.mxu0 0
        %2675 = vmatmul.mubr.bf16.gmra.mrb[0].mxu0 %v2640
        %v2676 = vpop.f32.mrb[0].mxu0
        %v2677 = vadd.f32 0.0, %v2676
        %v2678 = vpop.f32.mrb[0].mxu0
        %v2679 = vpop.f32.mrb[0].mxu0
        %v2680 = vpop.f32.mrb[0].mxu0
        %2681 = vdwg.mxu0
        %v2683 = vsel %vm1178, %v2288, 0
        %2685 = vmatprep.subr.bf16.mxu0 0
        %2686 = vmatpush1.bf16.xpose.msra.mxu0 %v2683
        %2687 = vmatprep.subr.bf16.mxu0 0
        %2688 = vmatpush1.bf16.xpose.msra.mxu0 0
        %2689 = vmatprep.subr.bf16.mxu0 0
        %2690 = vmatpush1.bf16.xpose.msra.mxu0 0
        %2691 = vmatprep.subr.bf16.mxu0 0
        %2692 = vmatpush1.bf16.xpose.msra.mxu0 0
        %2693 = vmatprep.subr.bf16.mxu0 0
        %2694 = vmatpush1.bf16.xpose.msra.mxu0 0
        %2695 = vmatprep.subr.bf16.mxu0 0
        %2696 = vmatpush1.bf16.xpose.msra.mxu0 0
        %2697 = vmatprep.subr.bf16.mxu0 0
        %2698 = vmatpush1.bf16.xpose.msra.mxu0 0
        %2699 = vmatprep.subr.bf16.mxu0 0
        %2700 = vmatpush1.bf16.xpose.msra.mxu0 0
        %2701 = vmatprep.subr.bf16.mxu0 0
        %2702 = vmatpush1.bf16.xpose.msra.mxu0 0
        %2703 = vmatprep.subr.bf16.mxu0 0
        %2704 = vmatpush1.bf16.xpose.msra.mxu0 0
        %2705 = vmatprep.subr.bf16.mxu0 0
        %2706 = vmatpush1.bf16.xpose.msra.mxu0 0
        %2707 = vmatprep.subr.bf16.mxu0 0
        %2708 = vmatpush1.bf16.xpose.msra.mxu0 0
        %2709 = vmatprep.subr.bf16.mxu0 0
        %2710 = vmatpush1.bf16.xpose.msra.mxu0 0
        %2711 = vmatprep.subr.bf16.mxu0 0
        %2712 = vmatpush1.bf16.xpose.msra.mxu0 0
        %2713 = vmatprep.subr.bf16.mxu0 0
        %2714 = vmatpush1.bf16.xpose.msra.mxu0 0
        %2715 = vmatprep.subr.bf16.mxu0 0
        %2716 = vmatpush1.bf16.xpose.msra.mxu0 0
        %2717 = vmatprep.mubr.bf16.mxu0 0
        %2718 = vmatmul.mubr.bf16.gmra.mrb[0].mxu0 %v2683
        %v2719 = vpop.f32.mrb[0].mxu0
        %v2720 = vadd.f32 0.0, %v2719
        %v2721 = vpop.f32.mrb[0].mxu0
        %v2722 = vpop.f32.mrb[0].mxu0
        %v2723 = vpop.f32.mrb[0].mxu0
        %2724 = vdwg.mxu0
        %v2726 = vsel %vm1178, %v2289, 0
        %2728 = vmatprep.subr.bf16.mxu0 0
        %2729 = vmatpush1.bf16.xpose.msra.mxu0 %v2726
        %2730 = vmatprep.subr.bf16.mxu0 0
        %2731 = vmatpush1.bf16.xpose.msra.mxu0 0
        %2732 = vmatprep.subr.bf16.mxu0 0
        %2733 = vmatpush1.bf16.xpose.msra.mxu0 0
        %2734 = vmatprep.subr.bf16.mxu0 0
        %2735 = vmatpush1.bf16.xpose.msra.mxu0 0
        %2736 = vmatprep.subr.bf16.mxu0 0
        %2737 = vmatpush1.bf16.xpose.msra.mxu0 0
        %2738 = vmatprep.subr.bf16.mxu0 0
        %2739 = vmatpush1.bf16.xpose.msra.mxu0 0
        %2740 = vmatprep.subr.bf16.mxu0 0
        %2741 = vmatpush1.bf16.xpose.msra.mxu0 0
        %2742 = vmatprep.subr.bf16.mxu0 0
        %2743 = vmatpush1.bf16.xpose.msra.mxu0 0
        %2744 = vmatprep.subr.bf16.mxu0 0
        %2745 = vmatpush1.bf16.xpose.msra.mxu0 0
        %2746 = vmatprep.subr.bf16.mxu0 0
        %2747 = vmatpush1.bf16.xpose.msra.mxu0 0
        %2748 = vmatprep.subr.bf16.mxu0 0
        %2749 = vmatpush1.bf16.xpose.msra.mxu0 0
        %2750 = vmatprep.subr.bf16.mxu0 0
        %2751 = vmatpush1.bf16.xpose.msra.mxu0 0
        %2752 = vmatprep.subr.bf16.mxu0 0
        %2753 = vmatpush1.bf16.xpose.msra.mxu0 0
        %2754 = vmatprep.subr.bf16.mxu0 0
        %2755 = vmatpush1.bf16.xpose.msra.mxu0 0
        %2756 = vmatprep.subr.bf16.mxu0 0
        %2757 = vmatpush1.bf16.xpose.msra.mxu0 0
        %2758 = vmatprep.subr.bf16.mxu0 0
        %2759 = vmatpush1.bf16.xpose.msra.mxu0 0
        %2760 = vmatprep.mubr.bf16.mxu0 0
        %2761 = vmatmul.mubr.bf16.gmra.mrb[0].mxu0 %v2726
        %v2762 = vpop.f32.mrb[0].mxu0
        %v2763 = vadd.f32 0.0, %v2762
        %v2764 = vpop.f32.mrb[0].mxu0
        %v2765 = vpop.f32.mrb[0].mxu0
        %v2766 = vpop.f32.mrb[0].mxu0
        %2767 = vdwg.mxu0
        %v2769 = vsel %vm1178, %v2290, 0
        %2771 = vmatprep.subr.bf16.mxu0 0
        %2772 = vmatpush1.bf16.xpose.msra.mxu0 %v2769
        %2773 = vmatprep.subr.bf16.mxu0 0
        %2774 = vmatpush1.bf16.xpose.msra.mxu0 0
        %2775 = vmatprep.subr.bf16.mxu0 0
        %2776 = vmatpush1.bf16.xpose.msra.mxu0 0
        %2777 = vmatprep.subr.bf16.mxu0 0
        %2778 = vmatpush1.bf16.xpose.msra.mxu0 0
        %2779 = vmatprep.subr.bf16.mxu0 0
        %2780 = vmatpush1.bf16.xpose.msra.mxu0 0
        %2781 = vmatprep.subr.bf16.mxu0 0
        %2782 = vmatpush1.bf16.xpose.msra.mxu0 0
        %2783 = vmatprep.subr.bf16.mxu0 0
        %2784 = vmatpush1.bf16.xpose.msra.mxu0 0
        %2785 = vmatprep.subr.bf16.mxu0 0
        %2786 = vmatpush1.bf16.xpose.msra.mxu0 0
        %2787 = vmatprep.subr.bf16.mxu0 0
        %2788 = vmatpush1.bf16.xpose.msra.mxu0 0
        %2789 = vmatprep.subr.bf16.mxu0 0
        %2790 = vmatpush1.bf16.xpose.msra.mxu0 0
        %2791 = vmatprep.subr.bf16.mxu0 0
        %2792 = vmatpush1.bf16.xpose.msra.mxu0 0
        %2793 = vmatprep.subr.bf16.mxu0 0
        %2794 = vmatpush1.bf16.xpose.msra.mxu0 0
        %2795 = vmatprep.subr.bf16.mxu0 0
        %2796 = vmatpush1.bf16.xpose.msra.mxu0 0
        %2797 = vmatprep.subr.bf16.mxu0 0
        %2798 = vmatpush1.bf16.xpose.msra.mxu0 0
        %2799 = vmatprep.subr.bf16.mxu0 0
        %2800 = vmatpush1.bf16.xpose.msra.mxu0 0
        %2801 = vmatprep.subr.bf16.mxu0 0
        %2802 = vmatpush1.bf16.xpose.msra.mxu0 0
        %2803 = vmatprep.mubr.bf16.mxu0 0
        %2804 = vmatmul.mubr.bf16.gmra.mrb[0].mxu0 %v2769
        %v2805 = vpop.f32.mrb[0].mxu0
        %v2806 = vadd.f32 0.0, %v2805
        %v2807 = vpop.f32.mrb[0].mxu0
        %v2808 = vpop.f32.mrb[0].mxu0
        %v2809 = vpop.f32.mrb[0].mxu0
        %2810 = vdwg.mxu0
        %v2812 = vsel %vm1178, %v2291, 0
        %2814 = vmatprep.subr.bf16.mxu0 0
        %2815 = vmatpush1.bf16.xpose.msra.mxu0 %v2812
        %2816 = vmatprep.subr.bf16.mxu0 0
        %2817 = vmatpush1.bf16.xpose.msra.mxu0 0
        %2818 = vmatprep.subr.bf16.mxu0 0
        %2819 = vmatpush1.bf16.xpose.msra.mxu0 0
        %2820 = vmatprep.subr.bf16.mxu0 0
        %2821 = vmatpush1.bf16.xpose.msra.mxu0 0
        %2822 = vmatprep.subr.bf16.mxu0 0
        %2823 = vmatpush1.bf16.xpose.msra.mxu0 0
        %2824 = vmatprep.subr.bf16.mxu0 0
        %2825 = vmatpush1.bf16.xpose.msra.mxu0 0
        %2826 = vmatprep.subr.bf16.mxu0 0
        %2827 = vmatpush1.bf16.xpose.msra.mxu0 0
        %2828 = vmatprep.subr.bf16.mxu0 0
        %2829 = vmatpush1.bf16.xpose.msra.mxu0 0
        %2830 = vmatprep.subr.bf16.mxu0 0
        %2831 = vmatpush1.bf16.xpose.msra.mxu0 0
        %2832 = vmatprep.subr.bf16.mxu0 0
        %2833 = vmatpush1.bf16.xpose.msra.mxu0 0
        %2834 = vmatprep.subr.bf16.mxu0 0
        %2835 = vmatpush1.bf16.xpose.msra.mxu0 0
        %2836 = vmatprep.subr.bf16.mxu0 0
        %2837 = vmatpush1.bf16.xpose.msra.mxu0 0
        %2838 = vmatprep.subr.bf16.mxu0 0
        %2839 = vmatpush1.bf16.xpose.msra.mxu0 0
        %2840 = vmatprep.subr.bf16.mxu0 0
        %2841 = vmatpush1.bf16.xpose.msra.mxu0 0
        %2842 = vmatprep.subr.bf16.mxu0 0
        %2843 = vmatpush1.bf16.xpose.msra.mxu0 0
        %2844 = vmatprep.subr.bf16.mxu0 0
        %2845 = vmatpush1.bf16.xpose.msra.mxu0 0
        %2846 = vmatprep.mubr.bf16.mxu0 0
        %2847 = vmatmul.mubr.bf16.gmra.mrb[0].mxu0 %v2812
        %v2848 = vpop.f32.mrb[0].mxu0
        %v2849 = vadd.f32 0.0, %v2848
        %v2850 = vpop.f32.mrb[0].mxu0
        %v2851 = vpop.f32.mrb[0].mxu0
        %v2852 = vpop.f32.mrb[0].mxu0
        %2853 = vdwg.mxu0
        %v2855 = vsel %vm1178, %v2292, 0
        %2857 = vmatprep.subr.bf16.mxu0 0
        %2858 = vmatpush1.bf16.xpose.msra.mxu0 %v2855
        %2859 = vmatprep.subr.bf16.mxu0 0
        %2860 = vmatpush1.bf16.xpose.msra.mxu0 0
        %2861 = vmatprep.subr.bf16.mxu0 0
        %2862 = vmatpush1.bf16.xpose.msra.mxu0 0
        %2863 = vmatprep.subr.bf16.mxu0 0
        %2864 = vmatpush1.bf16.xpose.msra.mxu0 0
        %2865 = vmatprep.subr.bf16.mxu0 0
        %2866 = vmatpush1.bf16.xpose.msra.mxu0 0
        %2867 = vmatprep.subr.bf16.mxu0 0
        %2868 = vmatpush1.bf16.xpose.msra.mxu0 0
        %2869 = vmatprep.subr.bf16.mxu0 0
        %2870 = vmatpush1.bf16.xpose.msra.mxu0 0
        %2871 = vmatprep.subr.bf16.mxu0 0
        %2872 = vmatpush1.bf16.xpose.msra.mxu0 0
        %2873 = vmatprep.subr.bf16.mxu0 0
        %2874 = vmatpush1.bf16.xpose.msra.mxu0 0
        %2875 = vmatprep.subr.bf16.mxu0 0
        %2876 = vmatpush1.bf16.xpose.msra.mxu0 0
        %2877 = vmatprep.subr.bf16.mxu0 0
        %2878 = vmatpush1.bf16.xpose.msra.mxu0 0
        %2879 = vmatprep.subr.bf16.mxu0 0
        %2880 = vmatpush1.bf16.xpose.msra.mxu0 0
        %2881 = vmatprep.subr.bf16.mxu0 0
        %2882 = vmatpush1.bf16.xpose.msra.mxu0 0
        %2883 = vmatprep.subr.bf16.mxu0 0
        %2884 = vmatpush1.bf16.xpose.msra.mxu0 0
        %2885 = vmatprep.subr.bf16.mxu0 0
        %2886 = vmatpush1.bf16.xpose.msra.mxu0 0
        %2887 = vmatprep.subr.bf16.mxu0 0
        %2888 = vmatpush1.bf16.xpose.msra.mxu0 0
        %2889 = vmatprep.mubr.bf16.mxu0 0
        %2890 = vmatmul.mubr.bf16.gmra.mrb[0].mxu0 %v2855
        %v2891 = vpop.f32.mrb[0].mxu0
        %v2892 = vadd.f32 0.0, %v2891
        %v2893 = vpop.f32.mrb[0].mxu0
        %v2894 = vpop.f32.mrb[0].mxu0
        %v2895 = vpop.f32.mrb[0].mxu0
        %2896 = vdwg.mxu0
        %v2898 = vsel %vm1178, %v2293, 0
        %2900 = vmatprep.subr.bf16.mxu0 0
        %2901 = vmatpush1.bf16.xpose.msra.mxu0 %v2898
        %2902 = vmatprep.subr.bf16.mxu0 0
        %2903 = vmatpush1.bf16.xpose.msra.mxu0 0
        %2904 = vmatprep.subr.bf16.mxu0 0
        %2905 = vmatpush1.bf16.xpose.msra.mxu0 0
        %2906 = vmatprep.subr.bf16.mxu0 0
        %2907 = vmatpush1.bf16.xpose.msra.mxu0 0
        %2908 = vmatprep.subr.bf16.mxu0 0
        %2909 = vmatpush1.bf16.xpose.msra.mxu0 0
        %2910 = vmatprep.subr.bf16.mxu0 0
        %2911 = vmatpush1.bf16.xpose.msra.mxu0 0
        %2912 = vmatprep.subr.bf16.mxu0 0
        %2913 = vmatpush1.bf16.xpose.msra.mxu0 0
        %2914 = vmatprep.subr.bf16.mxu0 0
        %2915 = vmatpush1.bf16.xpose.msra.mxu0 0
        %2916 = vmatprep.subr.bf16.mxu0 0
        %2917 = vmatpush1.bf16.xpose.msra.mxu0 0
        %2918 = vmatprep.subr.bf16.mxu0 0
        %2919 = vmatpush1.bf16.xpose.msra.mxu0 0
        %2920 = vmatprep.subr.bf16.mxu0 0
        %2921 = vmatpush1.bf16.xpose.msra.mxu0 0
        %2922 = vmatprep.subr.bf16.mxu0 0
        %2923 = vmatpush1.bf16.xpose.msra.mxu0 0
        %2924 = vmatprep.subr.bf16.mxu0 0
        %2925 = vmatpush1.bf16.xpose.msra.mxu0 0
        %2926 = vmatprep.subr.bf16.mxu0 0
        %2927 = vmatpush1.bf16.xpose.msra.mxu0 0
        %2928 = vmatprep.subr.bf16.mxu0 0
        %2929 = vmatpush1.bf16.xpose.msra.mxu0 0
        %2930 = vmatprep.subr.bf16.mxu0 0
        %2931 = vmatpush1.bf16.xpose.msra.mxu0 0
        %2932 = vmatprep.mubr.bf16.mxu0 0
        %2933 = vmatmul.mubr.bf16.gmra.mrb[0].mxu0 %v2898
        %v2934 = vpop.f32.mrb[0].mxu0
        %v2935 = vadd.f32 0.0, %v2934
        %v2936 = vpop.f32.mrb[0].mxu0
        %v2937 = vpop.f32.mrb[0].mxu0
        %v2938 = vpop.f32.mrb[0].mxu0
        %2939 = vdwg.mxu0
        %v2941 = vsel %vm1178, %v2294, 0
        %2943 = vmatprep.subr.bf16.mxu0 0
        %2944 = vmatpush1.bf16.xpose.msra.mxu0 %v2941
        %2945 = vmatprep.subr.bf16.mxu0 0
        %2946 = vmatpush1.bf16.xpose.msra.mxu0 0
        %2947 = vmatprep.subr.bf16.mxu0 0
        %2948 = vmatpush1.bf16.xpose.msra.mxu0 0
        %2949 = vmatprep.subr.bf16.mxu0 0
        %2950 = vmatpush1.bf16.xpose.msra.mxu0 0
        %2951 = vmatprep.subr.bf16.mxu0 0
        %2952 = vmatpush1.bf16.xpose.msra.mxu0 0
        %2953 = vmatprep.subr.bf16.mxu0 0
        %2954 = vmatpush1.bf16.xpose.msra.mxu0 0
        %2955 = vmatprep.subr.bf16.mxu0 0
        %2956 = vmatpush1.bf16.xpose.msra.mxu0 0
        %2957 = vmatprep.subr.bf16.mxu0 0
        %2958 = vmatpush1.bf16.xpose.msra.mxu0 0
        %2959 = vmatprep.subr.bf16.mxu0 0
        %2960 = vmatpush1.bf16.xpose.msra.mxu0 0
        %2961 = vmatprep.subr.bf16.mxu0 0
        %2962 = vmatpush1.bf16.xpose.msra.mxu0 0
        %2963 = vmatprep.subr.bf16.mxu0 0
        %2964 = vmatpush1.bf16.xpose.msra.mxu0 0
        %2965 = vmatprep.subr.bf16.mxu0 0
        %2966 = vmatpush1.bf16.xpose.msra.mxu0 0
        %2967 = vmatprep.subr.bf16.mxu0 0
        %2968 = vmatpush1.bf16.xpose.msra.mxu0 0
        %2969 = vmatprep.subr.bf16.mxu0 0
        %2970 = vmatpush1.bf16.xpose.msra.mxu0 0
        %2971 = vmatprep.subr.bf16.mxu0 0
        %2972 = vmatpush1.bf16.xpose.msra.mxu0 0
        %2973 = vmatprep.subr.bf16.mxu0 0
        %2974 = vmatpush1.bf16.xpose.msra.mxu0 0
        %2975 = vmatprep.mubr.bf16.mxu0 0
        %2976 = vmatmul.mubr.bf16.gmra.mrb[0].mxu0 %v2941
        %v2977 = vpop.f32.mrb[0].mxu0
        %v2978 = vadd.f32 0.0, %v2977
        %v2979 = vpop.f32.mrb[0].mxu0
        %v2980 = vpop.f32.mrb[0].mxu0
        %v2981 = vpop.f32.mrb[0].mxu0
        %2982 = vdwg.mxu0
        %v2983 = vmul.f32 %v2333, 0.17677669
        %v2984 = vmul.f32 %v2376, 0.17677669
        %v2985 = vmul.f32 %v2419, 0.17677669
        %v2986 = vmul.f32 %v2462, 0.17677669
        %v2987 = vmul.f32 %v2505, 0.17677669
        %v2988 = vmul.f32 %v2548, 0.17677669
        %v2989 = vmul.f32 %v2591, 0.17677669
        %v2990 = vmul.f32 %v2634, 0.17677669
        %v2991 = vmul.f32 %v2677, 0.17677669
        %v2992 = vmul.f32 %v2720, 0.17677669
        %v2993 = vmul.f32 %v2763, 0.17677669
        %v2994 = vmul.f32 %v2806, 0.17677669
        %v2995 = vmul.f32 %v2849, 0.17677669
        %v2996 = vmul.f32 %v2892, 0.17677669
        %v2997 = vmul.f32 %v2935, 0.17677669
        %v2998 = vmul.f32 %v2978, 0.17677669
        %v2999 = vcombine.low %v2983, %v2985
        %v3000 = vcombine.high %v2983, %v2985
        %v3002 = vunpack.c.l.s4 1983009808
        %v3003 = vunpack.c.0.s8 %v3002
        %v3004 = vlaneseq
        %v3005 = vshrl.u32 %v3004, 7
        %v3006 = vsub.s32 %v3003, %v3005
        %v3007 = vrot.slane %v2999, %v3006
        %v3009 = vunpack.c.l.s4 1983009808
        %v3010 = vunpack.c.0.s8 %v3009
        %v3011 = vlaneseq
        %v3012 = vshrl.u32 %v3011, 7
        %v3013 = vsub.s32 %v3010, %v3012
        %v3014 = vrot.slane %v3000, %v3013
        %v3015 = vcombine.low %v2984, %v2986
        %v3016 = vcombine.high %v2984, %v2986
        %v3018 = vunpack.c.l.s4 1983009808
        %v3019 = vunpack.c.0.s8 %v3018
        %v3020 = vlaneseq
        %v3021 = vshrl.u32 %v3020, 7
        %v3022 = vsub.s32 %v3019, %v3021
        %v3023 = vrot.slane %v3015, %v3022
        %v3025 = vunpack.c.l.s4 1983009808
        %v3026 = vunpack.c.0.s8 %v3025
        %v3027 = vlaneseq
        %v3028 = vshrl.u32 %v3027, 7
        %v3029 = vsub.s32 %v3026, %v3028
        %v3030 = vrot.slane %v3016, %v3029
        %v3031 = vcombine.low %v2987, %v2989
        %v3032 = vcombine.high %v2987, %v2989
        %v3034 = vunpack.c.l.s4 1983009808
        %v3035 = vunpack.c.0.s8 %v3034
        %v3036 = vlaneseq
        %v3037 = vshrl.u32 %v3036, 7
        %v3038 = vsub.s32 %v3035, %v3037
        %v3039 = vrot.slane %v3031, %v3038
        %v3041 = vunpack.c.l.s4 1983009808
        %v3042 = vunpack.c.0.s8 %v3041
        %v3043 = vlaneseq
        %v3044 = vshrl.u32 %v3043, 7
        %v3045 = vsub.s32 %v3042, %v3044
        %v3046 = vrot.slane %v3032, %v3045
        %v3047 = vcombine.low %v2988, %v2990
        %v3048 = vcombine.high %v2988, %v2990
        %v3050 = vunpack.c.l.s4 1983009808
        %v3051 = vunpack.c.0.s8 %v3050
        %v3052 = vlaneseq
        %v3053 = vshrl.u32 %v3052, 7
        %v3054 = vsub.s32 %v3051, %v3053
        %v3055 = vrot.slane %v3047, %v3054
        %v3057 = vunpack.c.l.s4 1983009808
        %v3058 = vunpack.c.0.s8 %v3057
        %v3059 = vlaneseq
        %v3060 = vshrl.u32 %v3059, 7
        %v3061 = vsub.s32 %v3058, %v3060
        %v3062 = vrot.slane %v3048, %v3061
        %v3063 = vcombine.low %v3007, %v3023
        %v3064 = vcombine.high %v3007, %v3023
        %v3066 = vunpack.c.l.s4 1934713408
        %v3067 = vunpack.c.0.s8 %v3066
        %v3068 = vlaneseq
        %v3069 = vshrl.u32 %v3068, 7
        %v3070 = vsub.s32 %v3067, %v3069
        %v3071 = vrot.slane %v3063, %v3070
        %v3073 = vunpack.c.l.s4 1934713408
        %v3074 = vunpack.c.0.s8 %v3073
        %v3075 = vlaneseq
        %v3076 = vshrl.u32 %v3075, 7
        %v3077 = vsub.s32 %v3074, %v3076
        %v3078 = vrot.slane %v3064, %v3077
        %v3079 = vcombine.low %v3014, %v3030
        %v3080 = vcombine.high %v3014, %v3030
        %v3082 = vunpack.c.l.s4 1934713408
        %v3083 = vunpack.c.0.s8 %v3082
        %v3084 = vlaneseq
        %v3085 = vshrl.u32 %v3084, 7
        %v3086 = vsub.s32 %v3083, %v3085
        %v3087 = vrot.slane %v3079, %v3086
        %v3089 = vunpack.c.l.s4 1934713408
        %v3090 = vunpack.c.0.s8 %v3089
        %v3091 = vlaneseq
        %v3092 = vshrl.u32 %v3091, 7
        %v3093 = vsub.s32 %v3090, %v3092
        %v3094 = vrot.slane %v3080, %v3093
        %v3095 = vcombine.low %v3039, %v3055
        %v3096 = vcombine.high %v3039, %v3055
        %v3098 = vunpack.c.l.s4 1934713408
        %v3099 = vunpack.c.0.s8 %v3098
        %v3100 = vlaneseq
        %v3101 = vshrl.u32 %v3100, 7
        %v3102 = vsub.s32 %v3099, %v3101
        %v3103 = vrot.slane %v3095, %v3102
        %v3105 = vunpack.c.l.s4 1934713408
        %v3106 = vunpack.c.0.s8 %v3105
        %v3107 = vlaneseq
        %v3108 = vshrl.u32 %v3107, 7
        %v3109 = vsub.s32 %v3106, %v3108
        %v3110 = vrot.slane %v3096, %v3109
        %v3111 = vcombine.low %v3046, %v3062
        %v3112 = vcombine.high %v3046, %v3062
        %v3114 = vunpack.c.l.s4 1934713408
        %v3115 = vunpack.c.0.s8 %v3114
        %v3116 = vlaneseq
        %v3117 = vshrl.u32 %v3116, 7
        %v3118 = vsub.s32 %v3115, %v3117
        %v3119 = vrot.slane %v3111, %v3118
        %v3121 = vunpack.c.l.s4 1934713408
        %v3122 = vunpack.c.0.s8 %v3121
        %v3123 = vlaneseq
        %v3124 = vshrl.u32 %v3123, 7
        %v3125 = vsub.s32 %v3122, %v3124
        %v3126 = vrot.slane %v3112, %v3125
        %v3127 = vcombine.low %v3071, %v3103
        %v3128 = vcombine.high %v3071, %v3103
        %v3129 = vcombine.low %v3078, %v3110
        %v3130 = vcombine.high %v3078, %v3110
        %v3131 = vcombine.low %v3087, %v3119
        %v3132 = vcombine.high %v3087, %v3119
        %v3133 = vcombine.low %v3094, %v3126
        %v3134 = vcombine.high %v3094, %v3126
        %v3135 = vcombine.low %v2991, %v2993
        %v3136 = vcombine.high %v2991, %v2993
        %v3138 = vunpack.c.l.s4 1983009808
        %v3139 = vunpack.c.0.s8 %v3138
        %v3140 = vlaneseq
        %v3141 = vshrl.u32 %v3140, 7
        %v3142 = vsub.s32 %v3139, %v3141
        %v3143 = vrot.slane %v3135, %v3142
        %v3145 = vunpack.c.l.s4 1983009808
        %v3146 = vunpack.c.0.s8 %v3145
        %v3147 = vlaneseq
        %v3148 = vshrl.u32 %v3147, 7
        %v3149 = vsub.s32 %v3146, %v3148
        %v3150 = vrot.slane %v3136, %v3149
        %v3151 = vcombine.low %v2992, %v2994
        %v3152 = vcombine.high %v2992, %v2994
        %v3154 = vunpack.c.l.s4 1983009808
        %v3155 = vunpack.c.0.s8 %v3154
        %v3156 = vlaneseq
        %v3157 = vshrl.u32 %v3156, 7
        %v3158 = vsub.s32 %v3155, %v3157
        %v3159 = vrot.slane %v3151, %v3158
        %v3161 = vunpack.c.l.s4 1983009808
        %v3162 = vunpack.c.0.s8 %v3161
        %v3163 = vlaneseq
        %v3164 = vshrl.u32 %v3163, 7
        %v3165 = vsub.s32 %v3162, %v3164
        %v3166 = vrot.slane %v3152, %v3165
        %v3167 = vcombine.low %v2995, %v2997
        %v3168 = vcombine.high %v2995, %v2997
        %v3170 = vunpack.c.l.s4 1983009808
        %v3171 = vunpack.c.0.s8 %v3170
        %v3172 = vlaneseq
        %v3173 = vshrl.u32 %v3172, 7
        %v3174 = vsub.s32 %v3171, %v3173
        %v3175 = vrot.slane %v3167, %v3174
        %v3177 = vunpack.c.l.s4 1983009808
        %v3178 = vunpack.c.0.s8 %v3177
        %v3179 = vlaneseq
        %v3180 = vshrl.u32 %v3179, 7
        %v3181 = vsub.s32 %v3178, %v3180
        %v3182 = vrot.slane %v3168, %v3181
        %v3183 = vcombine.low %v2996, %v2998
        %v3184 = vcombine.high %v2996, %v2998
        %v3186 = vunpack.c.l.s4 1983009808
        %v3187 = vunpack.c.0.s8 %v3186
        %v3188 = vlaneseq
        %v3189 = vshrl.u32 %v3188, 7
        %v3190 = vsub.s32 %v3187, %v3189
        %v3191 = vrot.slane %v3183, %v3190
        %v3193 = vunpack.c.l.s4 1983009808
        %v3194 = vunpack.c.0.s8 %v3193
        %v3195 = vlaneseq
        %v3196 = vshrl.u32 %v3195, 7
        %v3197 = vsub.s32 %v3194, %v3196
        %v3198 = vrot.slane %v3184, %v3197
        %v3199 = vcombine.low %v3143, %v3159
        %v3200 = vcombine.high %v3143, %v3159
        %v3202 = vunpack.c.l.s4 1934713408
        %v3203 = vunpack.c.0.s8 %v3202
        %v3204 = vlaneseq
        %v3205 = vshrl.u32 %v3204, 7
        %v3206 = vsub.s32 %v3203, %v3205
        %v3207 = vrot.slane %v3199, %v3206
        %v3209 = vunpack.c.l.s4 1934713408
        %v3210 = vunpack.c.0.s8 %v3209
        %v3211 = vlaneseq
        %v3212 = vshrl.u32 %v3211, 7
        %v3213 = vsub.s32 %v3210, %v3212
        %v3214 = vrot.slane %v3200, %v3213
        %v3215 = vcombine.low %v3150, %v3166
        %v3216 = vcombine.high %v3150, %v3166
        %v3218 = vunpack.c.l.s4 1934713408
        %v3219 = vunpack.c.0.s8 %v3218
        %v3220 = vlaneseq
        %v3221 = vshrl.u32 %v3220, 7
        %v3222 = vsub.s32 %v3219, %v3221
        %v3223 = vrot.slane %v3215, %v3222
        %v3225 = vunpack.c.l.s4 1934713408
        %v3226 = vunpack.c.0.s8 %v3225
        %v3227 = vlaneseq
        %v3228 = vshrl.u32 %v3227, 7
        %v3229 = vsub.s32 %v3226, %v3228
        %v3230 = vrot.slane %v3216, %v3229
        %v3231 = vcombine.low %v3175, %v3191
        %v3232 = vcombine.high %v3175, %v3191
        %v3234 = vunpack.c.l.s4 1934713408
        %v3235 = vunpack.c.0.s8 %v3234
        %v3236 = vlaneseq
        %v3237 = vshrl.u32 %v3236, 7
        %v3238 = vsub.s32 %v3235, %v3237
        %v3239 = vrot.slane %v3231, %v3238
        %v3241 = vunpack.c.l.s4 1934713408
        %v3242 = vunpack.c.0.s8 %v3241
        %v3243 = vlaneseq
        %v3244 = vshrl.u32 %v3243, 7
        %v3245 = vsub.s32 %v3242, %v3244
        %v3246 = vrot.slane %v3232, %v3245
        %v3247 = vcombine.low %v3182, %v3198
        %v3248 = vcombine.high %v3182, %v3198
        %v3250 = vunpack.c.l.s4 1934713408
        %v3251 = vunpack.c.0.s8 %v3250
        %v3252 = vlaneseq
        %v3253 = vshrl.u32 %v3252, 7
        %v3254 = vsub.s32 %v3251, %v3253
        %v3255 = vrot.slane %v3247, %v3254
        %v3257 = vunpack.c.l.s4 1934713408
        %v3258 = vunpack.c.0.s8 %v3257
        %v3259 = vlaneseq
        %v3260 = vshrl.u32 %v3259, 7
        %v3261 = vsub.s32 %v3258, %v3260
        %v3262 = vrot.slane %v3248, %v3261
        %v3263 = vcombine.low %v3207, %v3239
        %v3264 = vcombine.high %v3207, %v3239
        %v3265 = vcombine.low %v3214, %v3246
        %v3266 = vcombine.high %v3214, %v3246
        %v3267 = vcombine.low %v3223, %v3255
        %v3268 = vcombine.high %v3223, %v3255
        %v3269 = vcombine.low %v3230, %v3262
        %v3270 = vcombine.high %v3230, %v3262
        %3273 = vrot.lane.b32.xlu0 %v3128, 8
        %v3274 = vpop.permute.xlu0 %3273
        %3275 = vrot.lane.b32.xlu0 %v3264, 8
        %v3276 = vpop.permute.xlu0 %3275
        %3281 = vrot.lane.b32.xlu0 %v3129, 16
        %v3282 = vpop.permute.xlu0 %3281
        %3283 = vrot.lane.b32.xlu0 %v3265, 16
        %v3284 = vpop.permute.xlu0 %3283
        %3289 = vrot.lane.b32.xlu0 %v3130, 24
        %v3290 = vpop.permute.xlu0 %3289
        %3291 = vrot.lane.b32.xlu0 %v3266, 24
        %v3292 = vpop.permute.xlu0 %3291
        %3297 = vrot.lane.b32.xlu0 %v3131, 32
        %v3298 = vpop.permute.xlu0 %3297
        %3299 = vrot.lane.b32.xlu0 %v3267, 32
        %v3300 = vpop.permute.xlu0 %3299
        %3305 = vrot.lane.b32.xlu0 %v3132, 40
        %v3306 = vpop.permute.xlu0 %3305
        %3307 = vrot.lane.b32.xlu0 %v3268, 40
        %v3308 = vpop.permute.xlu0 %3307
        %3313 = vrot.lane.b32.xlu0 %v3133, 48
        %v3314 = vpop.permute.xlu0 %3313
        %3315 = vrot.lane.b32.xlu0 %v3269, 48
        %v3316 = vpop.permute.xlu0 %3315
        %3321 = vrot.lane.b32.xlu0 %v3134, 56
        %v3322 = vpop.permute.xlu0 %3321
        %3323 = vrot.lane.b32.xlu0 %v3270, 56
        %v3324 = vpop.permute.xlu0 %3323
        %v3327 = vsel %vm396, %v3127, %v3274
        %v3328 = vsel %vm396, %v3263, %v3276
        %vm3329 = vcmask 130048
        %v3330 = vsel %vm3329, %v3327, %v3282
        %v3331 = vsel %vm3329, %v3328, %v3284
        %vm3332 = vcmask 195584
        %v3333 = vsel %vm3332, %v3330, %v3290
        %v3334 = vsel %vm3332, %v3331, %v3292
        %v3335 = vsel %vm1178, %v3333, %v3298
        %v3336 = vsel %vm1178, %v3334, %v3300
        %vm3337 = vcmask 326656
        %v3338 = vsel %vm3337, %v3335, %v3306
        %v3339 = vsel %vm3337, %v3336, %v3308
        %vm3340 = vcmask 392192
        %v3341 = vsel %vm3340, %v3338, %v3314
        %v3342 = vsel %vm3340, %v3339, %v3316
        %vm3343 = vcmask 457728
        %v3344 = vsel %vm3343, %v3341, %v3322
        %v3345 = vsel %vm3343, %v3342, %v3324
        %vm3346 = vcmask 523264
        %3347 = vst.msk [vmem:[%s307] sm:$0xff] %vm3346, %v3344
        %3348 = vst.msk [vmem:[%s307 + $0x8] sm:$0xff] %vm3346, %v3345
        %v3349 = vsel %vm1178, %v2263, 0.0
        %v3350 = vrot.slane %v3349, 4
        %v3351 = vadd.f32 %v3349, %v3350
        %v3352 = vrot.slane %v3351, 2
        %v3353 = vadd.f32 %v3351, %v3352
        %v3354 = vrot.slane %v3353, 1
        %v3355 = vadd.f32 %v3353, %v3354
        %v3356 = vsel %vm1178, %v2264, 0.0
        %v3357 = vrot.slane %v3356, 4
        %v3358 = vadd.f32 %v3356, %v3357
        %v3359 = vrot.slane %v3358, 2
        %v3360 = vadd.f32 %v3358, %v3359
        %v3361 = vrot.slane %v3360, 1
        %v3362 = vadd.f32 %v3360, %v3361
        %v3363 = vsel %vm1178, %v2265, 0.0
        %v3364 = vrot.slane %v3363, 4
        %v3365 = vadd.f32 %v3363, %v3364
        %v3366 = vrot.slane %v3365, 2
        %v3367 = vadd.f32 %v3365, %v3366
        %v3368 = vrot.slane %v3367, 1
        %v3369 = vadd.f32 %v3367, %v3368
        %v3370 = vsel %vm1178, %v2266, 0.0
        %v3371 = vrot.slane %v3370, 4
        %v3372 = vadd.f32 %v3370, %v3371
        %v3373 = vrot.slane %v3372, 2
        %v3374 = vadd.f32 %v3372, %v3373
        %v3375 = vrot.slane %v3374, 1
        %v3376 = vadd.f32 %v3374, %v3375
        %v3377 = vsel %vm1178, %v2267, 0.0
        %v3378 = vrot.slane %v3377, 4
        %v3379 = vadd.f32 %v3377, %v3378
        %v3380 = vrot.slane %v3379, 2
        %v3381 = vadd.f32 %v3379, %v3380
        %v3382 = vrot.slane %v3381, 1
        %v3383 = vadd.f32 %v3381, %v3382
        %v3384 = vsel %vm1178, %v2268, 0.0
        %v3385 = vrot.slane %v3384, 4
        %v3386 = vadd.f32 %v3384, %v3385
        %v3387 = vrot.slane %v3386, 2
        %v3388 = vadd.f32 %v3386, %v3387
        %v3389 = vrot.slane %v3388, 1
        %v3390 = vadd.f32 %v3388, %v3389
        %v3391 = vsel %vm1178, %v2269, 0.0
        %v3392 = vrot.slane %v3391, 4
        %v3393 = vadd.f32 %v3391, %v3392
        %v3394 = vrot.slane %v3393, 2
        %v3395 = vadd.f32 %v3393, %v3394
        %v3396 = vrot.slane %v3395, 1
        %v3397 = vadd.f32 %v3395, %v3396
        %v3398 = vsel %vm1178, %v2270, 0.0
        %v3399 = vrot.slane %v3398, 4
        %v3400 = vadd.f32 %v3398, %v3399
        %v3401 = vrot.slane %v3400, 2
        %v3402 = vadd.f32 %v3400, %v3401
        %v3403 = vrot.slane %v3402, 1
        %v3404 = vadd.f32 %v3402, %v3403
        %v3405 = vsel %vm1178, %v2271, 0.0
        %v3406 = vrot.slane %v3405, 4
        %v3407 = vadd.f32 %v3405, %v3406
        %v3408 = vrot.slane %v3407, 2
        %v3409 = vadd.f32 %v3407, %v3408
        %v3410 = vrot.slane %v3409, 1
        %v3411 = vadd.f32 %v3409, %v3410
        %v3412 = vsel %vm1178, %v2272, 0.0
        %v3413 = vrot.slane %v3412, 4
        %v3414 = vadd.f32 %v3412, %v3413
        %v3415 = vrot.slane %v3414, 2
        %v3416 = vadd.f32 %v3414, %v3415
        %v3417 = vrot.slane %v3416, 1
        %v3418 = vadd.f32 %v3416, %v3417
        %v3419 = vsel %vm1178, %v2273, 0.0
        %v3420 = vrot.slane %v3419, 4
        %v3421 = vadd.f32 %v3419, %v3420
        %v3422 = vrot.slane %v3421, 2
        %v3423 = vadd.f32 %v3421, %v3422
        %v3424 = vrot.slane %v3423, 1
        %v3425 = vadd.f32 %v3423, %v3424
        %v3426 = vsel %vm1178, %v2274, 0.0
        %v3427 = vrot.slane %v3426, 4
        %v3428 = vadd.f32 %v3426, %v3427
        %v3429 = vrot.slane %v3428, 2
        %v3430 = vadd.f32 %v3428, %v3429
        %v3431 = vrot.slane %v3430, 1
        %v3432 = vadd.f32 %v3430, %v3431
        %v3433 = vsel %vm1178, %v2275, 0.0
        %v3434 = vrot.slane %v3433, 4
        %v3435 = vadd.f32 %v3433, %v3434
        %v3436 = vrot.slane %v3435, 2
        %v3437 = vadd.f32 %v3435, %v3436
        %v3438 = vrot.slane %v3437, 1
        %v3439 = vadd.f32 %v3437, %v3438
        %v3440 = vsel %vm1178, %v2276, 0.0
        %v3441 = vrot.slane %v3440, 4
        %v3442 = vadd.f32 %v3440, %v3441
        %v3443 = vrot.slane %v3442, 2
        %v3444 = vadd.f32 %v3442, %v3443
        %v3445 = vrot.slane %v3444, 1
        %v3446 = vadd.f32 %v3444, %v3445
        %v3447 = vsel %vm1178, %v2277, 0.0
        %v3448 = vrot.slane %v3447, 4
        %v3449 = vadd.f32 %v3447, %v3448
        %v3450 = vrot.slane %v3449, 2
        %v3451 = vadd.f32 %v3449, %v3450
        %v3452 = vrot.slane %v3451, 1
        %v3453 = vadd.f32 %v3451, %v3452
        %v3454 = vsel %vm1178, %v2278, 0.0
        %v3455 = vrot.slane %v3454, 4
        %v3456 = vadd.f32 %v3454, %v3455
        %v3457 = vrot.slane %v3456, 2
        %v3458 = vadd.f32 %v3456, %v3457
        %v3459 = vrot.slane %v3458, 1
        %v3460 = vadd.f32 %v3458, %v3459
        %v3461 = vrcp.pop 8.0
        %v3462 = vmul.f32 %v3355, %v3461
        %v3463 = vmul.f32 %v3362, %v3461
        %v3464 = vmul.f32 %v3369, %v3461
        %v3465 = vmul.f32 %v3376, %v3461
        %v3466 = vmul.f32 %v3383, %v3461
        %v3467 = vmul.f32 %v3390, %v3461
        %v3468 = vmul.f32 %v3397, %v3461
        %v3469 = vmul.f32 %v3404, %v3461
        %v3470 = vmul.f32 %v3411, %v3461
        %v3471 = vmul.f32 %v3418, %v3461
        %v3472 = vmul.f32 %v3425, %v3461
        %v3473 = vmul.f32 %v3432, %v3461
        %v3474 = vmul.f32 %v3439, %v3461
        %v3475 = vmul.f32 %v3446, %v3461
        %v3476 = vmul.f32 %v3453, %v3461
        %v3477 = vmul.f32 %v3460, %v3461
        %v3478 = vpack.c.bf16 %v3462, %v3462
        %v3479 = vpack.c.bf16 %v3463, %v3463
        %v3480 = vpack.c.bf16 %v3464, %v3464
        %v3481 = vpack.c.bf16 %v3465, %v3465
        %v3482 = vpack.c.bf16 %v3466, %v3466
        %v3483 = vpack.c.bf16 %v3467, %v3467
        %v3484 = vpack.c.bf16 %v3468, %v3468
        %v3485 = vpack.c.bf16 %v3469, %v3469
        %v3486 = vpack.c.bf16 %v3470, %v3470
        %v3487 = vpack.c.bf16 %v3471, %v3471
        %v3488 = vpack.c.bf16 %v3472, %v3472
        %v3489 = vpack.c.bf16 %v3473, %v3473
        %v3490 = vpack.c.bf16 %v3474, %v3474
        %v3491 = vpack.c.bf16 %v3475, %v3475
        %v3492 = vpack.c.bf16 %v3476, %v3476
        %v3493 = vpack.c.bf16 %v3477, %v3477
        %s3494 = scalar_lea.vmem [#allocation2], 64
        %v3495 = vld [vmem:[%s3494] sm:$0xf]
        %v3496 = vld [vmem:[%s3494 + $0x4] sm:$0xf]
        %v3497 = vld [vmem:[%s3494 + $0x8] sm:$0xf]
        %v3498 = vld [vmem:[%s3494 + $0xc] sm:$0xf]
        %v3499 = vlaneseq
        %v3500 = vshrl.u32 %v3499, 7
        %v3501 = vsub.s32 0, %v3500
        %v3502 = vrot.slane %v363, %v3501
        %v3519 = vunpack.c.l.b16 %v3478
        %v3520 = vunpack.c.l.b16 %v3479
        %v3521 = vunpack.c.l.b16 %v3480
        %v3522 = vunpack.c.l.b16 %v3481
        %v3523 = vunpack.c.l.b16 %v3482
        %v3524 = vunpack.c.l.b16 %v3483
        %v3525 = vunpack.c.l.b16 %v3484
        %v3526 = vunpack.c.l.b16 %v3485
        %v3527 = vunpack.c.l.b16 %v3486
        %v3528 = vunpack.c.l.b16 %v3487
        %v3529 = vunpack.c.l.b16 %v3488
        %v3530 = vunpack.c.l.b16 %v3489
        %v3531 = vunpack.c.l.b16 %v3490
        %v3532 = vunpack.c.l.b16 %v3491
        %v3533 = vunpack.c.l.b16 %v3492
        %v3534 = vunpack.c.l.b16 %v3493
        %vm3535 = vcmask 1041409
        %v3536 = vsel %vm3535, %v3520, %v3519
        %vm3537 = vcmask 1042434
        %v3538 = vsel %vm3537, %v3521, %v3536
        %vm3539 = vcmask 1043459
        %v3540 = vsel %vm3539, %v3522, %v3538
        %vm3541 = vcmask 1044484
        %v3542 = vsel %vm3541, %v3523, %v3540
        %vm3543 = vcmask 1045509
        %v3544 = vsel %vm3543, %v3524, %v3542
        %vm3545 = vcmask 1046534
        %v3546 = vsel %vm3545, %v3525, %v3544
        %vm3547 = vcmask 1047559
        %v3548 = vsel %vm3547, %v3526, %v3546
        %v3549 = vsel %vm3535, %v3528, %v3527
        %v3550 = vsel %vm3537, %v3529, %v3549
        %v3551 = vsel %vm3539, %v3530, %v3550
        %v3552 = vsel %vm3541, %v3531, %v3551
        %v3553 = vsel %vm3543, %v3532, %v3552
        %v3554 = vsel %vm3545, %v3533, %v3553
        %v3555 = vsel %vm3547, %v3534, %v3554
        %v3556 = vpack.c.b16 %v3555, %v3548
        %v3561 = vunpack.c.l.b16 %v3495
        %v3562 = vunpack.c.l.b16 %v3496
        %v3563 = vunpack.c.l.b16 %v3497
        %v3564 = vunpack.c.l.b16 %v3498
        %v3565 = vpack.c.b16 %v3562, %v3561
        %v3566 = vpack.c.b16 %v3564, %v3563
        %v3570 = vsel %vm1178, %v3556, 0
        %3572 = vmatprep.subr.bf16.mxu0 0
        %3573 = vmatpush1.bf16.msra.mxu0 %v3565
        %3574 = vmatprep.subr.bf16.mxu0 0
        %3575 = vmatpush1.bf16.msra.mxu0 %v3566
        %3576 = vmatprep.subr.bf16.mxu0 0
        %3577 = vmatpush1.bf16.msra.mxu0 0
        %3578 = vmatprep.subr.bf16.mxu0 0
        %3579 = vmatpush1.bf16.msra.mxu0 0
        %3580 = vmatprep.subr.bf16.mxu0 0
        %3581 = vmatpush1.bf16.msra.mxu0 0
        %3582 = vmatprep.subr.bf16.mxu0 0
        %3583 = vmatpush1.bf16.msra.mxu0 0
        %3584 = vmatprep.subr.bf16.mxu0 0
        %3585 = vmatpush1.bf16.msra.mxu0 0
        %3586 = vmatprep.subr.bf16.mxu0 0
        %3587 = vmatpush1.bf16.msra.mxu0 0
        %3588 = vmatprep.subr.bf16.mxu0 0
        %3589 = vmatpush1.bf16.msra.mxu0 0
        %3590 = vmatprep.subr.bf16.mxu0 0
        %3591 = vmatpush1.bf16.msra.mxu0 0
        %3592 = vmatprep.subr.bf16.mxu0 0
        %3593 = vmatpush1.bf16.msra.mxu0 0
        %3594 = vmatprep.subr.bf16.mxu0 0
        %3595 = vmatpush1.bf16.msra.mxu0 0
        %3596 = vmatprep.subr.bf16.mxu0 0
        %3597 = vmatpush1.bf16.msra.mxu0 0
        %3598 = vmatprep.subr.bf16.mxu0 0
        %3599 = vmatpush1.bf16.msra.mxu0 0
        %3600 = vmatprep.subr.bf16.mxu0 0
        %3601 = vmatpush1.bf16.msra.mxu0 0
        %3602 = vmatprep.subr.bf16.mxu0 0
        %3603 = vmatpush1.bf16.msra.mxu0 0
        %3604 = vmatprep.mubr.bf16.mxu0 0
        %3605 = vmatmul.mubr.bf16.gmra.mrb[0].mxu0 %v3570
        %v3606 = vpop.f32.mrb[0].mxu0
        %v3607 = vadd.f32 %v3502, %v3606
        %v3608 = vpop.f32.mrb[0].mxu0
        %v3609 = vpop.f32.mrb[0].mxu0
        %v3610 = vadd.f32 %v3502, %v3609
        %v3611 = vpop.f32.mrb[0].mxu0
        %3612 = vdwg.mxu0
        %v3613 = vsel %vm1178, %v3607, 0.0
        %3614 = vadd.xlane.f32.xlu0 %v3613
        %v3615 = vpop.xlane.xlu0 %3614
        %v3616 = vsel %vm1178, %v3610, 0.0
        %3617 = vadd.xlane.f32.xlu0 %v3616
        %v3618 = vpop.xlane.xlu0 %3617
        %v3619 = vmul.f32 %v3615, %v1348
        %v3620 = vmul.f32 %v3618, %v1348
        %v3621 = vsub.f32 %v3607, %v3619
        %v3622 = vsub.f32 %v3610, %v3620
        %v3623 = vmul.f32 %v3621, %v3621
        %v3624 = vmul.f32 %v3622, %v3622
        %v3625 = vsel %vm1178, %v3623, 0.0
        %3626 = vadd.xlane.f32.xlu0 %v3625
        %v3627 = vpop.xlane.xlu0 %3626
        %v3628 = vsel %vm1178, %v3624, 0.0
        %3629 = vadd.xlane.f32.xlu0 %v3628
        %v3630 = vpop.xlane.xlu0 %3629
        %v3631 = vmul.f32 %v3627, %v1348
        %v3632 = vmul.f32 %v3630, %v1348
        %v3633 = vadd.f32 %v3631, 1e-05
        %v3634 = vadd.f32 %v3632, 1e-05
        %v3635 = vrsqrt.pop %v3633
        %v3636 = vrsqrt.pop %v3634
        %v3637 = vmul.f32 %v3621, %v3635
        %v3638 = vmul.f32 %v3622, %v3636
        %v3639 = vlaneseq
        %v3640 = vshrl.u32 %v3639, 7
        %v3641 = vsub.s32 1, %v3640
        %v3642 = vrot.slane %v363, %v3641
        %v3643 = vmul.f32 %v3637, %v3642
        %v3644 = vmul.f32 %v3638, %v3642
        %v3645 = vlaneseq
        %v3646 = vshrl.u32 %v3645, 7
        %v3647 = vsub.s32 2, %v3646
        %v3648 = vrot.slane %v363, %v3647
        %v3649 = vadd.f32 %v3643, %v3648
        %v3650 = vadd.f32 %v3644, %v3648
        %v3651 = vmax.f32 %v3649, 0.0
        %v3652 = vmax.f32 %v3650, 0.0
        %s3653 = scalar_lea.vmem [#allocation2], 80
        %v3654 = vld [vmem:[%s3653] sm:$0xf]
        %v3655 = vld [vmem:[%s3653 + $0x4] sm:$0xf]
        %v3656 = vld [vmem:[%s3653 + $0x8] sm:$0xf]
        %v3657 = vld [vmem:[%s3653 + $0xc] sm:$0xf]
        %v3658 = vlaneseq
        %v3659 = vshrl.u32 %v3658, 7
        %v3660 = vsub.s32 3, %v3659
        %v3661 = vrot.slane %v363, %v3660
        %v3666 = vunpack.c.l.b16 %v3654
        %v3667 = vunpack.c.l.b16 %v3655
        %v3668 = vunpack.c.l.b16 %v3656
        %v3669 = vunpack.c.l.b16 %v3657
        %v3670 = vpack.c.b16 %v3667, %v3666
        %v3671 = vpack.c.b16 %v3669, %v3668
        %3674 = vmatprep.subr.bf16.mxu0 0
        %3675 = vmatpush1.bf16.msra.mxu0 %v3670
        %3676 = vmatprep.subr.bf16.mxu0 0
        %3677 = vmatpush1.bf16.msra.mxu0 %v3671
        %3678 = vmatprep.subr.bf16.mxu0 0
        %3679 = vmatpush1.bf16.msra.mxu0 0
        %3680 = vmatprep.subr.bf16.mxu0 0
        %3681 = vmatpush1.bf16.msra.mxu0 0
        %3682 = vmatprep.subr.bf16.mxu0 0
        %3683 = vmatpush1.bf16.msra.mxu0 0
        %3684 = vmatprep.subr.bf16.mxu0 0
        %3685 = vmatpush1.bf16.msra.mxu0 0
        %3686 = vmatprep.subr.bf16.mxu0 0
        %3687 = vmatpush1.bf16.msra.mxu0 0
        %3688 = vmatprep.subr.bf16.mxu0 0
        %3689 = vmatpush1.bf16.msra.mxu0 0
        %3690 = vmatprep.subr.bf16.mxu0 0
        %3691 = vmatpush1.bf16.msra.mxu0 0
        %3692 = vmatprep.subr.bf16.mxu0 0
        %3693 = vmatpush1.bf16.msra.mxu0 0
        %3694 = vmatprep.subr.bf16.mxu0 0
        %3695 = vmatpush1.bf16.msra.mxu0 0
        %3696 = vmatprep.subr.bf16.mxu0 0
        %3697 = vmatpush1.bf16.msra.mxu0 0
        %3698 = vmatprep.subr.bf16.mxu0 0
        %3699 = vmatpush1.bf16.msra.mxu0 0
        %3700 = vmatprep.subr.bf16.mxu0 0
        %3701 = vmatpush1.bf16.msra.mxu0 0
        %3702 = vmatprep.subr.bf16.mxu0 0
        %3703 = vmatpush1.bf16.msra.mxu0 0
        %3704 = vmatprep.subr.bf16.mxu0 0
        %3705 = vmatpush1.bf16.msra.mxu0 0
        %3706 = vmatprep.mubr.bf16.mxu0 0
        %3707 = vmatmul.mubr.bf16.gmra.mrb[0].mxu0 %v3570
        %v3708 = vpop.f32.mrb[0].mxu0
        %v3709 = vadd.f32 %v3661, %v3708
        %v3710 = vpop.f32.mrb[0].mxu0
        %v3711 = vpop.f32.mrb[0].mxu0
        %v3712 = vadd.f32 %v3661, %v3711
        %v3713 = vpop.f32.mrb[0].mxu0
        %3714 = vdwg.mxu0
        %v3715 = vsel %vm1178, %v3709, 0.0
        %3716 = vadd.xlane.f32.xlu0 %v3715
        %v3717 = vpop.xlane.xlu0 %3716
        %v3718 = vsel %vm1178, %v3712, 0.0
        %3719 = vadd.xlane.f32.xlu0 %v3718
        %v3720 = vpop.xlane.xlu0 %3719
        %v3721 = vmul.f32 %v3717, %v1348
        %v3722 = vmul.f32 %v3720, %v1348
        %v3723 = vsub.f32 %v3709, %v3721
        %v3724 = vsub.f32 %v3712, %v3722
        %v3725 = vmul.f32 %v3723, %v3723
        %v3726 = vmul.f32 %v3724, %v3724
        %v3727 = vsel %vm1178, %v3725, 0.0
        %3728 = vadd.xlane.f32.xlu0 %v3727
        %v3729 = vpop.xlane.xlu0 %3728
        %v3730 = vsel %vm1178, %v3726, 0.0
        %3731 = vadd.xlane.f32.xlu0 %v3730
        %v3732 = vpop.xlane.xlu0 %3731
        %v3733 = vmul.f32 %v3729, %v1348
        %v3734 = vmul.f32 %v3732, %v1348
        %v3735 = vadd.f32 %v3733, 1e-05
        %v3736 = vadd.f32 %v3734, 1e-05
        %v3737 = vrsqrt.pop %v3735
        %v3738 = vrsqrt.pop %v3736
        %v3739 = vmul.f32 %v3723, %v3737
        %v3740 = vmul.f32 %v3724, %v3738
        %v3741 = vlaneseq
        %v3742 = vshrl.u32 %v3741, 7
        %v3743 = vsub.s32 4, %v3742
        %v3744 = vrot.slane %v363, %v3743
        %v3745 = vmul.f32 %v3739, %v3744
        %v3746 = vmul.f32 %v3740, %v3744
        %v3747 = vlaneseq
        %v3748 = vshrl.u32 %v3747, 7
        %v3749 = vsub.s32 5, %v3748
        %v3750 = vrot.slane %v363, %v3749
        %v3751 = vadd.f32 %v3745, %v3750
        %v3752 = vadd.f32 %v3746, %v3750
        %v3753 = vmax.f32 %v3751, 0.0
        %v3754 = vmax.f32 %v3752, 0.0
        %3757 = vrot.lane.b32.xlu0 %v3753, 32
        %v3758 = vpop.permute.xlu0 %3757
        %3759 = vrot.lane.b32.xlu0 %v3754, 32
        %v3760 = vpop.permute.xlu0 %3759
        %v3763 = vsel %vm1178, %v3651, %v3758
        %v3764 = vsel %vm1178, %v3652, %v3760
        %v3765 = vpack.c.bf16 %v3764, %v3763
        %v3766 = vld [vmem:[%s4] sm:$0xf]
        %v3767 = vld [vmem:[%s4 + $0x4] sm:$0xf]
        %v3768 = vld [vmem:[%s4 + $0x8] sm:$0xf]
        %v3769 = vld [vmem:[%s4 + $0xc] sm:$0xf]
        %v3770 = vld [vmem:[%s4 + $0x10] sm:$0xf]
        %v3771 = vld [vmem:[%s4 + $0x14] sm:$0xf]
        %v3772 = vld [vmem:[%s4 + $0x18] sm:$0xf]
        %v3773 = vld [vmem:[%s4 + $0x1c] sm:$0xf]
        %v3774 = vld [vmem:[%s5] sm:$0x1]
        %v3776 = vlaneseq
        %v3777 = vshrl.u32 %v3776, 7
        %v3778 = vsub.s32 0, %v3777
        %v3779 = vrot.slane %v3774, %v3778
        %v3789 = vunpack.c.l.b16 %v3766
        %v3790 = vunpack.c.l.b16 %v3767
        %v3791 = vunpack.c.l.b16 %v3768
        %v3792 = vunpack.c.l.b16 %v3769
        %v3793 = vunpack.c.l.b16 %v3770
        %v3794 = vunpack.c.l.b16 %v3771
        %v3795 = vunpack.c.l.b16 %v3772
        %v3796 = vunpack.c.l.b16 %v3773
        %v3797 = vpack.c.b16 %v3790, %v3789
        %v3798 = vpack.c.b16 %v3792, %v3791
        %v3799 = vpack.c.b16 %v3794, %v3793
        %v3800 = vpack.c.b16 %v3796, %v3795
        %v3806 = vsel %vm3346, %v3765, 0
        %3808 = vmatprep.subr.bf16.mxu0 0
        %3809 = vmatpush1.bf16.msra.mxu0 %v3797
        %3810 = vmatprep.subr.bf16.mxu0 0
        %3811 = vmatpush1.bf16.msra.mxu0 %v3798
        %3812 = vmatprep.subr.bf16.mxu0 0
        %3813 = vmatpush1.bf16.msra.mxu0 %v3799
        %3814 = vmatprep.subr.bf16.mxu0 0
        %3815 = vmatpush1.bf16.msra.mxu0 %v3800
        %3816 = vmatprep.subr.bf16.mxu0 0
        %3817 = vmatpush1.bf16.msra.mxu0 0
        %3818 = vmatprep.subr.bf16.mxu0 0
        %3819 = vmatpush1.bf16.msra.mxu0 0
        %3820 = vmatprep.subr.bf16.mxu0 0
        %3821 = vmatpush1.bf16.msra.mxu0 0
        %3822 = vmatprep.subr.bf16.mxu0 0
        %3823 = vmatpush1.bf16.msra.mxu0 0
        %3824 = vmatprep.subr.bf16.mxu0 0
        %3825 = vmatpush1.bf16.msra.mxu0 0
        %3826 = vmatprep.subr.bf16.mxu0 0
        %3827 = vmatpush1.bf16.msra.mxu0 0
        %3828 = vmatprep.subr.bf16.mxu0 0
        %3829 = vmatpush1.bf16.msra.mxu0 0
        %3830 = vmatprep.subr.bf16.mxu0 0
        %3831 = vmatpush1.bf16.msra.mxu0 0
        %3832 = vmatprep.subr.bf16.mxu0 0
        %3833 = vmatpush1.bf16.msra.mxu0 0
        %3834 = vmatprep.subr.bf16.mxu0 0
        %3835 = vmatpush1.bf16.msra.mxu0 0
        %3836 = vmatprep.subr.bf16.mxu0 0
        %3837 = vmatpush1.bf16.msra.mxu0 0
        %3838 = vmatprep.subr.bf16.mxu0 0
        %3839 = vmatpush1.bf16.msra.mxu0 0
        %3840 = vmatprep.mubr.bf16.mxu0 0
        %3841 = vmatmul.mubr.bf16.gmra.mrb[0].mxu0 %v3806
        %v3842 = vpop.f32.mrb[0].mxu0
        %v3843 = vadd.f32 %v3779, %v3842
        %v3844 = vpop.f32.mrb[0].mxu0
        %v3845 = vpop.f32.mrb[0].mxu0
        %v3846 = vadd.f32 %v3779, %v3845
        %v3847 = vpop.f32.mrb[0].mxu0
        %3848 = vdwg.mxu0
        %3849 = vst [vmem:[%s314] sm:$0xff] %v3843
        %3850 = vst [vmem:[%s314 + $0x8] sm:$0xff] %v3846
        %s3851 = sand.u32 %s170, 1
        %s3852 = scalar_lea.sflag [#allocation4], %s3851
        %s3853 = sand.u32 %s170, 1
        %s3854 = smul.addr %s3853, 16
        %s3855 = scalar_lea.vmem [#allocation5], %s3854
        %s3856 = sand.u32 %s196, 1
        %s3857 = scalar_lea.sflag [#allocation7], %s3856
        %s3858 = sand.u32 %s196, 1
        %s3859 = smul.addr %s3858, 16
        %s3860 = scalar_lea.vmem [#allocation6], %s3859
        // Predicated region
        $region49: #{tpu_custom_call.1} parent=43 // pred_check
          %p3861 = pneg %p180
        $region50: #{tpu_custom_call.1} parent=43 // pred_check_branch
          %3863 = sbr.rel (%p3861) target = $region52
        $region51: #{tpu_custom_call.1} parent=43 // pred_region
          %s3864 = smul.u32 2, %s26
          %s3866 = ssub.s32 256, 256
          %3867 = vsyncadd %s3852, %s3866
          %s3868 = smul.addr %s3864, 128
          %s3869 = scalar_lea.hbm %s6, %s3868
          %s3870 = sshll.u32 %s3855, 4
          %s3871 = int_to_ptr.vmem [resolvable:$true] %s3870
          %3876 = dma.vmem_to_hbm [thread:$0]  %s3871, 256, %s3869, %s3852, 128, 128, 8
        $region52: #{tpu_custom_call.1} parent=43 // pred_fallthru
          _
        // Predicated region
        $region53: #{tpu_custom_call.1} parent=43 // pred_check
          %p3877 = pneg %p206
        $region54: #{tpu_custom_call.1} parent=43 // pred_check_branch
          %3879 = sbr.rel (%p3877) target = $region56
        $region55: #{tpu_custom_call.1} parent=43 // pred_region
          %s3880 = smul.u32 2, %s26
          %s3882 = ssub.s32 256, 256
          %3883 = vsyncadd %s3857, %s3882
          %s3884 = smul.addr %s3880, 128
          %s3885 = scalar_lea.hbm %s7, %s3884
          %s3886 = sshll.u32 %s3860, 4
          %s3887 = int_to_ptr.vmem [resolvable:$true] %s3886
          %3892 = dma.vmem_to_hbm [thread:$0]  %s3887, 256, %s3885, %s3857, 128, 128, 8
        $region56: #{tpu_custom_call.1} parent=43 // pred_fallthru
          _
      $region44: #{tpu_custom_call.1} parent=5 // pred_fallthru
        _
      %p3893 = scmp.le.s32.totalorder 2, %s21
      // Predicated region
      $region57: #{tpu_custom_call.1} parent=5 // pred_check
        %p3894 = pneg %p3893
      $region58: #{tpu_custom_call.1} parent=5 // pred_check_branch
        %3896 = sbr.rel (%p3894) target = $region60
      $region59: #{tpu_custom_call.1} parent=5 // pred_region
        %s3897 = ssub.s32 %s21, 2
        // Predicated region
        $region61: #{tpu_custom_call.1} parent=59 // pred_check
          %p3898 = pneg %p186
        $region62: #{tpu_custom_call.1} parent=59 // pred_check_branch
          %3900 = sbr.rel (%p3898) target = $region64
        $region63: #{tpu_custom_call.1} parent=59 // pred_region
          %s3901 = sand.u32 %s171, 1
          %s3902 = scalar_lea.sflag [#allocation4], %s3901
          %s3903 = sand.u32 %s171, 1
          %s3904 = smul.addr %s3903, 16
          %s3905 = scalar_lea.vmem [#allocation5], %s3904
          %3906 = dma.done %s3902, 256
        $region64: #{tpu_custom_call.1} parent=59 // pred_fallthru
          _
        // Predicated region
        $region65: #{tpu_custom_call.1} parent=59 // pred_check
          %p3907 = pneg %p212
        $region66: #{tpu_custom_call.1} parent=59 // pred_check_branch
          %3909 = sbr.rel (%p3907) target = $region68
        $region67: #{tpu_custom_call.1} parent=59 // pred_region
          %s3910 = sand.u32 %s197, 1
          %s3911 = scalar_lea.sflag [#allocation7], %s3910
          %s3912 = sand.u32 %s197, 1
          %s3913 = smul.addr %s3912, 16
          %s3914 = scalar_lea.vmem [#allocation6], %s3913
          %3915 = dma.done %s3911, 256
        $region68: #{tpu_custom_call.1} parent=59 // pred_fallthru
          _
      $region60: #{tpu_custom_call.1} parent=5 // pred_fallthru
        _
    $region6: #{tpu_custom_call.1} parent=1 // loop_footer
      %s25 = sadd.s32 1, %s21
    $region7: #{tpu_custom_call.1} parent=1 // loop_footer_branch
      %20 = sbr.rel target = $region3
    $region8: #{tpu_custom_call.1} parent=1 // loop_exit
      _
    %3916 = vsyncpa [#allocation3], 1
    %s3917 = scalar_lea.sflag [#allocation3], 1
    %3918 = vsyncpa %s3917, 1
    %3919 = vsyncpa [#allocation4], 1
    %s3920 = scalar_lea.sflag [#allocation4], 1
    %3921 = vsyncpa %s3920, 1
    %3922 = vsyncpa [#allocation7], 1
    %s3923 = scalar_lea.sflag [#allocation7], 1
    %3924 = vsyncpa %s3923, 1

</llo_original>
